<compile_context>
chip_gen: v7x
topology: tpu7x:2x2x1
jax: 0.10.0
libtpu: 0.0.40
codegen_flags: <defaults>
</compile_context>

<pallas_src>
import functools

import jax
import jax.numpy as jnp
from jax import lax
from jax.experimental import pallas as pl
from jax.experimental.pallas import tpu as pltpu


def _mhsa_kernel(x_ref, wqkv_ref, wp_ref, bp_ref, o_ref, *, num_heads, head_dim):
    """One batch element per grid step, channels-first layout throughout.

    x_ref   : (1, C, N)  f32   activations (channels-first tokens)
    wqkv_ref: (3C, C)    bf16  fused qkv weight (torch row layout, q rows pre-scaled)
    wp_ref  : (C, C)     bf16  output projection weight (torch layout)
    bp_ref  : (C, 1)     f32   output projection bias
    o_ref   : (1, C, N)  f32   output
    """
    c = num_heads * head_dim
    xb = x_ref[0].astype(jnp.bfloat16)                       # (C, N)

    # Fused QKV projection: single (3C, C) x (C, N) MXU dot, f32 accumulate.
    qkv = jnp.dot(wqkv_ref[...], xb,
                  preferred_element_type=jnp.float32)         # (3C, N)

    oh_list = []
    for h in range(num_heads):                                # unrolled, nh is small
        lo = h * head_dim
        q = qkv[lo:lo + head_dim]                             # (hd, N), scale folded
        k = qkv[c + lo:c + lo + head_dim]                     # (hd, N)
        v = qkv[2 * c + lo:2 * c + lo + head_dim]             # (hd, N)

        # scores: s[i, j] = q[:, i] . k[:, j]   (contract the head dim)
        s = lax.dot_general(q.astype(jnp.bfloat16), k.astype(jnp.bfloat16),
                            (((0,), (0,)), ((), ())),
                            preferred_element_type=jnp.float32)   # (N, N)

        # softmax over keys (f32 elementwise; exp on EUP, approx recip on EUP)
        m = jnp.max(s, axis=-1, keepdims=True)
        p = jnp.exp(s - m)
        denom = jnp.sum(p, axis=-1, keepdims=True)
        p = p * pl.reciprocal(denom, approx=True)

        # oh[d, i] = sum_j v[d, j] * p[i, j]
        oh = lax.dot_general(v.astype(jnp.bfloat16), p.astype(jnp.bfloat16),
                             (((1,), (1,)), ((), ())),
                             preferred_element_type=jnp.float32)  # (hd, N)
        oh_list.append(oh)

    o_t = oh_list[0] if num_heads == 1 else jnp.concatenate(oh_list, axis=0)  # (C, N)

    # Output projection: single full-C MXU dot, then bias; lane-dense store.
    out = jnp.dot(wp_ref[...], o_t.astype(jnp.bfloat16),
                  preferred_element_type=jnp.float32)         # (C, N)
    o_ref[0] = (out + bp_ref[...]).astype(o_ref.dtype)


def prepare_params(params, *, head_dim=32):
    """One-time weight prep (hoisted off the per-forward path).

    Folds the softmax scale into the q rows of the fused qkv weight and casts
    the matmul operands to bf16 (f32 accumulation happens on the MXU).
    """
    w_qkv = params["w_qkv"].astype(jnp.float32)               # (3C, C), torch layout
    w_proj = params["w_proj"].astype(jnp.float32)             # (C, C)
    b_proj = params["b_proj"].astype(jnp.float32)             # (C,)
    c = w_qkv.shape[1]
    scale = float(head_dim) ** -0.5
    w_qkv = w_qkv.at[:c].multiply(scale)                      # fold scale into q rows
    return {
        "w_qkv": w_qkv.astype(jnp.bfloat16),                  # (3C, C)
        "w_proj": w_proj.astype(jnp.bfloat16),                 # (C, C)
        "b_proj": b_proj.reshape(c, 1),                        # (C, 1), kept f32
    }


def attention_forward(x_nchw, prepared, *, head_dim=32):
    """Pallas forward matching Attention.forward (eval mode, qkv_bias=False)."""
    b, c, h, w = x_nchw.shape
    n = h * w
    assert c % head_dim == 0, "dim must be a multiple of head_dim"
    nh = c // head_dim

    # (B,C,H,W) -> (B,C,N): pure reshape, no data movement / HBM transpose pass.
    x_flat = x_nchw.reshape(b, c, n).astype(jnp.float32)

    kernel = functools.partial(_mhsa_kernel, num_heads=nh, head_dim=head_dim)

    out_flat = pl.pallas_call(
        kernel,
        out_shape=jax.ShapeDtypeStruct((b, c, n), jnp.float32),
        grid_spec=pltpu.PrefetchScalarGridSpec(
            num_scalar_prefetch=0,
            grid=(b,),                                        # one step per batch elem
            in_specs=[
                pl.BlockSpec((1, c, n), lambda bi: (bi, 0, 0)),
                # constant index maps: weights DMA'd once, stay VMEM-resident
                pl.BlockSpec((3 * c, c), lambda bi: (0, 0)),
                pl.BlockSpec((c, c), lambda bi: (0, 0)),
                pl.BlockSpec((c, 1), lambda bi: (0, 0)),
            ],
            out_specs=pl.BlockSpec((1, c, n), lambda bi: (bi, 0, 0)),
        ),
        compiler_params=pltpu.CompilerParams(
            dimension_semantics=("parallel",)),
    )(x_flat, prepared["w_qkv"], prepared["w_proj"], prepared["b_proj"])

    return out_flat.reshape(b, c, h, w)


def reference_forward(x_nchw, params, *, head_dim=32):
    """Pure-JAX reference mirroring the PyTorch forward (eval mode, f32)."""
    b, c, h, w = x_nchw.shape
    n = h * w
    nh = c // head_dim
    scale = float(head_dim) ** -0.5

    x = jnp.transpose(x_nchw.reshape(b, c, n), (0, 2, 1))           # (B, N, C)
    qkv = x @ params["w_qkv"].T                                     # (B, N, 3C)
    qkv = qkv.reshape(b, n, 3, nh, head_dim).transpose(2, 0, 3, 1, 4)
    q = qkv[0].astype(jnp.float32)
    k = qkv[1].astype(jnp.float32)
    v = qkv[2].astype(jnp.float32)
    attn = (q * scale) @ jnp.swapaxes(k, -2, -1)                    # (B, nh, N, N)
    attn = jax.nn.softmax(attn, axis=-1)
    o = attn @ v                                                    # (B, nh, N, hd)
    o = jnp.swapaxes(o, 1, 2).reshape(b, n, c)
    o = o @ params["w_proj"].T + params["b_proj"]
    return jnp.transpose(o, (0, 2, 1)).reshape(b, c, h, w)


if __name__ == "__main__":
    # small config consistent with the module: dim must be a multiple of head_dim
    dim = 128
    head_dim = 32          # -> num_heads = 4
    B, H, W = 2, 16, 16    # -> N = 256 tokens (lane-dense output slabs)

    key = jax.random.PRNGKey(0)
    ks = jax.random.split(key, 4)
    params = {
        "w_qkv": 0.1 * jax.random.normal(ks[0], (3 * dim, dim), jnp.float32),
        "w_proj": 0.1 * jax.random.normal(ks[1], (dim, dim), jnp.float32),
        "b_proj": 0.1 * jax.random.normal(ks[2], (dim,), jnp.float32),
    }
    x = jax.random.normal(ks[3], (B, dim, H, W), jnp.float32)

    prepared = prepare_params(params, head_dim=head_dim)   # once, off the hot path
    out = attention_forward(x, prepared, head_dim=head_dim)
    out = jax.block_until_ready(out)

    ref = reference_forward(x, params, head_dim=head_dim)

    # bf16 MXU operands (f32 accumulation) + approx reciprocal => ~1e-2 tolerance.
    if not jnp.allclose(out, ref, atol=2e-2, rtol=2e-2):
        max_err = float(jnp.max(jnp.abs(out - ref)))
        raise AssertionError(f"Pallas kernel mismatch, max abs err = {max_err}")

    print("KERNEL_OK")
</pallas_src>

<mosaic_0001>
module attributes {stable_mosaic.version = 11 : i64} {
  func.func @_mhsa_kernel(%arg0: i32, %arg1: memref<1x128x256xf32, #tpu.memory_space<vmem>>, %arg2: memref<384x128xbf16, #tpu.memory_space<vmem>>, %arg3: memref<128x128xbf16, #tpu.memory_space<vmem>>, %arg4: memref<128x1xf32, #tpu.memory_space<vmem>>, %arg5: memref<1x128x256xf32, #tpu.memory_space<vmem>>) attributes {dimension_semantics = [#tpu.dimension_semantics<parallel>], iteration_bounds = array<i64: 2>, scalar_prefetch = 0 : i64, scratch_operands = 0 : i64, tpu.core_type = #tpu.core_type<tc>, window_params = [{transform_indices = @transform_0, window_bounds = array<i64: 1, 128, 256>}, {pipeline_mode = #tpu.pipeline_mode<synchronous>, transform_indices = @transform_1, window_bounds = array<i64: 384, 128>}, {pipeline_mode = #tpu.pipeline_mode<synchronous>, transform_indices = @transform_2, window_bounds = array<i64: 128, 128>}, {pipeline_mode = #tpu.pipeline_mode<synchronous>, transform_indices = @transform_3, window_bounds = array<i64: 128, 1>}, {transform_indices = @transform_4, window_bounds = array<i64: 1, 128, 256>}]} {
    %c0 = arith.constant 0 : index
    %c0_0 = arith.constant 0 : index
    %c0_1 = arith.constant 0 : index
    %0 = vector.load %arg1[%c0, %c0_0, %c0_1] : memref<1x128x256xf32, #tpu.memory_space<vmem>>, vector<1x128x256xf32>
    %1 = vector.shape_cast %0 : vector<1x128x256xf32> to vector<128x256xf32>
    %2 = arith.truncf %1 : vector<128x256xf32> to vector<128x256xbf16>
    %c0_2 = arith.constant 0 : index
    %c0_3 = arith.constant 0 : index
    %3 = vector.load %arg2[%c0_2, %c0_3] : memref<384x128xbf16, #tpu.memory_space<vmem>>, vector<384x128xbf16>
    %cst = arith.constant dense<0.000000e+00> : vector<384x256xf32>
    %4 = tpu.matmul %3, %2, %cst {dimension_numbers = #tpu.dot_dimension_numbers<[1], [0], [0], [1], [0, 0, 1, 1], [], []>} : vector<384x128xbf16>, vector<128x256xbf16>, vector<384x256xf32> -> vector<384x256xf32>
    %5 = vector.extract_strided_slice %4 {offsets = [0, 0], sizes = [32, 256], strides = [1, 1]} : vector<384x256xf32> to vector<32x256xf32>
    %6 = vector.extract_strided_slice %4 {offsets = [128, 0], sizes = [32, 256], strides = [1, 1]} : vector<384x256xf32> to vector<32x256xf32>
    %7 = vector.extract_strided_slice %4 {offsets = [256, 0], sizes = [32, 256], strides = [1, 1]} : vector<384x256xf32> to vector<32x256xf32>
    %8 = arith.truncf %5 : vector<32x256xf32> to vector<32x256xbf16>
    %9 = arith.truncf %6 : vector<32x256xf32> to vector<32x256xbf16>
    %cst_4 = arith.constant dense<0.000000e+00> : vector<256x256xf32>
    %10 = tpu.matmul %8, %9, %cst_4 {dimension_numbers = #tpu.dot_dimension_numbers<[0], [0], [1], [1], [0, 1, 1, 1], [], []>} : vector<32x256xbf16>, vector<32x256xbf16>, vector<256x256xf32> -> vector<256x256xf32>
    %cst_5 = arith.constant dense<0xFF800000> : vector<256xf32>
    %11 = vector.multi_reduction <maximumf>, %10, %cst_5 [1] : vector<256x256xf32> to vector<256xf32>
    %12 = vector.shape_cast %11 : vector<256xf32> to vector<256x1xf32>
    %13 = vector.broadcast %12 : vector<256x1xf32> to vector<256x256xf32>
    %14 = arith.subf %10, %13 : vector<256x256xf32>
    %15 = math.exp %14 : vector<256x256xf32>
    %cst_6 = arith.constant dense<0.000000e+00> : vector<256xf32>
    %16 = vector.multi_reduction <add>, %15, %cst_6 [1] : vector<256x256xf32> to vector<256xf32>
    %17 = vector.shape_cast %16 : vector<256xf32> to vector<256x1xf32>
    %18 = tpu.reciprocal %17 {approx = true} : vector<256x1xf32> -> vector<256x1xf32>
    %19 = vector.broadcast %18 : vector<256x1xf32> to vector<256x256xf32>
    %20 = arith.mulf %15, %19 : vector<256x256xf32>
    %21 = arith.truncf %7 : vector<32x256xf32> to vector<32x256xbf16>
    %22 = arith.truncf %20 : vector<256x256xf32> to vector<256x256xbf16>
    %cst_7 = arith.constant dense<0.000000e+00> : vector<32x256xf32>
    %23 = tpu.matmul %21, %22, %cst_7 {dimension_numbers = #tpu.dot_dimension_numbers<[1], [1], [0], [0], [0, 0, 1, 0], [], []>} : vector<32x256xbf16>, vector<256x256xbf16>, vector<32x256xf32> -> vector<32x256xf32>
    %24 = vector.extract_strided_slice %4 {offsets = [32, 0], sizes = [32, 256], strides = [1, 1]} : vector<384x256xf32> to vector<32x256xf32>
    %25 = vector.extract_strided_slice %4 {offsets = [160, 0], sizes = [32, 256], strides = [1, 1]} : vector<384x256xf32> to vector<32x256xf32>
    %26 = vector.extract_strided_slice %4 {offsets = [288, 0], sizes = [32, 256], strides = [1, 1]} : vector<384x256xf32> to vector<32x256xf32>
    %27 = arith.truncf %24 : vector<32x256xf32> to vector<32x256xbf16>
    %28 = arith.truncf %25 : vector<32x256xf32> to vector<32x256xbf16>
    %cst_8 = arith.constant dense<0.000000e+00> : vector<256x256xf32>
    %29 = tpu.matmul %27, %28, %cst_8 {dimension_numbers = #tpu.dot_dimension_numbers<[0], [0], [1], [1], [0, 1, 1, 1], [], []>} : vector<32x256xbf16>, vector<32x256xbf16>, vector<256x256xf32> -> vector<256x256xf32>
    %cst_9 = arith.constant dense<0xFF800000> : vector<256xf32>
    %30 = vector.multi_reduction <maximumf>, %29, %cst_9 [1] : vector<256x256xf32> to vector<256xf32>
    %31 = vector.shape_cast %30 : vector<256xf32> to vector<256x1xf32>
    %32 = vector.broadcast %31 : vector<256x1xf32> to vector<256x256xf32>
    %33 = arith.subf %29, %32 : vector<256x256xf32>
    %34 = math.exp %33 : vector<256x256xf32>
    %cst_10 = arith.constant dense<0.000000e+00> : vector<256xf32>
    %35 = vector.multi_reduction <add>, %34, %cst_10 [1] : vector<256x256xf32> to vector<256xf32>
    %36 = vector.shape_cast %35 : vector<256xf32> to vector<256x1xf32>
    %37 = tpu.reciprocal %36 {approx = true} : vector<256x1xf32> -> vector<256x1xf32>
    %38 = vector.broadcast %37 : vector<256x1xf32> to vector<256x256xf32>
    %39 = arith.mulf %34, %38 : vector<256x256xf32>
    %40 = arith.truncf %26 : vector<32x256xf32> to vector<32x256xbf16>
    %41 = arith.truncf %39 : vector<256x256xf32> to vector<256x256xbf16>
    %cst_11 = arith.constant dense<0.000000e+00> : vector<32x256xf32>
    %42 = tpu.matmul %40, %41, %cst_11 {dimension_numbers = #tpu.dot_dimension_numbers<[1], [1], [0], [0], [0, 0, 1, 0], [], []>} : vector<32x256xbf16>, vector<256x256xbf16>, vector<32x256xf32> -> vector<32x256xf32>
    %43 = vector.extract_strided_slice %4 {offsets = [64, 0], sizes = [32, 256], strides = [1, 1]} : vector<384x256xf32> to vector<32x256xf32>
    %44 = vector.extract_strided_slice %4 {offsets = [192, 0], sizes = [32, 256], strides = [1, 1]} : vector<384x256xf32> to vector<32x256xf32>
    %45 = vector.extract_strided_slice %4 {offsets = [320, 0], sizes = [32, 256], strides = [1, 1]} : vector<384x256xf32> to vector<32x256xf32>
    %46 = arith.truncf %43 : vector<32x256xf32> to vector<32x256xbf16>
    %47 = arith.truncf %44 : vector<32x256xf32> to vector<32x256xbf16>
    %cst_12 = arith.constant dense<0.000000e+00> : vector<256x256xf32>
    %48 = tpu.matmul %46, %47, %cst_12 {dimension_numbers = #tpu.dot_dimension_numbers<[0], [0], [1], [1], [0, 1, 1, 1], [], []>} : vector<32x256xbf16>, vector<32x256xbf16>, vector<256x256xf32> -> vector<256x256xf32>
    %cst_13 = arith.constant dense<0xFF800000> : vector<256xf32>
    %49 = vector.multi_reduction <maximumf>, %48, %cst_13 [1] : vector<256x256xf32> to vector<256xf32>
    %50 = vector.shape_cast %49 : vector<256xf32> to vector<256x1xf32>
    %51 = vector.broadcast %50 : vector<256x1xf32> to vector<256x256xf32>
    %52 = arith.subf %48, %51 : vector<256x256xf32>
    %53 = math.exp %52 : vector<256x256xf32>
    %cst_14 = arith.constant dense<0.000000e+00> : vector<256xf32>
    %54 = vector.multi_reduction <add>, %53, %cst_14 [1] : vector<256x256xf32> to vector<256xf32>
    %55 = vector.shape_cast %54 : vector<256xf32> to vector<256x1xf32>
    %56 = tpu.reciprocal %55 {approx = true} : vector<256x1xf32> -> vector<256x1xf32>
    %57 = vector.broadcast %56 : vector<256x1xf32> to vector<256x256xf32>
    %58 = arith.mulf %53, %57 : vector<256x256xf32>
    %59 = arith.truncf %45 : vector<32x256xf32> to vector<32x256xbf16>
    %60 = arith.truncf %58 : vector<256x256xf32> to vector<256x256xbf16>
    %cst_15 = arith.constant dense<0.000000e+00> : vector<32x256xf32>
    %61 = tpu.matmul %59, %60, %cst_15 {dimension_numbers = #tpu.dot_dimension_numbers<[1], [1], [0], [0], [0, 0, 1, 0], [], []>} : vector<32x256xbf16>, vector<256x256xbf16>, vector<32x256xf32> -> vector<32x256xf32>
    %62 = vector.extract_strided_slice %4 {offsets = [96, 0], sizes = [32, 256], strides = [1, 1]} : vector<384x256xf32> to vector<32x256xf32>
    %63 = vector.extract_strided_slice %4 {offsets = [224, 0], sizes = [32, 256], strides = [1, 1]} : vector<384x256xf32> to vector<32x256xf32>
    %64 = vector.extract_strided_slice %4 {offsets = [352, 0], sizes = [32, 256], strides = [1, 1]} : vector<384x256xf32> to vector<32x256xf32>
    %65 = arith.truncf %62 : vector<32x256xf32> to vector<32x256xbf16>
    %66 = arith.truncf %63 : vector<32x256xf32> to vector<32x256xbf16>
    %cst_16 = arith.constant dense<0.000000e+00> : vector<256x256xf32>
    %67 = tpu.matmul %65, %66, %cst_16 {dimension_numbers = #tpu.dot_dimension_numbers<[0], [0], [1], [1], [0, 1, 1, 1], [], []>} : vector<32x256xbf16>, vector<32x256xbf16>, vector<256x256xf32> -> vector<256x256xf32>
    %cst_17 = arith.constant dense<0xFF800000> : vector<256xf32>
    %68 = vector.multi_reduction <maximumf>, %67, %cst_17 [1] : vector<256x256xf32> to vector<256xf32>
    %69 = vector.shape_cast %68 : vector<256xf32> to vector<256x1xf32>
    %70 = vector.broadcast %69 : vector<256x1xf32> to vector<256x256xf32>
    %71 = arith.subf %67, %70 : vector<256x256xf32>
    %72 = math.exp %71 : vector<256x256xf32>
    %cst_18 = arith.constant dense<0.000000e+00> : vector<256xf32>
    %73 = vector.multi_reduction <add>, %72, %cst_18 [1] : vector<256x256xf32> to vector<256xf32>
    %74 = vector.shape_cast %73 : vector<256xf32> to vector<256x1xf32>
    %75 = tpu.reciprocal %74 {approx = true} : vector<256x1xf32> -> vector<256x1xf32>
    %76 = vector.broadcast %75 : vector<256x1xf32> to vector<256x256xf32>
    %77 = arith.mulf %72, %76 : vector<256x256xf32>
    %78 = arith.truncf %64 : vector<32x256xf32> to vector<32x256xbf16>
    %79 = arith.truncf %77 : vector<256x256xf32> to vector<256x256xbf16>
    %cst_19 = arith.constant dense<0.000000e+00> : vector<32x256xf32>
    %80 = tpu.matmul %78, %79, %cst_19 {dimension_numbers = #tpu.dot_dimension_numbers<[1], [1], [0], [0], [0, 0, 1, 0], [], []>} : vector<32x256xbf16>, vector<256x256xbf16>, vector<32x256xf32> -> vector<32x256xf32>
    %81 = tpu.concatenate %23, %42, %61, %80 in 0 : vector<32x256xf32>, vector<32x256xf32>, vector<32x256xf32>, vector<32x256xf32> -> vector<128x256xf32>
    %c0_20 = arith.constant 0 : index
    %c0_21 = arith.constant 0 : index
    %82 = vector.load %arg3[%c0_20, %c0_21] : memref<128x128xbf16, #tpu.memory_space<vmem>>, vector<128x128xbf16>
    %83 = arith.truncf %81 : vector<128x256xf32> to vector<128x256xbf16>
    %cst_22 = arith.constant dense<0.000000e+00> : vector<128x256xf32>
    %84 = tpu.matmul %82, %83, %cst_22 {dimension_numbers = #tpu.dot_dimension_numbers<[1], [0], [0], [1], [0, 0, 1, 1], [], []>} : vector<128x128xbf16>, vector<128x256xbf16>, vector<128x256xf32> -> vector<128x256xf32>
    %c0_23 = arith.constant 0 : index
    %c0_24 = arith.constant 0 : index
    %85 = vector.load %arg4[%c0_23, %c0_24] : memref<128x1xf32, #tpu.memory_space<vmem>>, vector<128x1xf32>
    %86 = vector.broadcast %85 : vector<128x1xf32> to vector<128x256xf32>
    %87 = arith.addf %84, %86 : vector<128x256xf32>
    %c0_25 = arith.constant 0 : index
    %c0_26 = arith.constant 0 : index
    %c0_27 = arith.constant 0 : index
    %88 = vector.load %arg5[%c0_25, %c0_26, %c0_27] : memref<1x128x256xf32, #tpu.memory_space<vmem>>, vector<1x128x256xf32>
    %89 = vector.shape_cast %88 : vector<1x128x256xf32> to vector<128x256xf32>
    %90 = vector.shape_cast %87 : vector<128x256xf32> to vector<1x128x256xf32>
    tpu.vector_store %arg5[%c0_25, %c0_26, %c0_27], %90 {strides = array<i32>} : memref<1x128x256xf32, #tpu.memory_space<vmem>>, vector<1x128x256xf32>,
    return
  }
  func.func @transform_0(%arg0: i32) -> (i32, i32, i32) {
    %c0_i32 = arith.constant 0 : i32
    %c0_i32_0 = arith.constant 0 : i32
    %c0_i32_1 = arith.constant 0 : i32
    return %arg0, %c0_i32, %c0_i32_0 : i32, i32, i32
  }
  func.func @transform_1(%arg0: i32) -> (i32, i32) {
    %c0_i32 = arith.constant 0 : i32
    %c0_i32_0 = arith.constant 0 : i32
    %c0_i32_1 = arith.constant 0 : i32
    return %c0_i32, %c0_i32_0 : i32, i32
  }
  func.func @transform_2(%arg0: i32) -> (i32, i32) {
    %c0_i32 = arith.constant 0 : i32
    %c0_i32_0 = arith.constant 0 : i32
    %c0_i32_1 = arith.constant 0 : i32
    return %c0_i32, %c0_i32_0 : i32, i32
  }
  func.func @transform_3(%arg0: i32) -> (i32, i32) {
    %c0_i32 = arith.constant 0 : i32
    %c0_i32_0 = arith.constant 0 : i32
    %c0_i32_1 = arith.constant 0 : i32
    return %c0_i32, %c0_i32_0 : i32, i32
  }
  func.func @transform_4(%arg0: i32) -> (i32, i32, i32) {
    %c0_i32 = arith.constant 0 : i32
    %c0_i32_0 = arith.constant 0 : i32
    %c0_i32_1 = arith.constant 0 : i32
    return %arg0, %c0_i32, %c0_i32_0 : i32, i32, i32
  }
}

</mosaic_0001>

<llo_original>
// kernel: tpu_custom_call.1
$region0: #{tpu_custom_call.1}
  #allocation0 [shape = 'u32[]', space=smem, size = 0x4, offset = 0x4, fixed_abs, tag = 'smem constant byte address 0x4 - core index']
  #allocation1 [shape = 'u32[144,128]{1,0:T(1,128)}', space=vmem, size = 0x12000, scoped, tag = 'internal scratch']
  %s0 = inlined_call_operand.hbm [shape: f32[2,128,256], index: 0, kind: input, shape index: {}]
  %s1 = inlined_call_operand.hbm [shape: bf16[384,128], index: 1, kind: input, shape index: {}]
  %s2 = inlined_call_operand.vmem [shape: bf16[128,128], index: 2, kind: input, shape index: {}]
  %s3 = inlined_call_operand.vmem [shape: f32[128,1], index: 3, kind: input, shape index: {}]
  %s4 = inlined_call_operand.hbm [shape: f32[2,128,256], index: 4, kind: output, shape index: {}]
  %s5 = sld [smem:[#allocation0]]
  $region57: #{tpu_custom_call.1} parent=0
    _
  %s7 = ssub.s32 1, %s5
  %s8 = scalar_select 0, %s7, %s5
  $region1: #{tpu_custom_call.1} parent=0
    #allocation2 [shape = 'u8[262144]{0}', space=vmem, size = 0x40000, scoped, tag = 'input window, operand 0']
    #allocation3 [shape = 's32[2]{0}', space=sflag, size = 0x8, scoped, tag = 'scoped memory for tpu_custom_call.1']
    #allocation4 [shape = 's32[2]{0}', space=sflag, size = 0x8, scoped, tag = 'scoped memory for tpu_custom_call.1']
    #allocation5 [shape = 'u8[98304]{0}', space=vmem, size = 0x18000, scoped, tag = 'input window, operand 1, single buffered']
    #allocation6 [shape = 's32[1]{0}', space=sflag, size = 0x4, scoped, tag = 'scoped memory for tpu_custom_call.1']
    #allocation7 [shape = 'u8[262144]{0}', space=vmem, size = 0x40000, scoped, tag = 'output window, operand 0']
    %9 = vsyncpa [#allocation3], 0
    %s10 = scalar_lea.sflag [#allocation3], 1
    %11 = vsyncpa %s10, 0
    %12 = vsyncpa [#allocation6], 0
    %13 = vsyncpa [#allocation4], 0
    %s14 = scalar_lea.sflag [#allocation4], 1
    %15 = vsyncpa %s14, 0
    loop: start=0, step=1, limit=4
    $region2: #{tpu_custom_call.1} parent=1 // loop_pre_header
      _
    $region3: #{tpu_custom_call.1} parent=1 // loop_header
      %s17 = sphi 0, %s21
      %p18 = scmp.ge.s32.totalorder %s17, 4
      %s27 = sphi 0, %s29
      %s30 = sphi 0, %s27
      %s31 = sphi 0, %s30
      %s47 = sphi 0, %s31
      %s51 = sphi 0, %s51
      %s53 = sphi 0, %s51
      %s54 = sphi 0, %s53
      %s68 = sphi 0, %s54
      %s72 = sphi 0, %s72
      %s74 = sphi 0, %s72
      %s75 = sphi 0, %s74
      %s89 = sphi 0, %s75
      %s93 = sphi 0, %s93
      %s95 = sphi 0, %s93
      %s96 = sphi 0, %s95
      %s110 = sphi 0, %s96
      %s116 = sphi 0, %s118
      %s119 = sphi 0, %s116
      %s120 = sphi 0, %s119
      %s136 = sphi 0, %s120
    $region4: #{tpu_custom_call.1} parent=1 // loop_header_branch
      %20 = sbr.rel (%p18) target = $region8
    $region5: #{tpu_custom_call.1} parent=1 // loop_body
      %s22 = ssub.s32 %s17, 1
      %s23 = ssub.s32 %s17, 2
      %s24 = sadd.s32 %s17, 1
      %s25 = ssub.s32 %s17, %s24
      %p26 = scmp.eq.s32.totalorder %s25, 0
      %s28 = sadd.s32 %s27, 1
      %s29 = scalar_select %p26, %s27, %s28
      %p32 = pneg %p26
      %p33 = scmp.eq.s32.totalorder %s17, 1
      %p34 = por %p32, %p33
      %p35 = scmp.ne.s32.totalorder %s27, %s30
      %p36 = scmp.eq.s32.totalorder %s17, 0
      %p37 = por %p35, %p36
      %p38 = scmp.ne.s32.totalorder %s27, %s30
      %p39 = scmp.eq.s32.totalorder %s22, 1
      %p40 = por %p38, %p39
      %p41 = scmp.ne.s32.totalorder %s30, %s31
      %p42 = scmp.eq.s32.totalorder %s22, 0
      %p43 = por %p41, %p42
      %p44 = scmp.ne.s32.totalorder %s30, %s31
      %p45 = scmp.eq.s32.totalorder %s23, 1
      %p46 = por %p44, %p45
      %p48 = scmp.ne.s32.totalorder %s31, %s47
      %p49 = scmp.eq.s32.totalorder %s23, 0
      %p50 = por %p48, %p49
      %s52 = sadd.s32 %s51, 1
      %p55 = scmp.eq.s32.totalorder %s17, 1
      %p56 = scmp.ne.s32.totalorder %s51, %s53
      %p57 = scmp.eq.s32.totalorder %s17, 0
      %p58 = por %p56, %p57
      %p59 = scmp.ne.s32.totalorder %s51, %s53
      %p60 = scmp.eq.s32.totalorder %s22, 1
      %p61 = por %p59, %p60
      %p62 = scmp.ne.s32.totalorder %s53, %s54
      %p63 = scmp.eq.s32.totalorder %s22, 0
      %p64 = por %p62, %p63
      %p65 = scmp.ne.s32.totalorder %s53, %s54
      %p66 = scmp.eq.s32.totalorder %s23, 1
      %p67 = por %p65, %p66
      %p69 = scmp.ne.s32.totalorder %s54, %s68
      %p70 = scmp.eq.s32.totalorder %s23, 0
      %p71 = por %p69, %p70
      %s73 = sadd.s32 %s72, 1
      %p76 = scmp.eq.s32.totalorder %s17, 1
      %p77 = scmp.ne.s32.totalorder %s72, %s74
      %p78 = scmp.eq.s32.totalorder %s17, 0
      %p79 = por %p77, %p78
      %p80 = scmp.ne.s32.totalorder %s72, %s74
      %p81 = scmp.eq.s32.totalorder %s22, 1
      %p82 = por %p80, %p81
      %p83 = scmp.ne.s32.totalorder %s74, %s75
      %p84 = scmp.eq.s32.totalorder %s22, 0
      %p85 = por %p83, %p84
      %p86 = scmp.ne.s32.totalorder %s74, %s75
      %p87 = scmp.eq.s32.totalorder %s23, 1
      %p88 = por %p86, %p87
      %p90 = scmp.ne.s32.totalorder %s75, %s89
      %p91 = scmp.eq.s32.totalorder %s23, 0
      %p92 = por %p90, %p91
      %s94 = sadd.s32 %s93, 1
      %p97 = scmp.eq.s32.totalorder %s17, 1
      %p98 = scmp.ne.s32.totalorder %s93, %s95
      %p99 = scmp.eq.s32.totalorder %s17, 0
      %p100 = por %p98, %p99
      %p101 = scmp.ne.s32.totalorder %s93, %s95
      %p102 = scmp.eq.s32.totalorder %s22, 1
      %p103 = por %p101, %p102
      %p104 = scmp.ne.s32.totalorder %s95, %s96
      %p105 = scmp.eq.s32.totalorder %s22, 0
      %p106 = por %p104, %p105
      %p107 = scmp.ne.s32.totalorder %s95, %s96
      %p108 = scmp.eq.s32.totalorder %s23, 1
      %p109 = por %p107, %p108
      %p111 = scmp.ne.s32.totalorder %s96, %s110
      %p112 = scmp.eq.s32.totalorder %s23, 0
      %p113 = por %p111, %p112
      %s114 = ssub.s32 %s17, %s24
      %p115 = scmp.eq.s32.totalorder %s114, 0
      %s117 = sadd.s32 %s116, 1
      %s118 = scalar_select %p115, %s116, %s117
      %p121 = pneg %p115
      %p122 = scmp.eq.s32.totalorder %s17, 1
      %p123 = por %p121, %p122
      %p124 = scmp.ne.s32.totalorder %s116, %s119
      %p125 = scmp.eq.s32.totalorder %s17, 0
      %p126 = por %p124, %p125
      %p127 = scmp.ne.s32.totalorder %s116, %s119
      %p128 = scmp.eq.s32.totalorder %s22, 1
      %p129 = por %p127, %p128
      %p130 = scmp.ne.s32.totalorder %s119, %s120
      %p131 = scmp.eq.s32.totalorder %s22, 0
      %p132 = por %p130, %p131
      %p133 = scmp.ne.s32.totalorder %s119, %s120
      %p134 = scmp.eq.s32.totalorder %s23, 1
      %p135 = por %p133, %p134
      %p137 = scmp.ne.s32.totalorder %s120, %s136
      %p138 = scmp.eq.s32.totalorder %s23, 0
      %p139 = por %p137, %p138
      %p140 = scmp.le.s32.totalorder 1, %s17
      %p141 = scmp.lt.s32.totalorder %s17, 3
      %p142 = pnand %p140, %p141
      %p143 = pneg %p142
      // Predicated region
      $region9: #{tpu_custom_call.1} parent=5 // pred_check
        _
      $region10: #{tpu_custom_call.1} parent=5 // pred_check_branch
        %145 = sbr.rel (%p142) target = $region12
      $region11: #{tpu_custom_call.1} parent=5 // pred_region
        %s146 = ssub.s32 %s17, 1
        // Predicated region
        $region13: #{tpu_custom_call.1} parent=11 // pred_check
          %p147 = pneg %p64
        $region14: #{tpu_custom_call.1} parent=11 // pred_check_branch
          %149 = sbr.rel (%p147) target = $region16
        $region15: #{tpu_custom_call.1} parent=11 // pred_region
          %s151 = ssub.s32 3072, 3072
          %152 = vsyncadd [#allocation6], %s151
          %s153 = sshll.u32 [#allocation5], 4
          %s154 = int_to_ptr.vmem [resolvable:$true] %s153
          %159 = dma.hbm_to_vmem [thread:$0]  %s1, 3072, %s154, [#allocation6], 64, 64, 4
        $region16: #{tpu_custom_call.1} parent=11 // pred_fallthru
          _
        // Predicated region
        $region17: #{tpu_custom_call.1} parent=11 // pred_check
          %p160 = pneg %p85
        $region18: #{tpu_custom_call.1} parent=11 // pred_check_branch
          %162 = sbr.rel (%p160) target = $region20
        $region19: #{tpu_custom_call.1} parent=11 // pred_region
          _
        $region20: #{tpu_custom_call.1} parent=11 // pred_fallthru
          _
        // Predicated region
        $region21: #{tpu_custom_call.1} parent=11 // pred_check
          %p163 = pneg %p106
        $region22: #{tpu_custom_call.1} parent=11 // pred_check_branch
          %165 = sbr.rel (%p163) target = $region24
        $region23: #{tpu_custom_call.1} parent=11 // pred_region
          _
        $region24: #{tpu_custom_call.1} parent=11 // pred_fallthru
          _
      $region12: #{tpu_custom_call.1} parent=5 // pred_fallthru
        _
      %p166 = scmp.lt.s32.totalorder %s17, 2
      // Predicated region
      $region25: #{tpu_custom_call.1} parent=5 // pred_check
        %p167 = pneg %p166
      $region26: #{tpu_custom_call.1} parent=5 // pred_check_branch
        %169 = sbr.rel (%p167) target = $region28
      $region27: #{tpu_custom_call.1} parent=5 // pred_region
        // Predicated region
        $region29: #{tpu_custom_call.1} parent=27 // pred_check
          %p170 = pneg %p37
        $region30: #{tpu_custom_call.1} parent=27 // pred_check_branch
          %172 = sbr.rel (%p170) target = $region32
        $region31: #{tpu_custom_call.1} parent=27 // pred_region
          %s173 = sand.u32 %s27, 1
          %s174 = scalar_lea.sflag [#allocation3], %s173
          %s175 = sand.u32 %s27, 1
          %s176 = smul.addr %s175, 256
          %s177 = scalar_lea.vmem [#allocation2], %s176
          %s179 = ssub.s32 4096, 4096
          %180 = vsyncadd %s174, %s179
          %s181 = smul.addr %s17, 32
          %s182 = smul.addr %s181, 128
          %s183 = scalar_lea.hbm %s0, %s182
          %s184 = sshll.u32 %s177, 4
          %s185 = int_to_ptr.vmem [resolvable:$true] %s184
          %190 = dma.hbm_to_vmem [thread:$0]  %s183, 4096, %s185, %s174, 256, 256, 16
        $region32: #{tpu_custom_call.1} parent=27 // pred_fallthru
          _
      $region28: #{tpu_custom_call.1} parent=5 // pred_fallthru
        _
      %p191 = scmp.le.s32.totalorder 1, %s17
      %p192 = scmp.lt.s32.totalorder %s17, 3
      %p193 = pnand %p191, %p192
      %p194 = pneg %p193
      // Predicated region
      $region33: #{tpu_custom_call.1} parent=5 // pred_check
        _
      $region34: #{tpu_custom_call.1} parent=5 // pred_check_branch
        %196 = sbr.rel (%p193) target = $region36
      $region35: #{tpu_custom_call.1} parent=5 // pred_region
        %s197 = ssub.s32 %s17, 1
        %s198 = sand.u32 %s30, 1
        %s199 = scalar_lea.sflag [#allocation3], %s198
        %s200 = sand.u32 %s30, 1
        %s201 = smul.addr %s200, 256
        %s202 = scalar_lea.vmem [#allocation2], %s201
        // Predicated region
        $region37: #{tpu_custom_call.1} parent=35 // pred_check
          %p203 = pneg %p43
        $region38: #{tpu_custom_call.1} parent=35 // pred_check_branch
          %205 = sbr.rel (%p203) target = $region40
        $region39: #{tpu_custom_call.1} parent=35 // pred_region
          %206 = dma.done %s199, 4096
        $region40: #{tpu_custom_call.1} parent=35 // pred_fallthru
          _
        // Predicated region
        $region41: #{tpu_custom_call.1} parent=35 // pred_check
          %p207 = pneg %p64
        $region42: #{tpu_custom_call.1} parent=35 // pred_check_branch
          %209 = sbr.rel (%p207) target = $region44
        $region43: #{tpu_custom_call.1} parent=35 // pred_region
          %210 = dma.done [#allocation6], 3072
        $region44: #{tpu_custom_call.1} parent=35 // pred_fallthru
          _
        %s211 = sand.u32 %s30, 1
        %s212 = scalar_lea.sflag [#allocation3], %s211
        %s213 = sand.u32 %s30, 1
        %s214 = smul.addr %s213, 256
        %s215 = scalar_lea.vmem [#allocation2], %s214
        %p216 = pneg %p43
        %p217 = pneg %p40
        %p218 = pneg %p64
        %p219 = pneg %p61
        %p220 = pneg %p85
        %p221 = pneg %p82
        %p222 = pneg %p106
        %p223 = pneg %p103
        %p224 = pneg %p132
        %p225 = pneg %p129
        %s226 = sand.u32 %s119, 1
        %s227 = scalar_lea.sflag [#allocation4], %s226
        %s228 = sand.u32 %s119, 1
        %s229 = smul.addr %s228, 256
        %s230 = scalar_lea.vmem [#allocation7], %s229
        %v232 = vld [vmem:[%s202] sm:$0xff]
        %v233 = vld [vmem:[%s202 + $0x8] sm:$0xff]
        %v234 = vld [vmem:[%s202 + $0x10] sm:$0xff]
        %v235 = vld [vmem:[%s202 + $0x18] sm:$0xff]
        %v236 = vld [vmem:[%s202 + $0x20] sm:$0xff]
        %v237 = vld [vmem:[%s202 + $0x28] sm:$0xff]
        %v238 = vld [vmem:[%s202 + $0x30] sm:$0xff]
        %v239 = vld [vmem:[%s202 + $0x38] sm:$0xff]
        %v240 = vld [vmem:[%s202 + $0x40] sm:$0xff]
        %v241 = vld [vmem:[%s202 + $0x48] sm:$0xff]
        %v242 = vld [vmem:[%s202 + $0x50] sm:$0xff]
        %v243 = vld [vmem:[%s202 + $0x58] sm:$0xff]
        %v244 = vld [vmem:[%s202 + $0x60] sm:$0xff]
        %v245 = vld [vmem:[%s202 + $0x68] sm:$0xff]
        %v246 = vld [vmem:[%s202 + $0x70] sm:$0xff]
        %v247 = vld [vmem:[%s202 + $0x78] sm:$0xff]
        %v248 = vld [vmem:[%s202 + $0x80] sm:$0xff]
        %v249 = vld [vmem:[%s202 + $0x88] sm:$0xff]
        %v250 = vld [vmem:[%s202 + $0x90] sm:$0xff]
        %v251 = vld [vmem:[%s202 + $0x98] sm:$0xff]
        %v252 = vld [vmem:[%s202 + $0xa0] sm:$0xff]
        %v253 = vld [vmem:[%s202 + $0xa8] sm:$0xff]
        %v254 = vld [vmem:[%s202 + $0xb0] sm:$0xff]
        %v255 = vld [vmem:[%s202 + $0xb8] sm:$0xff]
        %v256 = vld [vmem:[%s202 + $0xc0] sm:$0xff]
        %v257 = vld [vmem:[%s202 + $0xc8] sm:$0xff]
        %v258 = vld [vmem:[%s202 + $0xd0] sm:$0xff]
        %v259 = vld [vmem:[%s202 + $0xd8] sm:$0xff]
        %v260 = vld [vmem:[%s202 + $0xe0] sm:$0xff]
        %v261 = vld [vmem:[%s202 + $0xe8] sm:$0xff]
        %v262 = vld [vmem:[%s202 + $0xf0] sm:$0xff]
        %v263 = vld [vmem:[%s202 + $0xf8] sm:$0xff]
        %v264 = vpack.c.bf16 %v234, %v232
        %v265 = vpack.c.bf16 %v235, %v233
        %v266 = vpack.c.bf16 %v238, %v236
        %v267 = vpack.c.bf16 %v239, %v237
        %v268 = vpack.c.bf16 %v242, %v240
        %v269 = vpack.c.bf16 %v243, %v241
        %v270 = vpack.c.bf16 %v246, %v244
        %v271 = vpack.c.bf16 %v247, %v245
        %v272 = vpack.c.bf16 %v250, %v248
        %v273 = vpack.c.bf16 %v251, %v249
        %v274 = vpack.c.bf16 %v254, %v252
        %v275 = vpack.c.bf16 %v255, %v253
        %v276 = vpack.c.bf16 %v258, %v256
        %v277 = vpack.c.bf16 %v259, %v257
        %v278 = vpack.c.bf16 %v262, %v260
        %v279 = vpack.c.bf16 %v263, %v261
        %v280 = vld [vmem:[#allocation5] sm:$0xf]
        %v281 = vld [vmem:[#allocation5 + $0x4] sm:$0xf]
        %v282 = vld [vmem:[#allocation5 + $0x8] sm:$0xf]
        %v283 = vld [vmem:[#allocation5 + $0xc] sm:$0xf]
        %v284 = vld [vmem:[#allocation5 + $0x10] sm:$0xf]
        %v285 = vld [vmem:[#allocation5 + $0x14] sm:$0xf]
        %v286 = vld [vmem:[#allocation5 + $0x18] sm:$0xf]
        %v287 = vld [vmem:[#allocation5 + $0x1c] sm:$0xf]
        %v288 = vld [vmem:[#allocation5 + $0x20] sm:$0xf]
        %v289 = vld [vmem:[#allocation5 + $0x24] sm:$0xf]
        %v290 = vld [vmem:[#allocation5 + $0x28] sm:$0xf]
        %v291 = vld [vmem:[#allocation5 + $0x2c] sm:$0xf]
        %v292 = vld [vmem:[#allocation5 + $0x30] sm:$0xf]
        %v293 = vld [vmem:[#allocation5 + $0x34] sm:$0xf]
        %v294 = vld [vmem:[#allocation5 + $0x38] sm:$0xf]
        %v295 = vld [vmem:[#allocation5 + $0x3c] sm:$0xf]
        %v296 = vld [vmem:[#allocation5 + $0x40] sm:$0xf]
        %v297 = vld [vmem:[#allocation5 + $0x44] sm:$0xf]
        %v298 = vld [vmem:[#allocation5 + $0x48] sm:$0xf]
        %v299 = vld [vmem:[#allocation5 + $0x4c] sm:$0xf]
        %v300 = vld [vmem:[#allocation5 + $0x50] sm:$0xf]
        %v301 = vld [vmem:[#allocation5 + $0x54] sm:$0xf]
        %v302 = vld [vmem:[#allocation5 + $0x58] sm:$0xf]
        %v303 = vld [vmem:[#allocation5 + $0x5c] sm:$0xf]
        %v304 = vld [vmem:[#allocation5 + $0x60] sm:$0xf]
        %v305 = vld [vmem:[#allocation5 + $0x64] sm:$0xf]
        %v306 = vld [vmem:[#allocation5 + $0x68] sm:$0xf]
        %v307 = vld [vmem:[#allocation5 + $0x6c] sm:$0xf]
        %v308 = vld [vmem:[#allocation5 + $0x70] sm:$0xf]
        %v309 = vld [vmem:[#allocation5 + $0x74] sm:$0xf]
        %v310 = vld [vmem:[#allocation5 + $0x78] sm:$0xf]
        %v311 = vld [vmem:[#allocation5 + $0x7c] sm:$0xf]
        %v312 = vld [vmem:[#allocation5 + $0x80] sm:$0xf]
        %v313 = vld [vmem:[#allocation5 + $0x84] sm:$0xf]
        %v314 = vld [vmem:[#allocation5 + $0x88] sm:$0xf]
        %v315 = vld [vmem:[#allocation5 + $0x8c] sm:$0xf]
        %v316 = vld [vmem:[#allocation5 + $0x90] sm:$0xf]
        %v317 = vld [vmem:[#allocation5 + $0x94] sm:$0xf]
        %v318 = vld [vmem:[#allocation5 + $0x98] sm:$0xf]
        %v319 = vld [vmem:[#allocation5 + $0x9c] sm:$0xf]
        %v320 = vld [vmem:[#allocation5 + $0xa0] sm:$0xf]
        %v321 = vld [vmem:[#allocation5 + $0xa4] sm:$0xf]
        %v322 = vld [vmem:[#allocation5 + $0xa8] sm:$0xf]
        %v323 = vld [vmem:[#allocation5 + $0xac] sm:$0xf]
        %v324 = vld [vmem:[#allocation5 + $0xb0] sm:$0xf]
        %v325 = vld [vmem:[#allocation5 + $0xb4] sm:$0xf]
        %v326 = vld [vmem:[#allocation5 + $0xb8] sm:$0xf]
        %v327 = vld [vmem:[#allocation5 + $0xbc] sm:$0xf]
        %v376 = vunpack.c.l.b16 %v280
        %v377 = vunpack.c.l.b16 %v281
        %v378 = vunpack.c.l.b16 %v282
        %v379 = vunpack.c.l.b16 %v283
        %v380 = vunpack.c.l.b16 %v284
        %v381 = vunpack.c.l.b16 %v285
        %v382 = vunpack.c.l.b16 %v286
        %v383 = vunpack.c.l.b16 %v287
        %v384 = vunpack.c.l.b16 %v288
        %v385 = vunpack.c.l.b16 %v289
        %v386 = vunpack.c.l.b16 %v290
        %v387 = vunpack.c.l.b16 %v291
        %v388 = vunpack.c.l.b16 %v292
        %v389 = vunpack.c.l.b16 %v293
        %v390 = vunpack.c.l.b16 %v294
        %v391 = vunpack.c.l.b16 %v295
        %v392 = vunpack.c.l.b16 %v296
        %v393 = vunpack.c.l.b16 %v297
        %v394 = vunpack.c.l.b16 %v298
        %v395 = vunpack.c.l.b16 %v299
        %v396 = vunpack.c.l.b16 %v300
        %v397 = vunpack.c.l.b16 %v301
        %v398 = vunpack.c.l.b16 %v302
        %v399 = vunpack.c.l.b16 %v303
        %v400 = vunpack.c.l.b16 %v304
        %v401 = vunpack.c.l.b16 %v305
        %v402 = vunpack.c.l.b16 %v306
        %v403 = vunpack.c.l.b16 %v307
        %v404 = vunpack.c.l.b16 %v308
        %v405 = vunpack.c.l.b16 %v309
        %v406 = vunpack.c.l.b16 %v310
        %v407 = vunpack.c.l.b16 %v311
        %v408 = vunpack.c.l.b16 %v312
        %v409 = vunpack.c.l.b16 %v313
        %v410 = vunpack.c.l.b16 %v314
        %v411 = vunpack.c.l.b16 %v315
        %v412 = vunpack.c.l.b16 %v316
        %v413 = vunpack.c.l.b16 %v317
        %v414 = vunpack.c.l.b16 %v318
        %v415 = vunpack.c.l.b16 %v319
        %v416 = vunpack.c.l.b16 %v320
        %v417 = vunpack.c.l.b16 %v321
        %v418 = vunpack.c.l.b16 %v322
        %v419 = vunpack.c.l.b16 %v323
        %v420 = vunpack.c.l.b16 %v324
        %v421 = vunpack.c.l.b16 %v325
        %v422 = vunpack.c.l.b16 %v326
        %v423 = vunpack.c.l.b16 %v327
        %v424 = vpack.c.b16 %v377, %v376
        %v425 = vpack.c.b16 %v379, %v378
        %v426 = vpack.c.b16 %v381, %v380
        %v427 = vpack.c.b16 %v383, %v382
        %v428 = vpack.c.b16 %v385, %v384
        %v429 = vpack.c.b16 %v387, %v386
        %v430 = vpack.c.b16 %v389, %v388
        %v431 = vpack.c.b16 %v391, %v390
        %v432 = vpack.c.b16 %v393, %v392
        %v433 = vpack.c.b16 %v395, %v394
        %v434 = vpack.c.b16 %v397, %v396
        %v435 = vpack.c.b16 %v399, %v398
        %v436 = vpack.c.b16 %v401, %v400
        %v437 = vpack.c.b16 %v403, %v402
        %v438 = vpack.c.b16 %v405, %v404
        %v439 = vpack.c.b16 %v407, %v406
        %v440 = vpack.c.b16 %v409, %v408
        %v441 = vpack.c.b16 %v411, %v410
        %v442 = vpack.c.b16 %v413, %v412
        %v443 = vpack.c.b16 %v415, %v414
        %v444 = vpack.c.b16 %v417, %v416
        %v445 = vpack.c.b16 %v419, %v418
        %v446 = vpack.c.b16 %v421, %v420
        %v447 = vpack.c.b16 %v423, %v422
        %472 = vmatprep.subr.bf16.mxu0 %v265
        %473 = vmatpush1.bf16.msra.mxu0 %v264
        %474 = vmatprep.subr.bf16.mxu0 %v267
        %475 = vmatpush1.bf16.msra.mxu0 %v266
        %476 = vmatprep.subr.bf16.mxu0 %v269
        %477 = vmatpush1.bf16.msra.mxu0 %v268
        %478 = vmatprep.subr.bf16.mxu0 %v271
        %479 = vmatpush1.bf16.msra.mxu0 %v270
        %480 = vmatprep.subr.bf16.mxu0 %v273
        %481 = vmatpush1.bf16.msra.mxu0 %v272
        %482 = vmatprep.subr.bf16.mxu0 %v275
        %483 = vmatpush1.bf16.msra.mxu0 %v274
        %484 = vmatprep.subr.bf16.mxu0 %v277
        %485 = vmatpush1.bf16.msra.mxu0 %v276
        %486 = vmatprep.subr.bf16.mxu0 %v279
        %487 = vmatpush1.bf16.msra.mxu0 %v278
        %488 = vmatprep.subr.bf16.mxu0 0
        %489 = vmatpush1.bf16.msra.mxu0 0
        %490 = vmatprep.subr.bf16.mxu0 0
        %491 = vmatpush1.bf16.msra.mxu0 0
        %492 = vmatprep.subr.bf16.mxu0 0
        %493 = vmatpush1.bf16.msra.mxu0 0
        %494 = vmatprep.subr.bf16.mxu0 0
        %495 = vmatpush1.bf16.msra.mxu0 0
        %496 = vmatprep.subr.bf16.mxu0 0
        %497 = vmatpush1.bf16.msra.mxu0 0
        %498 = vmatprep.subr.bf16.mxu0 0
        %499 = vmatpush1.bf16.msra.mxu0 0
        %500 = vmatprep.subr.bf16.mxu0 0
        %501 = vmatpush1.bf16.msra.mxu0 0
        %502 = vmatprep.subr.bf16.mxu0 0
        %503 = vmatpush1.bf16.msra.mxu0 0
        %504 = vmatprep.mubr.bf16.mxu0 0
        %505 = vmatmul.mubr.bf16.gmra.mrb[0].mxu0 %v424
        %v506 = vpop.f32.mrb[0].mxu0
        %v507 = vadd.f32 0.0, %v506
        %v508 = vpop.f32.mrb[0].mxu0
        %v509 = vadd.f32 0.0, %v508
        %v510 = vpop.f32.mrb[0].mxu0
        %v511 = vadd.f32 0.0, %v510
        %v512 = vpop.f32.mrb[0].mxu0
        %v513 = vadd.f32 0.0, %v512
        %514 = vmatprep.mubr.bf16.mxu0 0
        %515 = vmatmul.mubr.bf16.gmra.mrb[0].mxu0 %v425
        %v516 = vpop.f32.mrb[0].mxu0
        %v517 = vadd.f32 0.0, %v516
        %v518 = vpop.f32.mrb[0].mxu0
        %v519 = vadd.f32 0.0, %v518
        %v520 = vpop.f32.mrb[0].mxu0
        %v521 = vadd.f32 0.0, %v520
        %v522 = vpop.f32.mrb[0].mxu0
        %v523 = vadd.f32 0.0, %v522
        %524 = vmatprep.mubr.bf16.mxu0 0
        %525 = vmatmul.mubr.bf16.gmra.mrb[0].mxu0 %v426
        %v526 = vpop.f32.mrb[0].mxu0
        %v527 = vadd.f32 0.0, %v526
        %v528 = vpop.f32.mrb[0].mxu0
        %v529 = vadd.f32 0.0, %v528
        %v530 = vpop.f32.mrb[0].mxu0
        %v531 = vadd.f32 0.0, %v530
        %v532 = vpop.f32.mrb[0].mxu0
        %v533 = vadd.f32 0.0, %v532
        %534 = vmatprep.mubr.bf16.mxu0 0
        %535 = vmatmul.mubr.bf16.gmra.mrb[0].mxu0 %v427
        %v536 = vpop.f32.mrb[0].mxu0
        %v537 = vadd.f32 0.0, %v536
        %v538 = vpop.f32.mrb[0].mxu0
        %v539 = vadd.f32 0.0, %v538
        %v540 = vpop.f32.mrb[0].mxu0
        %v541 = vadd.f32 0.0, %v540
        %v542 = vpop.f32.mrb[0].mxu0
        %v543 = vadd.f32 0.0, %v542
        %544 = vmatprep.mubr.bf16.mxu0 0
        %545 = vmatmul.mubr.bf16.gmra.mrb[0].mxu0 %v428
        %v546 = vpop.f32.mrb[0].mxu0
        %v547 = vadd.f32 0.0, %v546
        %v548 = vpop.f32.mrb[0].mxu0
        %v549 = vadd.f32 0.0, %v548
        %v550 = vpop.f32.mrb[0].mxu0
        %v551 = vadd.f32 0.0, %v550
        %v552 = vpop.f32.mrb[0].mxu0
        %v553 = vadd.f32 0.0, %v552
        %554 = vmatprep.mubr.bf16.mxu0 0
        %555 = vmatmul.mubr.bf16.gmra.mrb[0].mxu0 %v429
        %v556 = vpop.f32.mrb[0].mxu0
        %v557 = vadd.f32 0.0, %v556
        %v558 = vpop.f32.mrb[0].mxu0
        %v559 = vadd.f32 0.0, %v558
        %v560 = vpop.f32.mrb[0].mxu0
        %v561 = vadd.f32 0.0, %v560
        %v562 = vpop.f32.mrb[0].mxu0
        %v563 = vadd.f32 0.0, %v562
        %564 = vmatprep.mubr.bf16.mxu0 0
        %565 = vmatmul.mubr.bf16.gmra.mrb[0].mxu0 %v430
        %v566 = vpop.f32.mrb[0].mxu0
        %v567 = vadd.f32 0.0, %v566
        %v568 = vpop.f32.mrb[0].mxu0
        %v569 = vadd.f32 0.0, %v568
        %v570 = vpop.f32.mrb[0].mxu0
        %v571 = vadd.f32 0.0, %v570
        %v572 = vpop.f32.mrb[0].mxu0
        %v573 = vadd.f32 0.0, %v572
        %574 = vmatprep.mubr.bf16.mxu0 0
        %575 = vmatmul.mubr.bf16.gmra.mrb[0].mxu0 %v431
        %v576 = vpop.f32.mrb[0].mxu0
        %v577 = vadd.f32 0.0, %v576
        %v578 = vpop.f32.mrb[0].mxu0
        %v579 = vadd.f32 0.0, %v578
        %v580 = vpop.f32.mrb[0].mxu0
        %v581 = vadd.f32 0.0, %v580
        %v582 = vpop.f32.mrb[0].mxu0
        %v583 = vadd.f32 0.0, %v582
        %584 = vmatprep.mubr.bf16.mxu0 0
        %585 = vmatmul.mubr.bf16.gmra.mrb[0].mxu0 %v432
        %v586 = vpop.f32.mrb[0].mxu0
        %v587 = vadd.f32 0.0, %v586
        %v588 = vpop.f32.mrb[0].mxu0
        %v589 = vadd.f32 0.0, %v588
        %v590 = vpop.f32.mrb[0].mxu0
        %v591 = vadd.f32 0.0, %v590
        %v592 = vpop.f32.mrb[0].mxu0
        %v593 = vadd.f32 0.0, %v592
        %594 = vmatprep.mubr.bf16.mxu0 0
        %595 = vmatmul.mubr.bf16.gmra.mrb[0].mxu0 %v433
        %v596 = vpop.f32.mrb[0].mxu0
        %v597 = vadd.f32 0.0, %v596
        %v598 = vpop.f32.mrb[0].mxu0
        %v599 = vadd.f32 0.0, %v598
        %v600 = vpop.f32.mrb[0].mxu0
        %v601 = vadd.f32 0.0, %v600
        %v602 = vpop.f32.mrb[0].mxu0
        %v603 = vadd.f32 0.0, %v602
        %604 = vmatprep.mubr.bf16.mxu0 0
        %605 = vmatmul.mubr.bf16.gmra.mrb[0].mxu0 %v434
        %v606 = vpop.f32.mrb[0].mxu0
        %v607 = vadd.f32 0.0, %v606
        %v608 = vpop.f32.mrb[0].mxu0
        %v609 = vadd.f32 0.0, %v608
        %v610 = vpop.f32.mrb[0].mxu0
        %v611 = vadd.f32 0.0, %v610
        %v612 = vpop.f32.mrb[0].mxu0
        %v613 = vadd.f32 0.0, %v612
        %614 = vmatprep.mubr.bf16.mxu0 0
        %615 = vmatmul.mubr.bf16.gmra.mrb[0].mxu0 %v435
        %v616 = vpop.f32.mrb[0].mxu0
        %v617 = vadd.f32 0.0, %v616
        %v618 = vpop.f32.mrb[0].mxu0
        %v619 = vadd.f32 0.0, %v618
        %v620 = vpop.f32.mrb[0].mxu0
        %v621 = vadd.f32 0.0, %v620
        %v622 = vpop.f32.mrb[0].mxu0
        %v623 = vadd.f32 0.0, %v622
        %624 = vmatprep.mubr.bf16.mxu0 0
        %625 = vmatmul.mubr.bf16.gmra.mrb[0].mxu0 %v436
        %v626 = vpop.f32.mrb[0].mxu0
        %v627 = vadd.f32 0.0, %v626
        %v628 = vpop.f32.mrb[0].mxu0
        %v629 = vadd.f32 0.0, %v628
        %v630 = vpop.f32.mrb[0].mxu0
        %v631 = vadd.f32 0.0, %v630
        %v632 = vpop.f32.mrb[0].mxu0
        %v633 = vadd.f32 0.0, %v632
        %634 = vmatprep.mubr.bf16.mxu0 0
        %635 = vmatmul.mubr.bf16.gmra.mrb[0].mxu0 %v437
        %v636 = vpop.f32.mrb[0].mxu0
        %v637 = vadd.f32 0.0, %v636
        %v638 = vpop.f32.mrb[0].mxu0
        %v639 = vadd.f32 0.0, %v638
        %v640 = vpop.f32.mrb[0].mxu0
        %v641 = vadd.f32 0.0, %v640
        %v642 = vpop.f32.mrb[0].mxu0
        %v643 = vadd.f32 0.0, %v642
        %644 = vmatprep.mubr.bf16.mxu0 0
        %645 = vmatmul.mubr.bf16.gmra.mrb[0].mxu0 %v438
        %v646 = vpop.f32.mrb[0].mxu0
        %v647 = vadd.f32 0.0, %v646
        %v648 = vpop.f32.mrb[0].mxu0
        %v649 = vadd.f32 0.0, %v648
        %v650 = vpop.f32.mrb[0].mxu0
        %v651 = vadd.f32 0.0, %v650
        %v652 = vpop.f32.mrb[0].mxu0
        %v653 = vadd.f32 0.0, %v652
        %654 = vmatprep.mubr.bf16.mxu0 0
        %655 = vmatmul.mubr.bf16.gmra.mrb[0].mxu0 %v439
        %v656 = vpop.f32.mrb[0].mxu0
        %v657 = vadd.f32 0.0, %v656
        %v658 = vpop.f32.mrb[0].mxu0
        %v659 = vadd.f32 0.0, %v658
        %v660 = vpop.f32.mrb[0].mxu0
        %v661 = vadd.f32 0.0, %v660
        %v662 = vpop.f32.mrb[0].mxu0
        %v663 = vadd.f32 0.0, %v662
        %664 = vmatprep.mubr.bf16.mxu0 0
        %665 = vmatmul.mubr.bf16.gmra.mrb[0].mxu0 %v440
        %v666 = vpop.f32.mrb[0].mxu0
        %v667 = vadd.f32 0.0, %v666
        %v668 = vpop.f32.mrb[0].mxu0
        %v669 = vadd.f32 0.0, %v668
        %v670 = vpop.f32.mrb[0].mxu0
        %v671 = vadd.f32 0.0, %v670
        %v672 = vpop.f32.mrb[0].mxu0
        %v673 = vadd.f32 0.0, %v672
        %674 = vmatprep.mubr.bf16.mxu0 0
        %675 = vmatmul.mubr.bf16.gmra.mrb[0].mxu0 %v441
        %v676 = vpop.f32.mrb[0].mxu0
        %v677 = vadd.f32 0.0, %v676
        %v678 = vpop.f32.mrb[0].mxu0
        %v679 = vadd.f32 0.0, %v678
        %v680 = vpop.f32.mrb[0].mxu0
        %v681 = vadd.f32 0.0, %v680
        %v682 = vpop.f32.mrb[0].mxu0
        %v683 = vadd.f32 0.0, %v682
        %684 = vmatprep.mubr.bf16.mxu0 0
        %685 = vmatmul.mubr.bf16.gmra.mrb[0].mxu0 %v442
        %v686 = vpop.f32.mrb[0].mxu0
        %v687 = vadd.f32 0.0, %v686
        %v688 = vpop.f32.mrb[0].mxu0
        %v689 = vadd.f32 0.0, %v688
        %v690 = vpop.f32.mrb[0].mxu0
        %v691 = vadd.f32 0.0, %v690
        %v692 = vpop.f32.mrb[0].mxu0
        %v693 = vadd.f32 0.0, %v692
        %694 = vmatprep.mubr.bf16.mxu0 0
        %695 = vmatmul.mubr.bf16.gmra.mrb[0].mxu0 %v443
        %v696 = vpop.f32.mrb[0].mxu0
        %v697 = vadd.f32 0.0, %v696
        %v698 = vpop.f32.mrb[0].mxu0
        %v699 = vadd.f32 0.0, %v698
        %v700 = vpop.f32.mrb[0].mxu0
        %v701 = vadd.f32 0.0, %v700
        %v702 = vpop.f32.mrb[0].mxu0
        %v703 = vadd.f32 0.0, %v702
        %704 = vmatprep.mubr.bf16.mxu0 0
        %705 = vmatmul.mubr.bf16.gmra.mrb[0].mxu0 %v444
        %v706 = vpop.f32.mrb[0].mxu0
        %v707 = vadd.f32 0.0, %v706
        %v708 = vpop.f32.mrb[0].mxu0
        %v709 = vadd.f32 0.0, %v708
        %v710 = vpop.f32.mrb[0].mxu0
        %v711 = vadd.f32 0.0, %v710
        %v712 = vpop.f32.mrb[0].mxu0
        %v713 = vadd.f32 0.0, %v712
        %714 = vmatprep.mubr.bf16.mxu0 0
        %715 = vmatmul.mubr.bf16.gmra.mrb[0].mxu0 %v445
        %v716 = vpop.f32.mrb[0].mxu0
        %v717 = vadd.f32 0.0, %v716
        %v718 = vpop.f32.mrb[0].mxu0
        %v719 = vadd.f32 0.0, %v718
        %v720 = vpop.f32.mrb[0].mxu0
        %v721 = vadd.f32 0.0, %v720
        %v722 = vpop.f32.mrb[0].mxu0
        %v723 = vadd.f32 0.0, %v722
        %724 = vmatprep.mubr.bf16.mxu0 0
        %725 = vmatmul.mubr.bf16.gmra.mrb[0].mxu0 %v446
        %v726 = vpop.f32.mrb[0].mxu0
        %v727 = vadd.f32 0.0, %v726
        %v728 = vpop.f32.mrb[0].mxu0
        %v729 = vadd.f32 0.0, %v728
        %v730 = vpop.f32.mrb[0].mxu0
        %v731 = vadd.f32 0.0, %v730
        %v732 = vpop.f32.mrb[0].mxu0
        %v733 = vadd.f32 0.0, %v732
        %734 = vmatprep.mubr.bf16.mxu0 0
        %735 = vmatmul.mubr.bf16.gmra.mrb[0].mxu0 %v447
        %v736 = vpop.f32.mrb[0].mxu0
        %v737 = vadd.f32 0.0, %v736
        %v738 = vpop.f32.mrb[0].mxu0
        %v739 = vadd.f32 0.0, %v738
        %v740 = vpop.f32.mrb[0].mxu0
        %v741 = vadd.f32 0.0, %v740
        %v742 = vpop.f32.mrb[0].mxu0
        %v743 = vadd.f32 0.0, %v742
        %744 = vdwg.mxu0
        %v745 = vpack.c.bf16 %v511, %v507
        %v746 = vpack.c.bf16 %v513, %v509
        %v747 = vpack.c.bf16 %v521, %v517
        %v748 = vpack.c.bf16 %v523, %v519
        %v749 = vpack.c.bf16 %v591, %v587
        %v750 = vpack.c.bf16 %v593, %v589
        %v751 = vpack.c.bf16 %v601, %v597
        %v752 = vpack.c.bf16 %v603, %v599
        %753 = vxpose.xlu0.c.b16.start [1/8] %v745, 128
        %754 = vxpose.xlu0.c.b16.cont [2/8] %v747, 128
        %755 = vxpose.xlu0.c.b16.cont [3/8] 0, 128
        %756 = vxpose.xlu0.c.b16.cont [4/8] 0, 128
        %757 = vxpose.xlu0.c.b16.cont [5/8] 0, 128
        %758 = vxpose.xlu0.c.b16.cont [6/8] 0, 128
        %759 = vxpose.xlu0.c.b16.cont [7/8] 0, 128
        %760 = vxpose.xlu0.c.b16.end [8/8] 0, 128
        %v761 = vpop.trf.xlu0
        %v762 = vpop.trf.xlu0
        %v763 = vpop.trf.xlu0
        %v764 = vpop.trf.xlu0
        %v765 = vpop.trf.xlu0
        %v766 = vpop.trf.xlu0
        %v767 = vpop.trf.xlu0
        %v768 = vpop.trf.xlu0
        %769 = vxpose.xlu0.c.b16.start [1/8] %v746, 128
        %770 = vxpose.xlu0.c.b16.cont [2/8] %v748, 128
        %771 = vxpose.xlu0.c.b16.cont [3/8] 0, 128
        %772 = vxpose.xlu0.c.b16.cont [4/8] 0, 128
        %773 = vxpose.xlu0.c.b16.cont [5/8] 0, 128
        %774 = vxpose.xlu0.c.b16.cont [6/8] 0, 128
        %775 = vxpose.xlu0.c.b16.cont [7/8] 0, 128
        %776 = vxpose.xlu0.c.b16.end [8/8] 0, 128
        %v777 = vpop.trf.xlu0
        %v778 = vpop.trf.xlu0
        %v779 = vpop.trf.xlu0
        %v780 = vpop.trf.xlu0
        %v781 = vpop.trf.xlu0
        %v782 = vpop.trf.xlu0
        %v783 = vpop.trf.xlu0
        %v784 = vpop.trf.xlu0
        %vm785 = vcmask 261120
        %v787 = vsel %vm785, %v761, 0
        %v790 = vsel %vm785, %v762, 0
        %v793 = vsel %vm785, %v763, 0
        %v796 = vsel %vm785, %v764, 0
        %v799 = vsel %vm785, %v765, 0
        %v802 = vsel %vm785, %v766, 0
        %v805 = vsel %vm785, %v767, 0
        %v808 = vsel %vm785, %v768, 0
        %v811 = vsel %vm785, %v777, 0
        %v814 = vsel %vm785, %v778, 0
        %v817 = vsel %vm785, %v779, 0
        %v820 = vsel %vm785, %v780, 0
        %v823 = vsel %vm785, %v781, 0
        %v826 = vsel %vm785, %v782, 0
        %v829 = vsel %vm785, %v783, 0
        %v832 = vsel %vm785, %v784, 0
        %834 = vmatprep.subr.bf16.mxu0 %v750
        %835 = vmatpush1.bf16.msra.mxu0 %v749
        %836 = vmatprep.subr.bf16.mxu0 %v752
        %837 = vmatpush1.bf16.msra.mxu0 %v751
        %838 = vmatprep.subr.bf16.mxu0 0
        %839 = vmatpush1.bf16.msra.mxu0 0
        %840 = vmatprep.subr.bf16.mxu0 0
        %841 = vmatpush1.bf16.msra.mxu0 0
        %842 = vmatprep.subr.bf16.mxu0 0
        %843 = vmatpush1.bf16.msra.mxu0 0
        %844 = vmatprep.subr.bf16.mxu0 0
        %845 = vmatpush1.bf16.msra.mxu0 0
        %846 = vmatprep.subr.bf16.mxu0 0
        %847 = vmatpush1.bf16.msra.mxu0 0
        %848 = vmatprep.subr.bf16.mxu0 0
        %849 = vmatpush1.bf16.msra.mxu0 0
        %850 = vmatprep.subr.bf16.mxu0 0
        %851 = vmatpush1.bf16.msra.mxu0 0
        %852 = vmatprep.subr.bf16.mxu0 0
        %853 = vmatpush1.bf16.msra.mxu0 0
        %854 = vmatprep.subr.bf16.mxu0 0
        %855 = vmatpush1.bf16.msra.mxu0 0
        %856 = vmatprep.subr.bf16.mxu0 0
        %857 = vmatpush1.bf16.msra.mxu0 0
        %858 = vmatprep.subr.bf16.mxu0 0
        %859 = vmatpush1.bf16.msra.mxu0 0
        %860 = vmatprep.subr.bf16.mxu0 0
        %861 = vmatpush1.bf16.msra.mxu0 0
        %862 = vmatprep.subr.bf16.mxu0 0
        %863 = vmatpush1.bf16.msra.mxu0 0
        %864 = vmatprep.subr.bf16.mxu0 0
        %865 = vmatpush1.bf16.msra.mxu0 0
        %866 = vmatprep.mubr.bf16.mxu0 0
        %867 = vmatmul.mubr.bf16.gmra.mrb[0].mxu0 %v787
        %v868 = vpop.f32.mrb[0].mxu0
        %v869 = vadd.f32 0.0, %v868
        %v870 = vpop.f32.mrb[0].mxu0
        %v871 = vadd.f32 0.0, %v870
        %v872 = vpop.f32.mrb[0].mxu0
        %v873 = vadd.f32 0.0, %v872
        %v874 = vpop.f32.mrb[0].mxu0
        %v875 = vadd.f32 0.0, %v874
        %876 = vmatprep.mubr.bf16.mxu0 0
        %877 = vmatmul.mubr.bf16.gmra.mrb[0].mxu0 %v790
        %v878 = vpop.f32.mrb[0].mxu0
        %v879 = vadd.f32 0.0, %v878
        %v880 = vpop.f32.mrb[0].mxu0
        %v881 = vadd.f32 0.0, %v880
        %v882 = vpop.f32.mrb[0].mxu0
        %v883 = vadd.f32 0.0, %v882
        %v884 = vpop.f32.mrb[0].mxu0
        %v885 = vadd.f32 0.0, %v884
        %886 = vmatprep.mubr.bf16.mxu0 0
        %887 = vmatmul.mubr.bf16.gmra.mrb[0].mxu0 %v793
        %v888 = vpop.f32.mrb[0].mxu0
        %v889 = vadd.f32 0.0, %v888
        %v890 = vpop.f32.mrb[0].mxu0
        %v891 = vadd.f32 0.0, %v890
        %v892 = vpop.f32.mrb[0].mxu0
        %v893 = vadd.f32 0.0, %v892
        %v894 = vpop.f32.mrb[0].mxu0
        %v895 = vadd.f32 0.0, %v894
        %896 = vmatprep.mubr.bf16.mxu0 0
        %897 = vmatmul.mubr.bf16.gmra.mrb[0].mxu0 %v796
        %v898 = vpop.f32.mrb[0].mxu0
        %v899 = vadd.f32 0.0, %v898
        %v900 = vpop.f32.mrb[0].mxu0
        %v901 = vadd.f32 0.0, %v900
        %v902 = vpop.f32.mrb[0].mxu0
        %v903 = vadd.f32 0.0, %v902
        %v904 = vpop.f32.mrb[0].mxu0
        %v905 = vadd.f32 0.0, %v904
        %906 = vmatprep.mubr.bf16.mxu0 0
        %907 = vmatmul.mubr.bf16.gmra.mrb[0].mxu0 %v799
        %v908 = vpop.f32.mrb[0].mxu0
        %v909 = vadd.f32 0.0, %v908
        %v910 = vpop.f32.mrb[0].mxu0
        %v911 = vadd.f32 0.0, %v910
        %v912 = vpop.f32.mrb[0].mxu0
        %v913 = vadd.f32 0.0, %v912
        %v914 = vpop.f32.mrb[0].mxu0
        %v915 = vadd.f32 0.0, %v914
        %916 = vmatprep.mubr.bf16.mxu0 0
        %917 = vmatmul.mubr.bf16.gmra.mrb[0].mxu0 %v802
        %v918 = vpop.f32.mrb[0].mxu0
        %v919 = vadd.f32 0.0, %v918
        %v920 = vpop.f32.mrb[0].mxu0
        %v921 = vadd.f32 0.0, %v920
        %v922 = vpop.f32.mrb[0].mxu0
        %v923 = vadd.f32 0.0, %v922
        %v924 = vpop.f32.mrb[0].mxu0
        %v925 = vadd.f32 0.0, %v924
        %926 = vmatprep.mubr.bf16.mxu0 0
        %927 = vmatmul.mubr.bf16.gmra.mrb[0].mxu0 %v805
        %v928 = vpop.f32.mrb[0].mxu0
        %v929 = vadd.f32 0.0, %v928
        %v930 = vpop.f32.mrb[0].mxu0
        %v931 = vadd.f32 0.0, %v930
        %v932 = vpop.f32.mrb[0].mxu0
        %v933 = vadd.f32 0.0, %v932
        %v934 = vpop.f32.mrb[0].mxu0
        %v935 = vadd.f32 0.0, %v934
        %936 = vmatprep.mubr.bf16.mxu0 0
        %937 = vmatmul.mubr.bf16.gmra.mrb[0].mxu0 %v808
        %v938 = vpop.f32.mrb[0].mxu0
        %v939 = vadd.f32 0.0, %v938
        %v940 = vpop.f32.mrb[0].mxu0
        %v941 = vadd.f32 0.0, %v940
        %v942 = vpop.f32.mrb[0].mxu0
        %v943 = vadd.f32 0.0, %v942
        %v944 = vpop.f32.mrb[0].mxu0
        %v945 = vadd.f32 0.0, %v944
        %946 = vmatprep.mubr.bf16.mxu0 0
        %947 = vmatmul.mubr.bf16.gmra.mrb[0].mxu0 %v811
        %v948 = vpop.f32.mrb[0].mxu0
        %v949 = vadd.f32 0.0, %v948
        %v950 = vpop.f32.mrb[0].mxu0
        %v951 = vadd.f32 0.0, %v950
        %v952 = vpop.f32.mrb[0].mxu0
        %v953 = vadd.f32 0.0, %v952
        %v954 = vpop.f32.mrb[0].mxu0
        %v955 = vadd.f32 0.0, %v954
        %956 = vmatprep.mubr.bf16.mxu0 0
        %957 = vmatmul.mubr.bf16.gmra.mrb[0].mxu0 %v814
        %v958 = vpop.f32.mrb[0].mxu0
        %v959 = vadd.f32 0.0, %v958
        %v960 = vpop.f32.mrb[0].mxu0
        %v961 = vadd.f32 0.0, %v960
        %v962 = vpop.f32.mrb[0].mxu0
        %v963 = vadd.f32 0.0, %v962
        %v964 = vpop.f32.mrb[0].mxu0
        %v965 = vadd.f32 0.0, %v964
        %966 = vmatprep.mubr.bf16.mxu0 0
        %967 = vmatmul.mubr.bf16.gmra.mrb[0].mxu0 %v817
        %v968 = vpop.f32.mrb[0].mxu0
        %v969 = vadd.f32 0.0, %v968
        %v970 = vpop.f32.mrb[0].mxu0
        %v971 = vadd.f32 0.0, %v970
        %v972 = vpop.f32.mrb[0].mxu0
        %v973 = vadd.f32 0.0, %v972
        %v974 = vpop.f32.mrb[0].mxu0
        %v975 = vadd.f32 0.0, %v974
        %976 = vmatprep.mubr.bf16.mxu0 0
        %977 = vmatmul.mubr.bf16.gmra.mrb[0].mxu0 %v820
        %v978 = vpop.f32.mrb[0].mxu0
        %v979 = vadd.f32 0.0, %v978
        %v980 = vpop.f32.mrb[0].mxu0
        %v981 = vadd.f32 0.0, %v980
        %v982 = vpop.f32.mrb[0].mxu0
        %v983 = vadd.f32 0.0, %v982
        %v984 = vpop.f32.mrb[0].mxu0
        %v985 = vadd.f32 0.0, %v984
        %986 = vmatprep.mubr.bf16.mxu0 0
        %987 = vmatmul.mubr.bf16.gmra.mrb[0].mxu0 %v823
        %v988 = vpop.f32.mrb[0].mxu0
        %v989 = vadd.f32 0.0, %v988
        %v990 = vpop.f32.mrb[0].mxu0
        %v991 = vadd.f32 0.0, %v990
        %v992 = vpop.f32.mrb[0].mxu0
        %v993 = vadd.f32 0.0, %v992
        %v994 = vpop.f32.mrb[0].mxu0
        %v995 = vadd.f32 0.0, %v994
        %996 = vmatprep.mubr.bf16.mxu0 0
        %997 = vmatmul.mubr.bf16.gmra.mrb[0].mxu0 %v826
        %v998 = vpop.f32.mrb[0].mxu0
        %v999 = vadd.f32 0.0, %v998
        %v1000 = vpop.f32.mrb[0].mxu0
        %v1001 = vadd.f32 0.0, %v1000
        %v1002 = vpop.f32.mrb[0].mxu0
        %v1003 = vadd.f32 0.0, %v1002
        %v1004 = vpop.f32.mrb[0].mxu0
        %v1005 = vadd.f32 0.0, %v1004
        %1006 = vmatprep.mubr.bf16.mxu0 0
        %1007 = vmatmul.mubr.bf16.gmra.mrb[0].mxu0 %v829
        %v1008 = vpop.f32.mrb[0].mxu0
        %v1009 = vadd.f32 0.0, %v1008
        %v1010 = vpop.f32.mrb[0].mxu0
        %v1011 = vadd.f32 0.0, %v1010
        %v1012 = vpop.f32.mrb[0].mxu0
        %v1013 = vadd.f32 0.0, %v1012
        %v1014 = vpop.f32.mrb[0].mxu0
        %v1015 = vadd.f32 0.0, %v1014
        %1016 = vmatprep.mubr.bf16.mxu0 0
        %1017 = vmatmul.mubr.bf16.gmra.mrb[0].mxu0 %v832
        %v1018 = vpop.f32.mrb[0].mxu0
        %v1019 = vadd.f32 0.0, %v1018
        %v1020 = vpop.f32.mrb[0].mxu0
        %v1021 = vadd.f32 0.0, %v1020
        %v1022 = vpop.f32.mrb[0].mxu0
        %v1023 = vadd.f32 0.0, %v1022
        %v1024 = vpop.f32.mrb[0].mxu0
        %v1025 = vadd.f32 0.0, %v1024
        %1026 = vdwg.mxu0
        %v1027 = vmax.f32 %v869, %v871
        %1028 = vmax.xlane.f32.xlu0 %v1027
        %v1029 = vpop.xlane.xlu0 %1028
        %v1030 = vmax.f32 %v873, %v875
        %1031 = vmax.xlane.f32.xlu0 %v1030
        %v1032 = vpop.xlane.xlu0 %1031
        %v1033 = vmax.f32 %v879, %v881
        %1034 = vmax.xlane.f32.xlu0 %v1033
        %v1035 = vpop.xlane.xlu0 %1034
        %v1036 = vmax.f32 %v883, %v885
        %1037 = vmax.xlane.f32.xlu0 %v1036
        %v1038 = vpop.xlane.xlu0 %1037
        %v1039 = vmax.f32 %v889, %v891
        %1040 = vmax.xlane.f32.xlu0 %v1039
        %v1041 = vpop.xlane.xlu0 %1040
        %v1042 = vmax.f32 %v893, %v895
        %1043 = vmax.xlane.f32.xlu0 %v1042
        %v1044 = vpop.xlane.xlu0 %1043
        %v1045 = vmax.f32 %v899, %v901
        %1046 = vmax.xlane.f32.xlu0 %v1045
        %v1047 = vpop.xlane.xlu0 %1046
        %v1048 = vmax.f32 %v903, %v905
        %1049 = vmax.xlane.f32.xlu0 %v1048
        %v1050 = vpop.xlane.xlu0 %1049
        %v1051 = vmax.f32 %v909, %v911
        %1052 = vmax.xlane.f32.xlu0 %v1051
        %v1053 = vpop.xlane.xlu0 %1052
        %v1054 = vmax.f32 %v913, %v915
        %1055 = vmax.xlane.f32.xlu0 %v1054
        %v1056 = vpop.xlane.xlu0 %1055
        %v1057 = vmax.f32 %v919, %v921
        %1058 = vmax.xlane.f32.xlu0 %v1057
        %v1059 = vpop.xlane.xlu0 %1058
        %v1060 = vmax.f32 %v923, %v925
        %1061 = vmax.xlane.f32.xlu0 %v1060
        %v1062 = vpop.xlane.xlu0 %1061
        %v1063 = vmax.f32 %v929, %v931
        %1064 = vmax.xlane.f32.xlu0 %v1063
        %v1065 = vpop.xlane.xlu0 %1064
        %v1066 = vmax.f32 %v933, %v935
        %1067 = vmax.xlane.f32.xlu0 %v1066
        %v1068 = vpop.xlane.xlu0 %1067
        %v1069 = vmax.f32 %v939, %v941
        %1070 = vmax.xlane.f32.xlu0 %v1069
        %v1071 = vpop.xlane.xlu0 %1070
        %v1072 = vmax.f32 %v943, %v945
        %1073 = vmax.xlane.f32.xlu0 %v1072
        %v1074 = vpop.xlane.xlu0 %1073
        %v1075 = vmax.f32 %v949, %v951
        %1076 = vmax.xlane.f32.xlu0 %v1075
        %v1077 = vpop.xlane.xlu0 %1076
        %v1078 = vmax.f32 %v953, %v955
        %1079 = vmax.xlane.f32.xlu0 %v1078
        %v1080 = vpop.xlane.xlu0 %1079
        %v1081 = vmax.f32 %v959, %v961
        %1082 = vmax.xlane.f32.xlu0 %v1081
        %v1083 = vpop.xlane.xlu0 %1082
        %v1084 = vmax.f32 %v963, %v965
        %1085 = vmax.xlane.f32.xlu0 %v1084
        %v1086 = vpop.xlane.xlu0 %1085
        %v1087 = vmax.f32 %v969, %v971
        %1088 = vmax.xlane.f32.xlu0 %v1087
        %v1089 = vpop.xlane.xlu0 %1088
        %v1090 = vmax.f32 %v973, %v975
        %1091 = vmax.xlane.f32.xlu0 %v1090
        %v1092 = vpop.xlane.xlu0 %1091
        %v1093 = vmax.f32 %v979, %v981
        %1094 = vmax.xlane.f32.xlu0 %v1093
        %v1095 = vpop.xlane.xlu0 %1094
        %v1096 = vmax.f32 %v983, %v985
        %1097 = vmax.xlane.f32.xlu0 %v1096
        %v1098 = vpop.xlane.xlu0 %1097
        %v1099 = vmax.f32 %v989, %v991
        %1100 = vmax.xlane.f32.xlu0 %v1099
        %v1101 = vpop.xlane.xlu0 %1100
        %v1102 = vmax.f32 %v993, %v995
        %1103 = vmax.xlane.f32.xlu0 %v1102
        %v1104 = vpop.xlane.xlu0 %1103
        %v1105 = vmax.f32 %v999, %v1001
        %1106 = vmax.xlane.f32.xlu0 %v1105
        %v1107 = vpop.xlane.xlu0 %1106
        %v1108 = vmax.f32 %v1003, %v1005
        %1109 = vmax.xlane.f32.xlu0 %v1108
        %v1110 = vpop.xlane.xlu0 %1109
        %v1111 = vmax.f32 %v1009, %v1011
        %1112 = vmax.xlane.f32.xlu0 %v1111
        %v1113 = vpop.xlane.xlu0 %1112
        %v1114 = vmax.f32 %v1013, %v1015
        %1115 = vmax.xlane.f32.xlu0 %v1114
        %v1116 = vpop.xlane.xlu0 %1115
        %v1117 = vmax.f32 %v1019, %v1021
        %1118 = vmax.xlane.f32.xlu0 %v1117
        %v1119 = vpop.xlane.xlu0 %1118
        %v1120 = vmax.f32 %v1023, %v1025
        %1121 = vmax.xlane.f32.xlu0 %v1120
        %v1122 = vpop.xlane.xlu0 %1121
        %v1123 = vsub.f32 %v869, %v1029
        %v1124 = vsub.f32 %v871, %v1029
        %v1125 = vsub.f32 %v873, %v1032
        %v1126 = vsub.f32 %v875, %v1032
        %v1127 = vsub.f32 %v879, %v1035
        %v1128 = vsub.f32 %v881, %v1035
        %v1129 = vsub.f32 %v883, %v1038
        %v1130 = vsub.f32 %v885, %v1038
        %v1131 = vsub.f32 %v889, %v1041
        %v1132 = vsub.f32 %v891, %v1041
        %v1133 = vsub.f32 %v893, %v1044
        %v1134 = vsub.f32 %v895, %v1044
        %v1135 = vsub.f32 %v899, %v1047
        %v1136 = vsub.f32 %v901, %v1047
        %v1137 = vsub.f32 %v903, %v1050
        %v1138 = vsub.f32 %v905, %v1050
        %v1139 = vsub.f32 %v909, %v1053
        %v1140 = vsub.f32 %v911, %v1053
        %v1141 = vsub.f32 %v913, %v1056
        %v1142 = vsub.f32 %v915, %v1056
        %v1143 = vsub.f32 %v919, %v1059
        %v1144 = vsub.f32 %v921, %v1059
        %v1145 = vsub.f32 %v923, %v1062
        %v1146 = vsub.f32 %v925, %v1062
        %v1147 = vsub.f32 %v929, %v1065
        %v1148 = vsub.f32 %v931, %v1065
        %v1149 = vsub.f32 %v933, %v1068
        %v1150 = vsub.f32 %v935, %v1068
        %v1151 = vsub.f32 %v939, %v1071
        %v1152 = vsub.f32 %v941, %v1071
        %v1153 = vsub.f32 %v943, %v1074
        %v1154 = vsub.f32 %v945, %v1074
        %v1155 = vsub.f32 %v949, %v1077
        %v1156 = vsub.f32 %v951, %v1077
        %v1157 = vsub.f32 %v953, %v1080
        %v1158 = vsub.f32 %v955, %v1080
        %v1159 = vsub.f32 %v959, %v1083
        %v1160 = vsub.f32 %v961, %v1083
        %v1161 = vsub.f32 %v963, %v1086
        %v1162 = vsub.f32 %v965, %v1086
        %v1163 = vsub.f32 %v969, %v1089
        %v1164 = vsub.f32 %v971, %v1089
        %v1165 = vsub.f32 %v973, %v1092
        %v1166 = vsub.f32 %v975, %v1092
        %v1167 = vsub.f32 %v979, %v1095
        %v1168 = vsub.f32 %v981, %v1095
        %v1169 = vsub.f32 %v983, %v1098
        %v1170 = vsub.f32 %v985, %v1098
        %v1171 = vsub.f32 %v989, %v1101
        %v1172 = vsub.f32 %v991, %v1101
        %v1173 = vsub.f32 %v993, %v1104
        %v1174 = vsub.f32 %v995, %v1104
        %v1175 = vsub.f32 %v999, %v1107
        %v1176 = vsub.f32 %v1001, %v1107
        %v1177 = vsub.f32 %v1003, %v1110
        %v1178 = vsub.f32 %v1005, %v1110
        %v1179 = vsub.f32 %v1009, %v1113
        %v1180 = vsub.f32 %v1011, %v1113
        %v1181 = vsub.f32 %v1013, %v1116
        %v1182 = vsub.f32 %v1015, %v1116
        %v1183 = vsub.f32 %v1019, %v1119
        %v1184 = vsub.f32 %v1021, %v1119
        %v1185 = vsub.f32 %v1023, %v1122
        %v1186 = vsub.f32 %v1025, %v1122
        %v1187 = vmul.f32 %v1123, 1.442695
        %v1188 = vpow.pop %v1187
        %v1189 = vmul.f32 %v1124, 1.442695
        %v1190 = vpow.pop %v1189
        %v1191 = vmul.f32 %v1125, 1.442695
        %v1192 = vpow.pop %v1191
        %v1193 = vmul.f32 %v1126, 1.442695
        %v1194 = vpow.pop %v1193
        %v1195 = vmul.f32 %v1127, 1.442695
        %v1196 = vpow.pop %v1195
        %v1197 = vmul.f32 %v1128, 1.442695
        %v1198 = vpow.pop %v1197
        %v1199 = vmul.f32 %v1129, 1.442695
        %v1200 = vpow.pop %v1199
        %v1201 = vmul.f32 %v1130, 1.442695
        %v1202 = vpow.pop %v1201
        %v1203 = vmul.f32 %v1131, 1.442695
        %v1204 = vpow.pop %v1203
        %v1205 = vmul.f32 %v1132, 1.442695
        %v1206 = vpow.pop %v1205
        %v1207 = vmul.f32 %v1133, 1.442695
        %v1208 = vpow.pop %v1207
        %v1209 = vmul.f32 %v1134, 1.442695
        %v1210 = vpow.pop %v1209
        %v1211 = vmul.f32 %v1135, 1.442695
        %v1212 = vpow.pop %v1211
        %v1213 = vmul.f32 %v1136, 1.442695
        %v1214 = vpow.pop %v1213
        %v1215 = vmul.f32 %v1137, 1.442695
        %v1216 = vpow.pop %v1215
        %v1217 = vmul.f32 %v1138, 1.442695
        %v1218 = vpow.pop %v1217
        %v1219 = vmul.f32 %v1139, 1.442695
        %v1220 = vpow.pop %v1219
        %v1221 = vmul.f32 %v1140, 1.442695
        %v1222 = vpow.pop %v1221
        %v1223 = vmul.f32 %v1141, 1.442695
        %v1224 = vpow.pop %v1223
        %v1225 = vmul.f32 %v1142, 1.442695
        %v1226 = vpow.pop %v1225
        %v1227 = vmul.f32 %v1143, 1.442695
        %v1228 = vpow.pop %v1227
        %v1229 = vmul.f32 %v1144, 1.442695
        %v1230 = vpow.pop %v1229
        %v1231 = vmul.f32 %v1145, 1.442695
        %v1232 = vpow.pop %v1231
        %v1233 = vmul.f32 %v1146, 1.442695
        %v1234 = vpow.pop %v1233
        %v1235 = vmul.f32 %v1147, 1.442695
        %v1236 = vpow.pop %v1235
        %v1237 = vmul.f32 %v1148, 1.442695
        %v1238 = vpow.pop %v1237
        %v1239 = vmul.f32 %v1149, 1.442695
        %v1240 = vpow.pop %v1239
        %v1241 = vmul.f32 %v1150, 1.442695
        %v1242 = vpow.pop %v1241
        %v1243 = vmul.f32 %v1151, 1.442695
        %v1244 = vpow.pop %v1243
        %v1245 = vmul.f32 %v1152, 1.442695
        %v1246 = vpow.pop %v1245
        %v1247 = vmul.f32 %v1153, 1.442695
        %v1248 = vpow.pop %v1247
        %v1249 = vmul.f32 %v1154, 1.442695
        %v1250 = vpow.pop %v1249
        %v1251 = vmul.f32 %v1155, 1.442695
        %v1252 = vpow.pop %v1251
        %v1253 = vmul.f32 %v1156, 1.442695
        %v1254 = vpow.pop %v1253
        %v1255 = vmul.f32 %v1157, 1.442695
        %v1256 = vpow.pop %v1255
        %v1257 = vmul.f32 %v1158, 1.442695
        %v1258 = vpow.pop %v1257
        %v1259 = vmul.f32 %v1159, 1.442695
        %v1260 = vpow.pop %v1259
        %v1261 = vmul.f32 %v1160, 1.442695
        %v1262 = vpow.pop %v1261
        %v1263 = vmul.f32 %v1161, 1.442695
        %v1264 = vpow.pop %v1263
        %v1265 = vmul.f32 %v1162, 1.442695
        %v1266 = vpow.pop %v1265
        %v1267 = vmul.f32 %v1163, 1.442695
        %v1268 = vpow.pop %v1267
        %v1269 = vmul.f32 %v1164, 1.442695
        %v1270 = vpow.pop %v1269
        %v1271 = vmul.f32 %v1165, 1.442695
        %v1272 = vpow.pop %v1271
        %v1273 = vmul.f32 %v1166, 1.442695
        %v1274 = vpow.pop %v1273
        %v1275 = vmul.f32 %v1167, 1.442695
        %v1276 = vpow.pop %v1275
        %v1277 = vmul.f32 %v1168, 1.442695
        %v1278 = vpow.pop %v1277
        %v1279 = vmul.f32 %v1169, 1.442695
        %v1280 = vpow.pop %v1279
        %v1281 = vmul.f32 %v1170, 1.442695
        %v1282 = vpow.pop %v1281
        %v1283 = vmul.f32 %v1171, 1.442695
        %v1284 = vpow.pop %v1283
        %v1285 = vmul.f32 %v1172, 1.442695
        %v1286 = vpow.pop %v1285
        %v1287 = vmul.f32 %v1173, 1.442695
        %v1288 = vpow.pop %v1287
        %v1289 = vmul.f32 %v1174, 1.442695
        %v1290 = vpow.pop %v1289
        %v1291 = vmul.f32 %v1175, 1.442695
        %v1292 = vpow.pop %v1291
        %v1293 = vmul.f32 %v1176, 1.442695
        %v1294 = vpow.pop %v1293
        %v1295 = vmul.f32 %v1177, 1.442695
        %v1296 = vpow.pop %v1295
        %v1297 = vmul.f32 %v1178, 1.442695
        %v1298 = vpow.pop %v1297
        %v1299 = vmul.f32 %v1179, 1.442695
        %v1300 = vpow.pop %v1299
        %v1301 = vmul.f32 %v1180, 1.442695
        %v1302 = vpow.pop %v1301
        %v1303 = vmul.f32 %v1181, 1.442695
        %v1304 = vpow.pop %v1303
        %v1305 = vmul.f32 %v1182, 1.442695
        %v1306 = vpow.pop %v1305
        %v1307 = vmul.f32 %v1183, 1.442695
        %v1308 = vpow.pop %v1307
        %v1309 = vmul.f32 %v1184, 1.442695
        %v1310 = vpow.pop %v1309
        %v1311 = vmul.f32 %v1185, 1.442695
        %v1312 = vpow.pop %v1311
        %v1313 = vmul.f32 %v1186, 1.442695
        %v1314 = vpow.pop %v1313
        %v1315 = vadd.f32 %v1188, %v1190
        %1316 = vadd.xlane.f32.xlu0 %v1315
        %v1317 = vpop.xlane.xlu0 %1316
        %v1318 = vadd.f32 %v1192, %v1194
        %1319 = vadd.xlane.f32.xlu0 %v1318
        %v1320 = vpop.xlane.xlu0 %1319
        %v1321 = vadd.f32 %v1196, %v1198
        %1322 = vadd.xlane.f32.xlu0 %v1321
        %v1323 = vpop.xlane.xlu0 %1322
        %v1324 = vadd.f32 %v1200, %v1202
        %1325 = vadd.xlane.f32.xlu0 %v1324
        %v1326 = vpop.xlane.xlu0 %1325
        %v1327 = vadd.f32 %v1204, %v1206
        %1328 = vadd.xlane.f32.xlu0 %v1327
        %v1329 = vpop.xlane.xlu0 %1328
        %v1330 = vadd.f32 %v1208, %v1210
        %1331 = vadd.xlane.f32.xlu0 %v1330
        %v1332 = vpop.xlane.xlu0 %1331
        %v1333 = vadd.f32 %v1212, %v1214
        %1334 = vadd.xlane.f32.xlu0 %v1333
        %v1335 = vpop.xlane.xlu0 %1334
        %v1336 = vadd.f32 %v1216, %v1218
        %1337 = vadd.xlane.f32.xlu0 %v1336
        %v1338 = vpop.xlane.xlu0 %1337
        %v1339 = vadd.f32 %v1220, %v1222
        %1340 = vadd.xlane.f32.xlu0 %v1339
        %v1341 = vpop.xlane.xlu0 %1340
        %v1342 = vadd.f32 %v1224, %v1226
        %1343 = vadd.xlane.f32.xlu0 %v1342
        %v1344 = vpop.xlane.xlu0 %1343
        %v1345 = vadd.f32 %v1228, %v1230
        %1346 = vadd.xlane.f32.xlu0 %v1345
        %v1347 = vpop.xlane.xlu0 %1346
        %v1348 = vadd.f32 %v1232, %v1234
        %1349 = vadd.xlane.f32.xlu0 %v1348
        %v1350 = vpop.xlane.xlu0 %1349
        %v1351 = vadd.f32 %v1236, %v1238
        %1352 = vadd.xlane.f32.xlu0 %v1351
        %v1353 = vpop.xlane.xlu0 %1352
        %v1354 = vadd.f32 %v1240, %v1242
        %1355 = vadd.xlane.f32.xlu0 %v1354
        %v1356 = vpop.xlane.xlu0 %1355
        %v1357 = vadd.f32 %v1244, %v1246
        %1358 = vadd.xlane.f32.xlu0 %v1357
        %v1359 = vpop.xlane.xlu0 %1358
        %v1360 = vadd.f32 %v1248, %v1250
        %1361 = vadd.xlane.f32.xlu0 %v1360
        %v1362 = vpop.xlane.xlu0 %1361
        %v1363 = vadd.f32 %v1252, %v1254
        %1364 = vadd.xlane.f32.xlu0 %v1363
        %v1365 = vpop.xlane.xlu0 %1364
        %v1366 = vadd.f32 %v1256, %v1258
        %1367 = vadd.xlane.f32.xlu0 %v1366
        %v1368 = vpop.xlane.xlu0 %1367
        %v1369 = vadd.f32 %v1260, %v1262
        %1370 = vadd.xlane.f32.xlu0 %v1369
        %v1371 = vpop.xlane.xlu0 %1370
        %v1372 = vadd.f32 %v1264, %v1266
        %1373 = vadd.xlane.f32.xlu0 %v1372
        %v1374 = vpop.xlane.xlu0 %1373
        %v1375 = vadd.f32 %v1268, %v1270
        %1376 = vadd.xlane.f32.xlu0 %v1375
        %v1377 = vpop.xlane.xlu0 %1376
        %v1378 = vadd.f32 %v1272, %v1274
        %1379 = vadd.xlane.f32.xlu0 %v1378
        %v1380 = vpop.xlane.xlu0 %1379
        %v1381 = vadd.f32 %v1276, %v1278
        %1382 = vadd.xlane.f32.xlu0 %v1381
        %v1383 = vpop.xlane.xlu0 %1382
        %v1384 = vadd.f32 %v1280, %v1282
        %1385 = vadd.xlane.f32.xlu0 %v1384
        %v1386 = vpop.xlane.xlu0 %1385
        %v1387 = vadd.f32 %v1284, %v1286
        %1388 = vadd.xlane.f32.xlu0 %v1387
        %v1389 = vpop.xlane.xlu0 %1388
        %v1390 = vadd.f32 %v1288, %v1290
        %1391 = vadd.xlane.f32.xlu0 %v1390
        %v1392 = vpop.xlane.xlu0 %1391
        %v1393 = vadd.f32 %v1292, %v1294
        %1394 = vadd.xlane.f32.xlu0 %v1393
        %v1395 = vpop.xlane.xlu0 %1394
        %v1396 = vadd.f32 %v1296, %v1298
        %1397 = vadd.xlane.f32.xlu0 %v1396
        %v1398 = vpop.xlane.xlu0 %1397
        %v1399 = vadd.f32 %v1300, %v1302
        %1400 = vadd.xlane.f32.xlu0 %v1399
        %v1401 = vpop.xlane.xlu0 %1400
        %v1402 = vadd.f32 %v1304, %v1306
        %1403 = vadd.xlane.f32.xlu0 %v1402
        %v1404 = vpop.xlane.xlu0 %1403
        %v1405 = vadd.f32 %v1308, %v1310
        %1406 = vadd.xlane.f32.xlu0 %v1405
        %v1407 = vpop.xlane.xlu0 %1406
        %v1408 = vadd.f32 %v1312, %v1314
        %1409 = vadd.xlane.f32.xlu0 %v1408
        %v1410 = vpop.xlane.xlu0 %1409
        %v1411 = vrcp.pop %v1317
        %v1412 = vrcp.pop %v1320
        %v1413 = vrcp.pop %v1323
        %v1414 = vrcp.pop %v1326
        %v1415 = vrcp.pop %v1329
        %v1416 = vrcp.pop %v1332
        %v1417 = vrcp.pop %v1335
        %v1418 = vrcp.pop %v1338
        %v1419 = vrcp.pop %v1341
        %v1420 = vrcp.pop %v1344
        %v1421 = vrcp.pop %v1347
        %v1422 = vrcp.pop %v1350
        %v1423 = vrcp.pop %v1353
        %v1424 = vrcp.pop %v1356
        %v1425 = vrcp.pop %v1359
        %v1426 = vrcp.pop %v1362
        %v1427 = vrcp.pop %v1365
        %v1428 = vrcp.pop %v1368
        %v1429 = vrcp.pop %v1371
        %v1430 = vrcp.pop %v1374
        %v1431 = vrcp.pop %v1377
        %v1432 = vrcp.pop %v1380
        %v1433 = vrcp.pop %v1383
        %v1434 = vrcp.pop %v1386
        %v1435 = vrcp.pop %v1389
        %v1436 = vrcp.pop %v1392
        %v1437 = vrcp.pop %v1395
        %v1438 = vrcp.pop %v1398
        %v1439 = vrcp.pop %v1401
        %v1440 = vrcp.pop %v1404
        %v1441 = vrcp.pop %v1407
        %v1442 = vrcp.pop %v1410
        %v1443 = vmul.f32 %v1188, %v1411
        %v1444 = vmul.f32 %v1190, %v1411
        %v1445 = vmul.f32 %v1192, %v1412
        %v1446 = vmul.f32 %v1194, %v1412
        %v1447 = vmul.f32 %v1196, %v1413
        %v1448 = vmul.f32 %v1198, %v1413
        %v1449 = vmul.f32 %v1200, %v1414
        %v1450 = vmul.f32 %v1202, %v1414
        %v1451 = vmul.f32 %v1204, %v1415
        %v1452 = vmul.f32 %v1206, %v1415
        %v1453 = vmul.f32 %v1208, %v1416
        %v1454 = vmul.f32 %v1210, %v1416
        %v1455 = vmul.f32 %v1212, %v1417
        %v1456 = vmul.f32 %v1214, %v1417
        %v1457 = vmul.f32 %v1216, %v1418
        %v1458 = vmul.f32 %v1218, %v1418
        %v1459 = vmul.f32 %v1220, %v1419
        %v1460 = vmul.f32 %v1222, %v1419
        %v1461 = vmul.f32 %v1224, %v1420
        %v1462 = vmul.f32 %v1226, %v1420
        %v1463 = vmul.f32 %v1228, %v1421
        %v1464 = vmul.f32 %v1230, %v1421
        %v1465 = vmul.f32 %v1232, %v1422
        %v1466 = vmul.f32 %v1234, %v1422
        %v1467 = vmul.f32 %v1236, %v1423
        %v1468 = vmul.f32 %v1238, %v1423
        %v1469 = vmul.f32 %v1240, %v1424
        %v1470 = vmul.f32 %v1242, %v1424
        %v1471 = vmul.f32 %v1244, %v1425
        %v1472 = vmul.f32 %v1246, %v1425
        %v1473 = vmul.f32 %v1248, %v1426
        %v1474 = vmul.f32 %v1250, %v1426
        %v1475 = vmul.f32 %v1252, %v1427
        %v1476 = vmul.f32 %v1254, %v1427
        %v1477 = vmul.f32 %v1256, %v1428
        %v1478 = vmul.f32 %v1258, %v1428
        %v1479 = vmul.f32 %v1260, %v1429
        %v1480 = vmul.f32 %v1262, %v1429
        %v1481 = vmul.f32 %v1264, %v1430
        %v1482 = vmul.f32 %v1266, %v1430
        %v1483 = vmul.f32 %v1268, %v1431
        %v1484 = vmul.f32 %v1270, %v1431
        %v1485 = vmul.f32 %v1272, %v1432
        %v1486 = vmul.f32 %v1274, %v1432
        %v1487 = vmul.f32 %v1276, %v1433
        %v1488 = vmul.f32 %v1278, %v1433
        %v1489 = vmul.f32 %v1280, %v1434
        %v1490 = vmul.f32 %v1282, %v1434
        %v1491 = vmul.f32 %v1284, %v1435
        %v1492 = vmul.f32 %v1286, %v1435
        %v1493 = vmul.f32 %v1288, %v1436
        %v1494 = vmul.f32 %v1290, %v1436
        %v1495 = vmul.f32 %v1292, %v1437
        %v1496 = vmul.f32 %v1294, %v1437
        %v1497 = vmul.f32 %v1296, %v1438
        %v1498 = vmul.f32 %v1298, %v1438
        %v1499 = vmul.f32 %v1300, %v1439
        %v1500 = vmul.f32 %v1302, %v1439
        %v1501 = vmul.f32 %v1304, %v1440
        %v1502 = vmul.f32 %v1306, %v1440
        %v1503 = vmul.f32 %v1308, %v1441
        %v1504 = vmul.f32 %v1310, %v1441
        %v1505 = vmul.f32 %v1312, %v1442
        %v1506 = vmul.f32 %v1314, %v1442
        %v1507 = vpack.c.bf16 %v671, %v667
        %v1508 = vpack.c.bf16 %v673, %v669
        %v1509 = vpack.c.bf16 %v681, %v677
        %v1510 = vpack.c.bf16 %v683, %v679
        %v1511 = vpack.c.bf16 %v1445, %v1443
        %v1512 = vpack.c.bf16 %v1446, %v1444
        %v1513 = vpack.c.bf16 %v1449, %v1447
        %v1514 = vpack.c.bf16 %v1450, %v1448
        %v1515 = vpack.c.bf16 %v1453, %v1451
        %v1516 = vpack.c.bf16 %v1454, %v1452
        %v1517 = vpack.c.bf16 %v1457, %v1455
        %v1518 = vpack.c.bf16 %v1458, %v1456
        %v1519 = vpack.c.bf16 %v1461, %v1459
        %v1520 = vpack.c.bf16 %v1462, %v1460
        %v1521 = vpack.c.bf16 %v1465, %v1463
        %v1522 = vpack.c.bf16 %v1466, %v1464
        %v1523 = vpack.c.bf16 %v1469, %v1467
        %v1524 = vpack.c.bf16 %v1470, %v1468
        %v1525 = vpack.c.bf16 %v1473, %v1471
        %v1526 = vpack.c.bf16 %v1474, %v1472
        %v1527 = vpack.c.bf16 %v1477, %v1475
        %v1528 = vpack.c.bf16 %v1478, %v1476
        %v1529 = vpack.c.bf16 %v1481, %v1479
        %v1530 = vpack.c.bf16 %v1482, %v1480
        %v1531 = vpack.c.bf16 %v1485, %v1483
        %v1532 = vpack.c.bf16 %v1486, %v1484
        %v1533 = vpack.c.bf16 %v1489, %v1487
        %v1534 = vpack.c.bf16 %v1490, %v1488
        %v1535 = vpack.c.bf16 %v1493, %v1491
        %v1536 = vpack.c.bf16 %v1494, %v1492
        %v1537 = vpack.c.bf16 %v1497, %v1495
        %v1538 = vpack.c.bf16 %v1498, %v1496
        %v1539 = vpack.c.bf16 %v1501, %v1499
        %v1540 = vpack.c.bf16 %v1502, %v1500
        %v1541 = vpack.c.bf16 %v1505, %v1503
        %v1542 = vpack.c.bf16 %v1506, %v1504
        %1543 = vmatprep.subr.bf16.mxu0 %v1512
        %1544 = vmatpush1.bf16.xpose.msra.mxu0 %v1511
        %1545 = vmatprep.subr.bf16.mxu0 %v1514
        %1546 = vmatpush1.bf16.xpose.msra.mxu0 %v1513
        %1547 = vmatprep.subr.bf16.mxu0 %v1516
        %1548 = vmatpush1.bf16.xpose.msra.mxu0 %v1515
        %1549 = vmatprep.subr.bf16.mxu0 %v1518
        %1550 = vmatpush1.bf16.xpose.msra.mxu0 %v1517
        %1551 = vmatprep.subr.bf16.mxu0 %v1520
        %1552 = vmatpush1.bf16.xpose.msra.mxu0 %v1519
        %1553 = vmatprep.subr.bf16.mxu0 %v1522
        %1554 = vmatpush1.bf16.xpose.msra.mxu0 %v1521
        %1555 = vmatprep.subr.bf16.mxu0 %v1524
        %1556 = vmatpush1.bf16.xpose.msra.mxu0 %v1523
        %1557 = vmatprep.subr.bf16.mxu0 %v1526
        %1558 = vmatpush1.bf16.xpose.msra.mxu0 %v1525
        %1559 = vmatprep.subr.bf16.mxu0 %v1528
        %1560 = vmatpush1.bf16.xpose.msra.mxu0 %v1527
        %1561 = vmatprep.subr.bf16.mxu0 %v1530
        %1562 = vmatpush1.bf16.xpose.msra.mxu0 %v1529
        %1563 = vmatprep.subr.bf16.mxu0 %v1532
        %1564 = vmatpush1.bf16.xpose.msra.mxu0 %v1531
        %1565 = vmatprep.subr.bf16.mxu0 %v1534
        %1566 = vmatpush1.bf16.xpose.msra.mxu0 %v1533
        %1567 = vmatprep.subr.bf16.mxu0 %v1536
        %1568 = vmatpush1.bf16.xpose.msra.mxu0 %v1535
        %1569 = vmatprep.subr.bf16.mxu0 %v1538
        %1570 = vmatpush1.bf16.xpose.msra.mxu0 %v1537
        %1571 = vmatprep.subr.bf16.mxu0 %v1540
        %1572 = vmatpush1.bf16.xpose.msra.mxu0 %v1539
        %1573 = vmatprep.subr.bf16.mxu0 %v1542
        %1574 = vmatpush1.bf16.xpose.msra.mxu0 %v1541
        %1575 = vmatprep.mubr.bf16.mxu0 %v1508
        %1576 = vmatmul.mubr.bf16.gmra.mrb[0].mxu0 %v1507
        %v1577 = vpop.f32.mrb[0].mxu0
        %v1578 = vadd.f32 0.0, %v1577
        %v1579 = vpop.f32.mrb[0].mxu0
        %v1580 = vadd.f32 0.0, %v1579
        %v1581 = vpop.f32.mrb[0].mxu0
        %v1582 = vadd.f32 0.0, %v1581
        %v1583 = vpop.f32.mrb[0].mxu0
        %v1584 = vadd.f32 0.0, %v1583
        %1585 = vmatprep.mubr.bf16.mxu0 %v1510
        %1586 = vmatmul.mubr.bf16.gmra.mrb[0].mxu0 %v1509
        %v1587 = vpop.f32.mrb[0].mxu0
        %v1588 = vadd.f32 0.0, %v1587
        %v1589 = vpop.f32.mrb[0].mxu0
        %v1590 = vadd.f32 0.0, %v1589
        %v1591 = vpop.f32.mrb[0].mxu0
        %v1592 = vadd.f32 0.0, %v1591
        %v1593 = vpop.f32.mrb[0].mxu0
        %v1594 = vadd.f32 0.0, %v1593
        %1595 = vdwg.mxu0
        %v1596 = vpack.c.bf16 %v531, %v527
        %v1597 = vpack.c.bf16 %v533, %v529
        %v1598 = vpack.c.bf16 %v541, %v537
        %v1599 = vpack.c.bf16 %v543, %v539
        %v1600 = vpack.c.bf16 %v611, %v607
        %v1601 = vpack.c.bf16 %v613, %v609
        %v1602 = vpack.c.bf16 %v621, %v617
        %v1603 = vpack.c.bf16 %v623, %v619
        %1604 = vxpose.xlu0.c.b16.start [1/8] %v1596, 128
        %1605 = vxpose.xlu0.c.b16.cont [2/8] %v1598, 128
        %1606 = vxpose.xlu0.c.b16.cont [3/8] 0, 128
        %1607 = vxpose.xlu0.c.b16.cont [4/8] 0, 128
        %1608 = vxpose.xlu0.c.b16.cont [5/8] 0, 128
        %1609 = vxpose.xlu0.c.b16.cont [6/8] 0, 128
        %1610 = vxpose.xlu0.c.b16.cont [7/8] 0, 128
        %1611 = vxpose.xlu0.c.b16.end [8/8] 0, 128
        %v1612 = vpop.trf.xlu0
        %v1613 = vpop.trf.xlu0
        %v1614 = vpop.trf.xlu0
        %v1615 = vpop.trf.xlu0
        %v1616 = vpop.trf.xlu0
        %v1617 = vpop.trf.xlu0
        %v1618 = vpop.trf.xlu0
        %v1619 = vpop.trf.xlu0
        %1620 = vxpose.xlu0.c.b16.start [1/8] %v1597, 128
        %1621 = vxpose.xlu0.c.b16.cont [2/8] %v1599, 128
        %1622 = vxpose.xlu0.c.b16.cont [3/8] 0, 128
        %1623 = vxpose.xlu0.c.b16.cont [4/8] 0, 128
        %1624 = vxpose.xlu0.c.b16.cont [5/8] 0, 128
        %1625 = vxpose.xlu0.c.b16.cont [6/8] 0, 128
        %1626 = vxpose.xlu0.c.b16.cont [7/8] 0, 128
        %1627 = vxpose.xlu0.c.b16.end [8/8] 0, 128
        %v1628 = vpop.trf.xlu0
        %v1629 = vpop.trf.xlu0
        %v1630 = vpop.trf.xlu0
        %v1631 = vpop.trf.xlu0
        %v1632 = vpop.trf.xlu0
        %v1633 = vpop.trf.xlu0
        %v1634 = vpop.trf.xlu0
        %v1635 = vpop.trf.xlu0
        %v1637 = vsel %vm785, %v1612, 0
        %v1640 = vsel %vm785, %v1613, 0
        %v1643 = vsel %vm785, %v1614, 0
        %v1646 = vsel %vm785, %v1615, 0
        %v1649 = vsel %vm785, %v1616, 0
        %v1652 = vsel %vm785, %v1617, 0
        %v1655 = vsel %vm785, %v1618, 0
        %v1658 = vsel %vm785, %v1619, 0
        %v1661 = vsel %vm785, %v1628, 0
        %v1664 = vsel %vm785, %v1629, 0
        %v1667 = vsel %vm785, %v1630, 0
        %v1670 = vsel %vm785, %v1631, 0
        %v1673 = vsel %vm785, %v1632, 0
        %v1676 = vsel %vm785, %v1633, 0
        %v1679 = vsel %vm785, %v1634, 0
        %v1682 = vsel %vm785, %v1635, 0
        %1684 = vmatprep.subr.bf16.mxu0 %v1601
        %1685 = vmatpush1.bf16.msra.mxu0 %v1600
        %1686 = vmatprep.subr.bf16.mxu0 %v1603
        %1687 = vmatpush1.bf16.msra.mxu0 %v1602
        %1688 = vmatprep.subr.bf16.mxu0 0
        %1689 = vmatpush1.bf16.msra.mxu0 0
        %1690 = vmatprep.subr.bf16.mxu0 0
        %1691 = vmatpush1.bf16.msra.mxu0 0
        %1692 = vmatprep.subr.bf16.mxu0 0
        %1693 = vmatpush1.bf16.msra.mxu0 0
        %1694 = vmatprep.subr.bf16.mxu0 0
        %1695 = vmatpush1.bf16.msra.mxu0 0
        %1696 = vmatprep.subr.bf16.mxu0 0
        %1697 = vmatpush1.bf16.msra.mxu0 0
        %1698 = vmatprep.subr.bf16.mxu0 0
        %1699 = vmatpush1.bf16.msra.mxu0 0
        %1700 = vmatprep.subr.bf16.mxu0 0
        %1701 = vmatpush1.bf16.msra.mxu0 0
        %1702 = vmatprep.subr.bf16.mxu0 0
        %1703 = vmatpush1.bf16.msra.mxu0 0
        %1704 = vmatprep.subr.bf16.mxu0 0
        %1705 = vmatpush1.bf16.msra.mxu0 0
        %1706 = vmatprep.subr.bf16.mxu0 0
        %1707 = vmatpush1.bf16.msra.mxu0 0
        %1708 = vmatprep.subr.bf16.mxu0 0
        %1709 = vmatpush1.bf16.msra.mxu0 0
        %1710 = vmatprep.subr.bf16.mxu0 0
        %1711 = vmatpush1.bf16.msra.mxu0 0
        %1712 = vmatprep.subr.bf16.mxu0 0
        %1713 = vmatpush1.bf16.msra.mxu0 0
        %1714 = vmatprep.subr.bf16.mxu0 0
        %1715 = vmatpush1.bf16.msra.mxu0 0
        %1716 = vmatprep.mubr.bf16.mxu0 0
        %1717 = vmatmul.mubr.bf16.gmra.mrb[0].mxu0 %v1637
        %v1718 = vpop.f32.mrb[0].mxu0
        %v1719 = vadd.f32 0.0, %v1718
        %v1720 = vpop.f32.mrb[0].mxu0
        %v1721 = vadd.f32 0.0, %v1720
        %v1722 = vpop.f32.mrb[0].mxu0
        %v1723 = vadd.f32 0.0, %v1722
        %v1724 = vpop.f32.mrb[0].mxu0
        %v1725 = vadd.f32 0.0, %v1724
        %1726 = vmatprep.mubr.bf16.mxu0 0
        %1727 = vmatmul.mubr.bf16.gmra.mrb[0].mxu0 %v1640
        %v1728 = vpop.f32.mrb[0].mxu0
        %v1729 = vadd.f32 0.0, %v1728
        %v1730 = vpop.f32.mrb[0].mxu0
        %v1731 = vadd.f32 0.0, %v1730
        %v1732 = vpop.f32.mrb[0].mxu0
        %v1733 = vadd.f32 0.0, %v1732
        %v1734 = vpop.f32.mrb[0].mxu0
        %v1735 = vadd.f32 0.0, %v1734
        %1736 = vmatprep.mubr.bf16.mxu0 0
        %1737 = vmatmul.mubr.bf16.gmra.mrb[0].mxu0 %v1643
        %v1738 = vpop.f32.mrb[0].mxu0
        %v1739 = vadd.f32 0.0, %v1738
        %v1740 = vpop.f32.mrb[0].mxu0
        %v1741 = vadd.f32 0.0, %v1740
        %v1742 = vpop.f32.mrb[0].mxu0
        %v1743 = vadd.f32 0.0, %v1742
        %v1744 = vpop.f32.mrb[0].mxu0
        %v1745 = vadd.f32 0.0, %v1744
        %1746 = vmatprep.mubr.bf16.mxu0 0
        %1747 = vmatmul.mubr.bf16.gmra.mrb[0].mxu0 %v1646
        %v1748 = vpop.f32.mrb[0].mxu0
        %v1749 = vadd.f32 0.0, %v1748
        %v1750 = vpop.f32.mrb[0].mxu0
        %v1751 = vadd.f32 0.0, %v1750
        %v1752 = vpop.f32.mrb[0].mxu0
        %v1753 = vadd.f32 0.0, %v1752
        %v1754 = vpop.f32.mrb[0].mxu0
        %v1755 = vadd.f32 0.0, %v1754
        %1756 = vmatprep.mubr.bf16.mxu0 0
        %1757 = vmatmul.mubr.bf16.gmra.mrb[0].mxu0 %v1649
        %v1758 = vpop.f32.mrb[0].mxu0
        %v1759 = vadd.f32 0.0, %v1758
        %v1760 = vpop.f32.mrb[0].mxu0
        %v1761 = vadd.f32 0.0, %v1760
        %v1762 = vpop.f32.mrb[0].mxu0
        %v1763 = vadd.f32 0.0, %v1762
        %v1764 = vpop.f32.mrb[0].mxu0
        %v1765 = vadd.f32 0.0, %v1764
        %1766 = vmatprep.mubr.bf16.mxu0 0
        %1767 = vmatmul.mubr.bf16.gmra.mrb[0].mxu0 %v1652
        %v1768 = vpop.f32.mrb[0].mxu0
        %v1769 = vadd.f32 0.0, %v1768
        %v1770 = vpop.f32.mrb[0].mxu0
        %v1771 = vadd.f32 0.0, %v1770
        %v1772 = vpop.f32.mrb[0].mxu0
        %v1773 = vadd.f32 0.0, %v1772
        %v1774 = vpop.f32.mrb[0].mxu0
        %v1775 = vadd.f32 0.0, %v1774
        %1776 = vmatprep.mubr.bf16.mxu0 0
        %1777 = vmatmul.mubr.bf16.gmra.mrb[0].mxu0 %v1655
        %v1778 = vpop.f32.mrb[0].mxu0
        %v1779 = vadd.f32 0.0, %v1778
        %v1780 = vpop.f32.mrb[0].mxu0
        %v1781 = vadd.f32 0.0, %v1780
        %v1782 = vpop.f32.mrb[0].mxu0
        %v1783 = vadd.f32 0.0, %v1782
        %v1784 = vpop.f32.mrb[0].mxu0
        %v1785 = vadd.f32 0.0, %v1784
        %1786 = vmatprep.mubr.bf16.mxu0 0
        %1787 = vmatmul.mubr.bf16.gmra.mrb[0].mxu0 %v1658
        %v1788 = vpop.f32.mrb[0].mxu0
        %v1789 = vadd.f32 0.0, %v1788
        %v1790 = vpop.f32.mrb[0].mxu0
        %v1791 = vadd.f32 0.0, %v1790
        %v1792 = vpop.f32.mrb[0].mxu0
        %v1793 = vadd.f32 0.0, %v1792
        %v1794 = vpop.f32.mrb[0].mxu0
        %v1795 = vadd.f32 0.0, %v1794
        %1796 = vmatprep.mubr.bf16.mxu0 0
        %1797 = vmatmul.mubr.bf16.gmra.mrb[0].mxu0 %v1661
        %v1798 = vpop.f32.mrb[0].mxu0
        %v1799 = vadd.f32 0.0, %v1798
        %v1800 = vpop.f32.mrb[0].mxu0
        %v1801 = vadd.f32 0.0, %v1800
        %v1802 = vpop.f32.mrb[0].mxu0
        %v1803 = vadd.f32 0.0, %v1802
        %v1804 = vpop.f32.mrb[0].mxu0
        %v1805 = vadd.f32 0.0, %v1804
        %1806 = vmatprep.mubr.bf16.mxu0 0
        %1807 = vmatmul.mubr.bf16.gmra.mrb[0].mxu0 %v1664
        %v1808 = vpop.f32.mrb[0].mxu0
        %v1809 = vadd.f32 0.0, %v1808
        %v1810 = vpop.f32.mrb[0].mxu0
        %v1811 = vadd.f32 0.0, %v1810
        %v1812 = vpop.f32.mrb[0].mxu0
        %v1813 = vadd.f32 0.0, %v1812
        %v1814 = vpop.f32.mrb[0].mxu0
        %v1815 = vadd.f32 0.0, %v1814
        %1816 = vmatprep.mubr.bf16.mxu0 0
        %1817 = vmatmul.mubr.bf16.gmra.mrb[0].mxu0 %v1667
        %v1818 = vpop.f32.mrb[0].mxu0
        %v1819 = vadd.f32 0.0, %v1818
        %v1820 = vpop.f32.mrb[0].mxu0
        %v1821 = vadd.f32 0.0, %v1820
        %v1822 = vpop.f32.mrb[0].mxu0
        %v1823 = vadd.f32 0.0, %v1822
        %v1824 = vpop.f32.mrb[0].mxu0
        %v1825 = vadd.f32 0.0, %v1824
        %1826 = vmatprep.mubr.bf16.mxu0 0
        %1827 = vmatmul.mubr.bf16.gmra.mrb[0].mxu0 %v1670
        %v1828 = vpop.f32.mrb[0].mxu0
        %v1829 = vadd.f32 0.0, %v1828
        %v1830 = vpop.f32.mrb[0].mxu0
        %v1831 = vadd.f32 0.0, %v1830
        %v1832 = vpop.f32.mrb[0].mxu0
        %v1833 = vadd.f32 0.0, %v1832
        %v1834 = vpop.f32.mrb[0].mxu0
        %v1835 = vadd.f32 0.0, %v1834
        %1836 = vmatprep.mubr.bf16.mxu0 0
        %1837 = vmatmul.mubr.bf16.gmra.mrb[0].mxu0 %v1673
        %v1838 = vpop.f32.mrb[0].mxu0
        %v1839 = vadd.f32 0.0, %v1838
        %v1840 = vpop.f32.mrb[0].mxu0
        %v1841 = vadd.f32 0.0, %v1840
        %v1842 = vpop.f32.mrb[0].mxu0
        %v1843 = vadd.f32 0.0, %v1842
        %v1844 = vpop.f32.mrb[0].mxu0
        %v1845 = vadd.f32 0.0, %v1844
        %1846 = vmatprep.mubr.bf16.mxu0 0
        %1847 = vmatmul.mubr.bf16.gmra.mrb[0].mxu0 %v1676
        %v1848 = vpop.f32.mrb[0].mxu0
        %v1849 = vadd.f32 0.0, %v1848
        %v1850 = vpop.f32.mrb[0].mxu0
        %v1851 = vadd.f32 0.0, %v1850
        %v1852 = vpop.f32.mrb[0].mxu0
        %v1853 = vadd.f32 0.0, %v1852
        %v1854 = vpop.f32.mrb[0].mxu0
        %v1855 = vadd.f32 0.0, %v1854
        %1856 = vmatprep.mubr.bf16.mxu0 0
        %1857 = vmatmul.mubr.bf16.gmra.mrb[0].mxu0 %v1679
        %v1858 = vpop.f32.mrb[0].mxu0
        %v1859 = vadd.f32 0.0, %v1858
        %v1860 = vpop.f32.mrb[0].mxu0
        %v1861 = vadd.f32 0.0, %v1860
        %v1862 = vpop.f32.mrb[0].mxu0
        %v1863 = vadd.f32 0.0, %v1862
        %v1864 = vpop.f32.mrb[0].mxu0
        %v1865 = vadd.f32 0.0, %v1864
        %1866 = vmatprep.mubr.bf16.mxu0 0
        %1867 = vmatmul.mubr.bf16.gmra.mrb[0].mxu0 %v1682
        %v1868 = vpop.f32.mrb[0].mxu0
        %v1869 = vadd.f32 0.0, %v1868
        %v1870 = vpop.f32.mrb[0].mxu0
        %v1871 = vadd.f32 0.0, %v1870
        %v1872 = vpop.f32.mrb[0].mxu0
        %v1873 = vadd.f32 0.0, %v1872
        %v1874 = vpop.f32.mrb[0].mxu0
        %v1875 = vadd.f32 0.0, %v1874
        %1876 = vdwg.mxu0
        %v1877 = vmax.f32 %v1719, %v1721
        %1878 = vmax.xlane.f32.xlu0 %v1877
        %v1879 = vpop.xlane.xlu0 %1878
        %v1880 = vmax.f32 %v1723, %v1725
        %1881 = vmax.xlane.f32.xlu0 %v1880
        %v1882 = vpop.xlane.xlu0 %1881
        %v1883 = vmax.f32 %v1729, %v1731
        %1884 = vmax.xlane.f32.xlu0 %v1883
        %v1885 = vpop.xlane.xlu0 %1884
        %v1886 = vmax.f32 %v1733, %v1735
        %1887 = vmax.xlane.f32.xlu0 %v1886
        %v1888 = vpop.xlane.xlu0 %1887
        %v1889 = vmax.f32 %v1739, %v1741
        %1890 = vmax.xlane.f32.xlu0 %v1889
        %v1891 = vpop.xlane.xlu0 %1890
        %v1892 = vmax.f32 %v1743, %v1745
        %1893 = vmax.xlane.f32.xlu0 %v1892
        %v1894 = vpop.xlane.xlu0 %1893
        %v1895 = vmax.f32 %v1749, %v1751
        %1896 = vmax.xlane.f32.xlu0 %v1895
        %v1897 = vpop.xlane.xlu0 %1896
        %v1898 = vmax.f32 %v1753, %v1755
        %1899 = vmax.xlane.f32.xlu0 %v1898
        %v1900 = vpop.xlane.xlu0 %1899
        %v1901 = vmax.f32 %v1759, %v1761
        %1902 = vmax.xlane.f32.xlu0 %v1901
        %v1903 = vpop.xlane.xlu0 %1902
        %v1904 = vmax.f32 %v1763, %v1765
        %1905 = vmax.xlane.f32.xlu0 %v1904
        %v1906 = vpop.xlane.xlu0 %1905
        %v1907 = vmax.f32 %v1769, %v1771
        %1908 = vmax.xlane.f32.xlu0 %v1907
        %v1909 = vpop.xlane.xlu0 %1908
        %v1910 = vmax.f32 %v1773, %v1775
        %1911 = vmax.xlane.f32.xlu0 %v1910
        %v1912 = vpop.xlane.xlu0 %1911
        %v1913 = vmax.f32 %v1779, %v1781
        %1914 = vmax.xlane.f32.xlu0 %v1913
        %v1915 = vpop.xlane.xlu0 %1914
        %v1916 = vmax.f32 %v1783, %v1785
        %1917 = vmax.xlane.f32.xlu0 %v1916
        %v1918 = vpop.xlane.xlu0 %1917
        %v1919 = vmax.f32 %v1789, %v1791
        %1920 = vmax.xlane.f32.xlu0 %v1919
        %v1921 = vpop.xlane.xlu0 %1920
        %v1922 = vmax.f32 %v1793, %v1795
        %1923 = vmax.xlane.f32.xlu0 %v1922
        %v1924 = vpop.xlane.xlu0 %1923
        %v1925 = vmax.f32 %v1799, %v1801
        %1926 = vmax.xlane.f32.xlu0 %v1925
        %v1927 = vpop.xlane.xlu0 %1926
        %v1928 = vmax.f32 %v1803, %v1805
        %1929 = vmax.xlane.f32.xlu0 %v1928
        %v1930 = vpop.xlane.xlu0 %1929
        %v1931 = vmax.f32 %v1809, %v1811
        %1932 = vmax.xlane.f32.xlu0 %v1931
        %v1933 = vpop.xlane.xlu0 %1932
        %v1934 = vmax.f32 %v1813, %v1815
        %1935 = vmax.xlane.f32.xlu0 %v1934
        %v1936 = vpop.xlane.xlu0 %1935
        %v1937 = vmax.f32 %v1819, %v1821
        %1938 = vmax.xlane.f32.xlu0 %v1937
        %v1939 = vpop.xlane.xlu0 %1938
        %v1940 = vmax.f32 %v1823, %v1825
        %1941 = vmax.xlane.f32.xlu0 %v1940
        %v1942 = vpop.xlane.xlu0 %1941
        %v1943 = vmax.f32 %v1829, %v1831
        %1944 = vmax.xlane.f32.xlu0 %v1943
        %v1945 = vpop.xlane.xlu0 %1944
        %v1946 = vmax.f32 %v1833, %v1835
        %1947 = vmax.xlane.f32.xlu0 %v1946
        %v1948 = vpop.xlane.xlu0 %1947
        %v1949 = vmax.f32 %v1839, %v1841
        %1950 = vmax.xlane.f32.xlu0 %v1949
        %v1951 = vpop.xlane.xlu0 %1950
        %v1952 = vmax.f32 %v1843, %v1845
        %1953 = vmax.xlane.f32.xlu0 %v1952
        %v1954 = vpop.xlane.xlu0 %1953
        %v1955 = vmax.f32 %v1849, %v1851
        %1956 = vmax.xlane.f32.xlu0 %v1955
        %v1957 = vpop.xlane.xlu0 %1956
        %v1958 = vmax.f32 %v1853, %v1855
        %1959 = vmax.xlane.f32.xlu0 %v1958
        %v1960 = vpop.xlane.xlu0 %1959
        %v1961 = vmax.f32 %v1859, %v1861
        %1962 = vmax.xlane.f32.xlu0 %v1961
        %v1963 = vpop.xlane.xlu0 %1962
        %v1964 = vmax.f32 %v1863, %v1865
        %1965 = vmax.xlane.f32.xlu0 %v1964
        %v1966 = vpop.xlane.xlu0 %1965
        %v1967 = vmax.f32 %v1869, %v1871
        %1968 = vmax.xlane.f32.xlu0 %v1967
        %v1969 = vpop.xlane.xlu0 %1968
        %v1970 = vmax.f32 %v1873, %v1875
        %1971 = vmax.xlane.f32.xlu0 %v1970
        %v1972 = vpop.xlane.xlu0 %1971
        %v1973 = vsub.f32 %v1719, %v1879
        %v1974 = vsub.f32 %v1721, %v1879
        %v1975 = vsub.f32 %v1723, %v1882
        %v1976 = vsub.f32 %v1725, %v1882
        %v1977 = vsub.f32 %v1729, %v1885
        %v1978 = vsub.f32 %v1731, %v1885
        %v1979 = vsub.f32 %v1733, %v1888
        %v1980 = vsub.f32 %v1735, %v1888
        %v1981 = vsub.f32 %v1739, %v1891
        %v1982 = vsub.f32 %v1741, %v1891
        %v1983 = vsub.f32 %v1743, %v1894
        %v1984 = vsub.f32 %v1745, %v1894
        %v1985 = vsub.f32 %v1749, %v1897
        %v1986 = vsub.f32 %v1751, %v1897
        %v1987 = vsub.f32 %v1753, %v1900
        %v1988 = vsub.f32 %v1755, %v1900
        %v1989 = vsub.f32 %v1759, %v1903
        %v1990 = vsub.f32 %v1761, %v1903
        %v1991 = vsub.f32 %v1763, %v1906
        %v1992 = vsub.f32 %v1765, %v1906
        %v1993 = vsub.f32 %v1769, %v1909
        %v1994 = vsub.f32 %v1771, %v1909
        %v1995 = vsub.f32 %v1773, %v1912
        %v1996 = vsub.f32 %v1775, %v1912
        %v1997 = vsub.f32 %v1779, %v1915
        %v1998 = vsub.f32 %v1781, %v1915
        %v1999 = vsub.f32 %v1783, %v1918
        %v2000 = vsub.f32 %v1785, %v1918
        %v2001 = vsub.f32 %v1789, %v1921
        %v2002 = vsub.f32 %v1791, %v1921
        %v2003 = vsub.f32 %v1793, %v1924
        %v2004 = vsub.f32 %v1795, %v1924
        %v2005 = vsub.f32 %v1799, %v1927
        %v2006 = vsub.f32 %v1801, %v1927
        %v2007 = vsub.f32 %v1803, %v1930
        %v2008 = vsub.f32 %v1805, %v1930
        %v2009 = vsub.f32 %v1809, %v1933
        %v2010 = vsub.f32 %v1811, %v1933
        %v2011 = vsub.f32 %v1813, %v1936
        %v2012 = vsub.f32 %v1815, %v1936
        %v2013 = vsub.f32 %v1819, %v1939
        %v2014 = vsub.f32 %v1821, %v1939
        %v2015 = vsub.f32 %v1823, %v1942
        %v2016 = vsub.f32 %v1825, %v1942
        %v2017 = vsub.f32 %v1829, %v1945
        %v2018 = vsub.f32 %v1831, %v1945
        %v2019 = vsub.f32 %v1833, %v1948
        %v2020 = vsub.f32 %v1835, %v1948
        %v2021 = vsub.f32 %v1839, %v1951
        %v2022 = vsub.f32 %v1841, %v1951
        %v2023 = vsub.f32 %v1843, %v1954
        %v2024 = vsub.f32 %v1845, %v1954
        %v2025 = vsub.f32 %v1849, %v1957
        %v2026 = vsub.f32 %v1851, %v1957
        %v2027 = vsub.f32 %v1853, %v1960
        %v2028 = vsub.f32 %v1855, %v1960
        %v2029 = vsub.f32 %v1859, %v1963
        %v2030 = vsub.f32 %v1861, %v1963
        %v2031 = vsub.f32 %v1863, %v1966
        %v2032 = vsub.f32 %v1865, %v1966
        %v2033 = vsub.f32 %v1869, %v1969
        %v2034 = vsub.f32 %v1871, %v1969
        %v2035 = vsub.f32 %v1873, %v1972
        %v2036 = vsub.f32 %v1875, %v1972
        %v2037 = vmul.f32 %v1973, 1.442695
        %v2038 = vpow.pop %v2037
        %v2039 = vmul.f32 %v1974, 1.442695
        %v2040 = vpow.pop %v2039
        %v2041 = vmul.f32 %v1975, 1.442695
        %v2042 = vpow.pop %v2041
        %v2043 = vmul.f32 %v1976, 1.442695
        %v2044 = vpow.pop %v2043
        %v2045 = vmul.f32 %v1977, 1.442695
        %v2046 = vpow.pop %v2045
        %v2047 = vmul.f32 %v1978, 1.442695
        %v2048 = vpow.pop %v2047
        %v2049 = vmul.f32 %v1979, 1.442695
        %v2050 = vpow.pop %v2049
        %v2051 = vmul.f32 %v1980, 1.442695
        %v2052 = vpow.pop %v2051
        %v2053 = vmul.f32 %v1981, 1.442695
        %v2054 = vpow.pop %v2053
        %v2055 = vmul.f32 %v1982, 1.442695
        %v2056 = vpow.pop %v2055
        %v2057 = vmul.f32 %v1983, 1.442695
        %v2058 = vpow.pop %v2057
        %v2059 = vmul.f32 %v1984, 1.442695
        %v2060 = vpow.pop %v2059
        %v2061 = vmul.f32 %v1985, 1.442695
        %v2062 = vpow.pop %v2061
        %v2063 = vmul.f32 %v1986, 1.442695
        %v2064 = vpow.pop %v2063
        %v2065 = vmul.f32 %v1987, 1.442695
        %v2066 = vpow.pop %v2065
        %v2067 = vmul.f32 %v1988, 1.442695
        %v2068 = vpow.pop %v2067
        %v2069 = vmul.f32 %v1989, 1.442695
        %v2070 = vpow.pop %v2069
        %v2071 = vmul.f32 %v1990, 1.442695
        %v2072 = vpow.pop %v2071
        %v2073 = vmul.f32 %v1991, 1.442695
        %v2074 = vpow.pop %v2073
        %v2075 = vmul.f32 %v1992, 1.442695
        %v2076 = vpow.pop %v2075
        %v2077 = vmul.f32 %v1993, 1.442695
        %v2078 = vpow.pop %v2077
        %v2079 = vmul.f32 %v1994, 1.442695
        %v2080 = vpow.pop %v2079
        %v2081 = vmul.f32 %v1995, 1.442695
        %v2082 = vpow.pop %v2081
        %v2083 = vmul.f32 %v1996, 1.442695
        %v2084 = vpow.pop %v2083
        %v2085 = vmul.f32 %v1997, 1.442695
        %v2086 = vpow.pop %v2085
        %v2087 = vmul.f32 %v1998, 1.442695
        %v2088 = vpow.pop %v2087
        %v2089 = vmul.f32 %v1999, 1.442695
        %v2090 = vpow.pop %v2089
        %v2091 = vmul.f32 %v2000, 1.442695
        %v2092 = vpow.pop %v2091
        %v2093 = vmul.f32 %v2001, 1.442695
        %v2094 = vpow.pop %v2093
        %v2095 = vmul.f32 %v2002, 1.442695
        %v2096 = vpow.pop %v2095
        %v2097 = vmul.f32 %v2003, 1.442695
        %v2098 = vpow.pop %v2097
        %v2099 = vmul.f32 %v2004, 1.442695
        %v2100 = vpow.pop %v2099
        %v2101 = vmul.f32 %v2005, 1.442695
        %v2102 = vpow.pop %v2101
        %v2103 = vmul.f32 %v2006, 1.442695
        %v2104 = vpow.pop %v2103
        %v2105 = vmul.f32 %v2007, 1.442695
        %v2106 = vpow.pop %v2105
        %v2107 = vmul.f32 %v2008, 1.442695
        %v2108 = vpow.pop %v2107
        %v2109 = vmul.f32 %v2009, 1.442695
        %v2110 = vpow.pop %v2109
        %v2111 = vmul.f32 %v2010, 1.442695
        %v2112 = vpow.pop %v2111
        %v2113 = vmul.f32 %v2011, 1.442695
        %v2114 = vpow.pop %v2113
        %v2115 = vmul.f32 %v2012, 1.442695
        %v2116 = vpow.pop %v2115
        %v2117 = vmul.f32 %v2013, 1.442695
        %v2118 = vpow.pop %v2117
        %v2119 = vmul.f32 %v2014, 1.442695
        %v2120 = vpow.pop %v2119
        %v2121 = vmul.f32 %v2015, 1.442695
        %v2122 = vpow.pop %v2121
        %v2123 = vmul.f32 %v2016, 1.442695
        %v2124 = vpow.pop %v2123
        %v2125 = vmul.f32 %v2017, 1.442695
        %v2126 = vpow.pop %v2125
        %v2127 = vmul.f32 %v2018, 1.442695
        %v2128 = vpow.pop %v2127
        %v2129 = vmul.f32 %v2019, 1.442695
        %v2130 = vpow.pop %v2129
        %v2131 = vmul.f32 %v2020, 1.442695
        %v2132 = vpow.pop %v2131
        %v2133 = vmul.f32 %v2021, 1.442695
        %v2134 = vpow.pop %v2133
        %v2135 = vmul.f32 %v2022, 1.442695
        %v2136 = vpow.pop %v2135
        %v2137 = vmul.f32 %v2023, 1.442695
        %v2138 = vpow.pop %v2137
        %v2139 = vmul.f32 %v2024, 1.442695
        %v2140 = vpow.pop %v2139
        %v2141 = vmul.f32 %v2025, 1.442695
        %v2142 = vpow.pop %v2141
        %v2143 = vmul.f32 %v2026, 1.442695
        %v2144 = vpow.pop %v2143
        %v2145 = vmul.f32 %v2027, 1.442695
        %v2146 = vpow.pop %v2145
        %v2147 = vmul.f32 %v2028, 1.442695
        %v2148 = vpow.pop %v2147
        %v2149 = vmul.f32 %v2029, 1.442695
        %v2150 = vpow.pop %v2149
        %v2151 = vmul.f32 %v2030, 1.442695
        %v2152 = vpow.pop %v2151
        %v2153 = vmul.f32 %v2031, 1.442695
        %v2154 = vpow.pop %v2153
        %v2155 = vmul.f32 %v2032, 1.442695
        %v2156 = vpow.pop %v2155
        %v2157 = vmul.f32 %v2033, 1.442695
        %v2158 = vpow.pop %v2157
        %v2159 = vmul.f32 %v2034, 1.442695
        %v2160 = vpow.pop %v2159
        %v2161 = vmul.f32 %v2035, 1.442695
        %v2162 = vpow.pop %v2161
        %v2163 = vmul.f32 %v2036, 1.442695
        %v2164 = vpow.pop %v2163
        %v2165 = vadd.f32 %v2038, %v2040
        %2166 = vadd.xlane.f32.xlu0 %v2165
        %v2167 = vpop.xlane.xlu0 %2166
        %v2168 = vadd.f32 %v2042, %v2044
        %2169 = vadd.xlane.f32.xlu0 %v2168
        %v2170 = vpop.xlane.xlu0 %2169
        %v2171 = vadd.f32 %v2046, %v2048
        %2172 = vadd.xlane.f32.xlu0 %v2171
        %v2173 = vpop.xlane.xlu0 %2172
        %v2174 = vadd.f32 %v2050, %v2052
        %2175 = vadd.xlane.f32.xlu0 %v2174
        %v2176 = vpop.xlane.xlu0 %2175
        %v2177 = vadd.f32 %v2054, %v2056
        %2178 = vadd.xlane.f32.xlu0 %v2177
        %v2179 = vpop.xlane.xlu0 %2178
        %v2180 = vadd.f32 %v2058, %v2060
        %2181 = vadd.xlane.f32.xlu0 %v2180
        %v2182 = vpop.xlane.xlu0 %2181
        %v2183 = vadd.f32 %v2062, %v2064
        %2184 = vadd.xlane.f32.xlu0 %v2183
        %v2185 = vpop.xlane.xlu0 %2184
        %v2186 = vadd.f32 %v2066, %v2068
        %2187 = vadd.xlane.f32.xlu0 %v2186
        %v2188 = vpop.xlane.xlu0 %2187
        %v2189 = vadd.f32 %v2070, %v2072
        %2190 = vadd.xlane.f32.xlu0 %v2189
        %v2191 = vpop.xlane.xlu0 %2190
        %v2192 = vadd.f32 %v2074, %v2076
        %2193 = vadd.xlane.f32.xlu0 %v2192
        %v2194 = vpop.xlane.xlu0 %2193
        %v2195 = vadd.f32 %v2078, %v2080
        %2196 = vadd.xlane.f32.xlu0 %v2195
        %v2197 = vpop.xlane.xlu0 %2196
        %v2198 = vadd.f32 %v2082, %v2084
        %2199 = vadd.xlane.f32.xlu0 %v2198
        %v2200 = vpop.xlane.xlu0 %2199
        %v2201 = vadd.f32 %v2086, %v2088
        %2202 = vadd.xlane.f32.xlu0 %v2201
        %v2203 = vpop.xlane.xlu0 %2202
        %v2204 = vadd.f32 %v2090, %v2092
        %2205 = vadd.xlane.f32.xlu0 %v2204
        %v2206 = vpop.xlane.xlu0 %2205
        %v2207 = vadd.f32 %v2094, %v2096
        %2208 = vadd.xlane.f32.xlu0 %v2207
        %v2209 = vpop.xlane.xlu0 %2208
        %v2210 = vadd.f32 %v2098, %v2100
        %2211 = vadd.xlane.f32.xlu0 %v2210
        %v2212 = vpop.xlane.xlu0 %2211
        %v2213 = vadd.f32 %v2102, %v2104
        %2214 = vadd.xlane.f32.xlu0 %v2213
        %v2215 = vpop.xlane.xlu0 %2214
        %v2216 = vadd.f32 %v2106, %v2108
        %2217 = vadd.xlane.f32.xlu0 %v2216
        %v2218 = vpop.xlane.xlu0 %2217
        %v2219 = vadd.f32 %v2110, %v2112
        %2220 = vadd.xlane.f32.xlu0 %v2219
        %v2221 = vpop.xlane.xlu0 %2220
        %v2222 = vadd.f32 %v2114, %v2116
        %2223 = vadd.xlane.f32.xlu0 %v2222
        %v2224 = vpop.xlane.xlu0 %2223
        %v2225 = vadd.f32 %v2118, %v2120
        %2226 = vadd.xlane.f32.xlu0 %v2225
        %v2227 = vpop.xlane.xlu0 %2226
        %v2228 = vadd.f32 %v2122, %v2124
        %2229 = vadd.xlane.f32.xlu0 %v2228
        %v2230 = vpop.xlane.xlu0 %2229
        %v2231 = vadd.f32 %v2126, %v2128
        %2232 = vadd.xlane.f32.xlu0 %v2231
        %v2233 = vpop.xlane.xlu0 %2232
        %v2234 = vadd.f32 %v2130, %v2132
        %2235 = vadd.xlane.f32.xlu0 %v2234
        %v2236 = vpop.xlane.xlu0 %2235
        %v2237 = vadd.f32 %v2134, %v2136
        %2238 = vadd.xlane.f32.xlu0 %v2237
        %v2239 = vpop.xlane.xlu0 %2238
        %v2240 = vadd.f32 %v2138, %v2140
        %2241 = vadd.xlane.f32.xlu0 %v2240
        %v2242 = vpop.xlane.xlu0 %2241
        %v2243 = vadd.f32 %v2142, %v2144
        %2244 = vadd.xlane.f32.xlu0 %v2243
        %v2245 = vpop.xlane.xlu0 %2244
        %v2246 = vadd.f32 %v2146, %v2148
        %2247 = vadd.xlane.f32.xlu0 %v2246
        %v2248 = vpop.xlane.xlu0 %2247
        %v2249 = vadd.f32 %v2150, %v2152
        %2250 = vadd.xlane.f32.xlu0 %v2249
        %v2251 = vpop.xlane.xlu0 %2250
        %v2252 = vadd.f32 %v2154, %v2156
        %2253 = vadd.xlane.f32.xlu0 %v2252
        %v2254 = vpop.xlane.xlu0 %2253
        %v2255 = vadd.f32 %v2158, %v2160
        %2256 = vadd.xlane.f32.xlu0 %v2255
        %v2257 = vpop.xlane.xlu0 %2256
        %v2258 = vadd.f32 %v2162, %v2164
        %2259 = vadd.xlane.f32.xlu0 %v2258
        %v2260 = vpop.xlane.xlu0 %2259
        %v2261 = vrcp.pop %v2167
        %v2262 = vrcp.pop %v2170
        %v2263 = vrcp.pop %v2173
        %v2264 = vrcp.pop %v2176
        %v2265 = vrcp.pop %v2179
        %v2266 = vrcp.pop %v2182
        %v2267 = vrcp.pop %v2185
        %v2268 = vrcp.pop %v2188
        %v2269 = vrcp.pop %v2191
        %v2270 = vrcp.pop %v2194
        %v2271 = vrcp.pop %v2197
        %v2272 = vrcp.pop %v2200
        %v2273 = vrcp.pop %v2203
        %v2274 = vrcp.pop %v2206
        %v2275 = vrcp.pop %v2209
        %v2276 = vrcp.pop %v2212
        %v2277 = vrcp.pop %v2215
        %v2278 = vrcp.pop %v2218
        %v2279 = vrcp.pop %v2221
        %v2280 = vrcp.pop %v2224
        %v2281 = vrcp.pop %v2227
        %v2282 = vrcp.pop %v2230
        %v2283 = vrcp.pop %v2233
        %v2284 = vrcp.pop %v2236
        %v2285 = vrcp.pop %v2239
        %v2286 = vrcp.pop %v2242
        %v2287 = vrcp.pop %v2245
        %v2288 = vrcp.pop %v2248
        %v2289 = vrcp.pop %v2251
        %v2290 = vrcp.pop %v2254
        %v2291 = vrcp.pop %v2257
        %v2292 = vrcp.pop %v2260
        %v2293 = vmul.f32 %v2038, %v2261
        %v2294 = vmul.f32 %v2040, %v2261
        %v2295 = vmul.f32 %v2042, %v2262
        %v2296 = vmul.f32 %v2044, %v2262
        %v2297 = vmul.f32 %v2046, %v2263
        %v2298 = vmul.f32 %v2048, %v2263
        %v2299 = vmul.f32 %v2050, %v2264
        %v2300 = vmul.f32 %v2052, %v2264
        %v2301 = vmul.f32 %v2054, %v2265
        %v2302 = vmul.f32 %v2056, %v2265
        %v2303 = vmul.f32 %v2058, %v2266
        %v2304 = vmul.f32 %v2060, %v2266
        %v2305 = vmul.f32 %v2062, %v2267
        %v2306 = vmul.f32 %v2064, %v2267
        %v2307 = vmul.f32 %v2066, %v2268
        %v2308 = vmul.f32 %v2068, %v2268
        %v2309 = vmul.f32 %v2070, %v2269
        %v2310 = vmul.f32 %v2072, %v2269
        %v2311 = vmul.f32 %v2074, %v2270
        %v2312 = vmul.f32 %v2076, %v2270
        %v2313 = vmul.f32 %v2078, %v2271
        %v2314 = vmul.f32 %v2080, %v2271
        %v2315 = vmul.f32 %v2082, %v2272
        %v2316 = vmul.f32 %v2084, %v2272
        %v2317 = vmul.f32 %v2086, %v2273
        %v2318 = vmul.f32 %v2088, %v2273
        %v2319 = vmul.f32 %v2090, %v2274
        %v2320 = vmul.f32 %v2092, %v2274
        %v2321 = vmul.f32 %v2094, %v2275
        %v2322 = vmul.f32 %v2096, %v2275
        %v2323 = vmul.f32 %v2098, %v2276
        %v2324 = vmul.f32 %v2100, %v2276
        %v2325 = vmul.f32 %v2102, %v2277
        %v2326 = vmul.f32 %v2104, %v2277
        %v2327 = vmul.f32 %v2106, %v2278
        %v2328 = vmul.f32 %v2108, %v2278
        %v2329 = vmul.f32 %v2110, %v2279
        %v2330 = vmul.f32 %v2112, %v2279
        %v2331 = vmul.f32 %v2114, %v2280
        %v2332 = vmul.f32 %v2116, %v2280
        %v2333 = vmul.f32 %v2118, %v2281
        %v2334 = vmul.f32 %v2120, %v2281
        %v2335 = vmul.f32 %v2122, %v2282
        %v2336 = vmul.f32 %v2124, %v2282
        %v2337 = vmul.f32 %v2126, %v2283
        %v2338 = vmul.f32 %v2128, %v2283
        %v2339 = vmul.f32 %v2130, %v2284
        %v2340 = vmul.f32 %v2132, %v2284
        %v2341 = vmul.f32 %v2134, %v2285
        %v2342 = vmul.f32 %v2136, %v2285
        %v2343 = vmul.f32 %v2138, %v2286
        %v2344 = vmul.f32 %v2140, %v2286
        %v2345 = vmul.f32 %v2142, %v2287
        %v2346 = vmul.f32 %v2144, %v2287
        %v2347 = vmul.f32 %v2146, %v2288
        %v2348 = vmul.f32 %v2148, %v2288
        %v2349 = vmul.f32 %v2150, %v2289
        %v2350 = vmul.f32 %v2152, %v2289
        %v2351 = vmul.f32 %v2154, %v2290
        %v2352 = vmul.f32 %v2156, %v2290
        %v2353 = vmul.f32 %v2158, %v2291
        %v2354 = vmul.f32 %v2160, %v2291
        %v2355 = vmul.f32 %v2162, %v2292
        %v2356 = vmul.f32 %v2164, %v2292
        %v2357 = vpack.c.bf16 %v691, %v687
        %v2358 = vpack.c.bf16 %v693, %v689
        %v2359 = vpack.c.bf16 %v701, %v697
        %v2360 = vpack.c.bf16 %v703, %v699
        %v2361 = vpack.c.bf16 %v2295, %v2293
        %v2362 = vpack.c.bf16 %v2296, %v2294
        %v2363 = vpack.c.bf16 %v2299, %v2297
        %v2364 = vpack.c.bf16 %v2300, %v2298
        %v2365 = vpack.c.bf16 %v2303, %v2301
        %v2366 = vpack.c.bf16 %v2304, %v2302
        %v2367 = vpack.c.bf16 %v2307, %v2305
        %v2368 = vpack.c.bf16 %v2308, %v2306
        %v2369 = vpack.c.bf16 %v2311, %v2309
        %v2370 = vpack.c.bf16 %v2312, %v2310
        %v2371 = vpack.c.bf16 %v2315, %v2313
        %v2372 = vpack.c.bf16 %v2316, %v2314
        %v2373 = vpack.c.bf16 %v2319, %v2317
        %v2374 = vpack.c.bf16 %v2320, %v2318
        %v2375 = vpack.c.bf16 %v2323, %v2321
        %v2376 = vpack.c.bf16 %v2324, %v2322
        %v2377 = vpack.c.bf16 %v2327, %v2325
        %v2378 = vpack.c.bf16 %v2328, %v2326
        %v2379 = vpack.c.bf16 %v2331, %v2329
        %v2380 = vpack.c.bf16 %v2332, %v2330
        %v2381 = vpack.c.bf16 %v2335, %v2333
        %v2382 = vpack.c.bf16 %v2336, %v2334
        %v2383 = vpack.c.bf16 %v2339, %v2337
        %v2384 = vpack.c.bf16 %v2340, %v2338
        %v2385 = vpack.c.bf16 %v2343, %v2341
        %v2386 = vpack.c.bf16 %v2344, %v2342
        %v2387 = vpack.c.bf16 %v2347, %v2345
        %v2388 = vpack.c.bf16 %v2348, %v2346
        %v2389 = vpack.c.bf16 %v2351, %v2349
        %v2390 = vpack.c.bf16 %v2352, %v2350
        %v2391 = vpack.c.bf16 %v2355, %v2353
        %v2392 = vpack.c.bf16 %v2356, %v2354
        %2393 = vmatprep.subr.bf16.mxu0 %v2362
        %2394 = vmatpush1.bf16.xpose.msra.mxu0 %v2361
        %2395 = vmatprep.subr.bf16.mxu0 %v2364
        %2396 = vmatpush1.bf16.xpose.msra.mxu0 %v2363
        %2397 = vmatprep.subr.bf16.mxu0 %v2366
        %2398 = vmatpush1.bf16.xpose.msra.mxu0 %v2365
        %2399 = vmatprep.subr.bf16.mxu0 %v2368
        %2400 = vmatpush1.bf16.xpose.msra.mxu0 %v2367
        %2401 = vmatprep.subr.bf16.mxu0 %v2370
        %2402 = vmatpush1.bf16.xpose.msra.mxu0 %v2369
        %2403 = vmatprep.subr.bf16.mxu0 %v2372
        %2404 = vmatpush1.bf16.xpose.msra.mxu0 %v2371
        %2405 = vmatprep.subr.bf16.mxu0 %v2374
        %2406 = vmatpush1.bf16.xpose.msra.mxu0 %v2373
        %2407 = vmatprep.subr.bf16.mxu0 %v2376
        %2408 = vmatpush1.bf16.xpose.msra.mxu0 %v2375
        %2409 = vmatprep.subr.bf16.mxu0 %v2378
        %2410 = vmatpush1.bf16.xpose.msra.mxu0 %v2377
        %2411 = vmatprep.subr.bf16.mxu0 %v2380
        %2412 = vmatpush1.bf16.xpose.msra.mxu0 %v2379
        %2413 = vmatprep.subr.bf16.mxu0 %v2382
        %2414 = vmatpush1.bf16.xpose.msra.mxu0 %v2381
        %2415 = vmatprep.subr.bf16.mxu0 %v2384
        %2416 = vmatpush1.bf16.xpose.msra.mxu0 %v2383
        %2417 = vmatprep.subr.bf16.mxu0 %v2386
        %2418 = vmatpush1.bf16.xpose.msra.mxu0 %v2385
        %2419 = vmatprep.subr.bf16.mxu0 %v2388
        %2420 = vmatpush1.bf16.xpose.msra.mxu0 %v2387
        %2421 = vmatprep.subr.bf16.mxu0 %v2390
        %2422 = vmatpush1.bf16.xpose.msra.mxu0 %v2389
        %2423 = vmatprep.subr.bf16.mxu0 %v2392
        %2424 = vmatpush1.bf16.xpose.msra.mxu0 %v2391
        %2425 = vmatprep.mubr.bf16.mxu0 %v2358
        %2426 = vmatmul.mubr.bf16.gmra.mrb[0].mxu0 %v2357
        %v2427 = vpop.f32.mrb[0].mxu0
        %v2428 = vadd.f32 0.0, %v2427
        %v2429 = vpop.f32.mrb[0].mxu0
        %v2430 = vadd.f32 0.0, %v2429
        %v2431 = vpop.f32.mrb[0].mxu0
        %v2432 = vadd.f32 0.0, %v2431
        %v2433 = vpop.f32.mrb[0].mxu0
        %v2434 = vadd.f32 0.0, %v2433
        %2435 = vmatprep.mubr.bf16.mxu0 %v2360
        %2436 = vmatmul.mubr.bf16.gmra.mrb[0].mxu0 %v2359
        %v2437 = vpop.f32.mrb[0].mxu0
        %v2438 = vadd.f32 0.0, %v2437
        %v2439 = vpop.f32.mrb[0].mxu0
        %v2440 = vadd.f32 0.0, %v2439
        %v2441 = vpop.f32.mrb[0].mxu0
        %v2442 = vadd.f32 0.0, %v2441
        %v2443 = vpop.f32.mrb[0].mxu0
        %v2444 = vadd.f32 0.0, %v2443
        %2445 = vdwg.mxu0
        %v2446 = vpack.c.bf16 %v551, %v547
        %v2447 = vpack.c.bf16 %v553, %v549
        %v2448 = vpack.c.bf16 %v561, %v557
        %v2449 = vpack.c.bf16 %v563, %v559
        %v2450 = vpack.c.bf16 %v631, %v627
        %v2451 = vpack.c.bf16 %v633, %v629
        %v2452 = vpack.c.bf16 %v641, %v637
        %v2453 = vpack.c.bf16 %v643, %v639
        %2454 = vxpose.xlu0.c.b16.start [1/8] %v2446, 128
        %2455 = vxpose.xlu0.c.b16.cont [2/8] %v2448, 128
        %2456 = vxpose.xlu0.c.b16.cont [3/8] 0, 128
        %2457 = vxpose.xlu0.c.b16.cont [4/8] 0, 128
        %2458 = vxpose.xlu0.c.b16.cont [5/8] 0, 128
        %2459 = vxpose.xlu0.c.b16.cont [6/8] 0, 128
        %2460 = vxpose.xlu0.c.b16.cont [7/8] 0, 128
        %2461 = vxpose.xlu0.c.b16.end [8/8] 0, 128
        %v2462 = vpop.trf.xlu0
        %v2463 = vpop.trf.xlu0
        %v2464 = vpop.trf.xlu0
        %v2465 = vpop.trf.xlu0
        %v2466 = vpop.trf.xlu0
        %v2467 = vpop.trf.xlu0
        %v2468 = vpop.trf.xlu0
        %v2469 = vpop.trf.xlu0
        %2470 = vxpose.xlu0.c.b16.start [1/8] %v2447, 128
        %2471 = vxpose.xlu0.c.b16.cont [2/8] %v2449, 128
        %2472 = vxpose.xlu0.c.b16.cont [3/8] 0, 128
        %2473 = vxpose.xlu0.c.b16.cont [4/8] 0, 128
        %2474 = vxpose.xlu0.c.b16.cont [5/8] 0, 128
        %2475 = vxpose.xlu0.c.b16.cont [6/8] 0, 128
        %2476 = vxpose.xlu0.c.b16.cont [7/8] 0, 128
        %2477 = vxpose.xlu0.c.b16.end [8/8] 0, 128
        %v2478 = vpop.trf.xlu0
        %v2479 = vpop.trf.xlu0
        %v2480 = vpop.trf.xlu0
        %v2481 = vpop.trf.xlu0
        %v2482 = vpop.trf.xlu0
        %v2483 = vpop.trf.xlu0
        %v2484 = vpop.trf.xlu0
        %v2485 = vpop.trf.xlu0
        %v2487 = vsel %vm785, %v2462, 0
        %v2490 = vsel %vm785, %v2463, 0
        %v2493 = vsel %vm785, %v2464, 0
        %v2496 = vsel %vm785, %v2465, 0
        %v2499 = vsel %vm785, %v2466, 0
        %v2502 = vsel %vm785, %v2467, 0
        %v2505 = vsel %vm785, %v2468, 0
        %v2508 = vsel %vm785, %v2469, 0
        %v2511 = vsel %vm785, %v2478, 0
        %v2514 = vsel %vm785, %v2479, 0
        %v2517 = vsel %vm785, %v2480, 0
        %v2520 = vsel %vm785, %v2481, 0
        %v2523 = vsel %vm785, %v2482, 0
        %v2526 = vsel %vm785, %v2483, 0
        %v2529 = vsel %vm785, %v2484, 0
        %v2532 = vsel %vm785, %v2485, 0
        %2534 = vmatprep.subr.bf16.mxu0 %v2451
        %2535 = vmatpush1.bf16.msra.mxu0 %v2450
        %2536 = vmatprep.subr.bf16.mxu0 %v2453
        %2537 = vmatpush1.bf16.msra.mxu0 %v2452
        %2538 = vmatprep.subr.bf16.mxu0 0
        %2539 = vmatpush1.bf16.msra.mxu0 0
        %2540 = vmatprep.subr.bf16.mxu0 0
        %2541 = vmatpush1.bf16.msra.mxu0 0
        %2542 = vmatprep.subr.bf16.mxu0 0
        %2543 = vmatpush1.bf16.msra.mxu0 0
        %2544 = vmatprep.subr.bf16.mxu0 0
        %2545 = vmatpush1.bf16.msra.mxu0 0
        %2546 = vmatprep.subr.bf16.mxu0 0
        %2547 = vmatpush1.bf16.msra.mxu0 0
        %2548 = vmatprep.subr.bf16.mxu0 0
        %2549 = vmatpush1.bf16.msra.mxu0 0
        %2550 = vmatprep.subr.bf16.mxu0 0
        %2551 = vmatpush1.bf16.msra.mxu0 0
        %2552 = vmatprep.subr.bf16.mxu0 0
        %2553 = vmatpush1.bf16.msra.mxu0 0
        %2554 = vmatprep.subr.bf16.mxu0 0
        %2555 = vmatpush1.bf16.msra.mxu0 0
        %2556 = vmatprep.subr.bf16.mxu0 0
        %2557 = vmatpush1.bf16.msra.mxu0 0
        %2558 = vmatprep.subr.bf16.mxu0 0
        %2559 = vmatpush1.bf16.msra.mxu0 0
        %2560 = vmatprep.subr.bf16.mxu0 0
        %2561 = vmatpush1.bf16.msra.mxu0 0
        %2562 = vmatprep.subr.bf16.mxu0 0
        %2563 = vmatpush1.bf16.msra.mxu0 0
        %2564 = vmatprep.subr.bf16.mxu0 0
        %2565 = vmatpush1.bf16.msra.mxu0 0
        %2566 = vmatprep.mubr.bf16.mxu0 0
        %2567 = vmatmul.mubr.bf16.gmra.mrb[0].mxu0 %v2487
        %v2568 = vpop.f32.mrb[0].mxu0
        %v2569 = vadd.f32 0.0, %v2568
        %v2570 = vpop.f32.mrb[0].mxu0
        %v2571 = vadd.f32 0.0, %v2570
        %v2572 = vpop.f32.mrb[0].mxu0
        %v2573 = vadd.f32 0.0, %v2572
        %v2574 = vpop.f32.mrb[0].mxu0
        %v2575 = vadd.f32 0.0, %v2574
        %2576 = vmatprep.mubr.bf16.mxu0 0
        %2577 = vmatmul.mubr.bf16.gmra.mrb[0].mxu0 %v2490
        %v2578 = vpop.f32.mrb[0].mxu0
        %v2579 = vadd.f32 0.0, %v2578
        %v2580 = vpop.f32.mrb[0].mxu0
        %v2581 = vadd.f32 0.0, %v2580
        %v2582 = vpop.f32.mrb[0].mxu0
        %v2583 = vadd.f32 0.0, %v2582
        %v2584 = vpop.f32.mrb[0].mxu0
        %v2585 = vadd.f32 0.0, %v2584
        %2586 = vmatprep.mubr.bf16.mxu0 0
        %2587 = vmatmul.mubr.bf16.gmra.mrb[0].mxu0 %v2493
        %v2588 = vpop.f32.mrb[0].mxu0
        %v2589 = vadd.f32 0.0, %v2588
        %v2590 = vpop.f32.mrb[0].mxu0
        %v2591 = vadd.f32 0.0, %v2590
        %v2592 = vpop.f32.mrb[0].mxu0
        %v2593 = vadd.f32 0.0, %v2592
        %v2594 = vpop.f32.mrb[0].mxu0
        %v2595 = vadd.f32 0.0, %v2594
        %2596 = vmatprep.mubr.bf16.mxu0 0
        %2597 = vmatmul.mubr.bf16.gmra.mrb[0].mxu0 %v2496
        %v2598 = vpop.f32.mrb[0].mxu0
        %v2599 = vadd.f32 0.0, %v2598
        %v2600 = vpop.f32.mrb[0].mxu0
        %v2601 = vadd.f32 0.0, %v2600
        %v2602 = vpop.f32.mrb[0].mxu0
        %v2603 = vadd.f32 0.0, %v2602
        %v2604 = vpop.f32.mrb[0].mxu0
        %v2605 = vadd.f32 0.0, %v2604
        %2606 = vmatprep.mubr.bf16.mxu0 0
        %2607 = vmatmul.mubr.bf16.gmra.mrb[0].mxu0 %v2499
        %v2608 = vpop.f32.mrb[0].mxu0
        %v2609 = vadd.f32 0.0, %v2608
        %v2610 = vpop.f32.mrb[0].mxu0
        %v2611 = vadd.f32 0.0, %v2610
        %v2612 = vpop.f32.mrb[0].mxu0
        %v2613 = vadd.f32 0.0, %v2612
        %v2614 = vpop.f32.mrb[0].mxu0
        %v2615 = vadd.f32 0.0, %v2614
        %2616 = vmatprep.mubr.bf16.mxu0 0
        %2617 = vmatmul.mubr.bf16.gmra.mrb[0].mxu0 %v2502
        %v2618 = vpop.f32.mrb[0].mxu0
        %v2619 = vadd.f32 0.0, %v2618
        %v2620 = vpop.f32.mrb[0].mxu0
        %v2621 = vadd.f32 0.0, %v2620
        %v2622 = vpop.f32.mrb[0].mxu0
        %v2623 = vadd.f32 0.0, %v2622
        %v2624 = vpop.f32.mrb[0].mxu0
        %v2625 = vadd.f32 0.0, %v2624
        %2626 = vmatprep.mubr.bf16.mxu0 0
        %2627 = vmatmul.mubr.bf16.gmra.mrb[0].mxu0 %v2505
        %v2628 = vpop.f32.mrb[0].mxu0
        %v2629 = vadd.f32 0.0, %v2628
        %v2630 = vpop.f32.mrb[0].mxu0
        %v2631 = vadd.f32 0.0, %v2630
        %v2632 = vpop.f32.mrb[0].mxu0
        %v2633 = vadd.f32 0.0, %v2632
        %v2634 = vpop.f32.mrb[0].mxu0
        %v2635 = vadd.f32 0.0, %v2634
        %2636 = vmatprep.mubr.bf16.mxu0 0
        %2637 = vmatmul.mubr.bf16.gmra.mrb[0].mxu0 %v2508
        %v2638 = vpop.f32.mrb[0].mxu0
        %v2639 = vadd.f32 0.0, %v2638
        %v2640 = vpop.f32.mrb[0].mxu0
        %v2641 = vadd.f32 0.0, %v2640
        %v2642 = vpop.f32.mrb[0].mxu0
        %v2643 = vadd.f32 0.0, %v2642
        %v2644 = vpop.f32.mrb[0].mxu0
        %v2645 = vadd.f32 0.0, %v2644
        %2646 = vmatprep.mubr.bf16.mxu0 0
        %2647 = vmatmul.mubr.bf16.gmra.mrb[0].mxu0 %v2511
        %v2648 = vpop.f32.mrb[0].mxu0
        %v2649 = vadd.f32 0.0, %v2648
        %v2650 = vpop.f32.mrb[0].mxu0
        %v2651 = vadd.f32 0.0, %v2650
        %v2652 = vpop.f32.mrb[0].mxu0
        %v2653 = vadd.f32 0.0, %v2652
        %v2654 = vpop.f32.mrb[0].mxu0
        %v2655 = vadd.f32 0.0, %v2654
        %2656 = vmatprep.mubr.bf16.mxu0 0
        %2657 = vmatmul.mubr.bf16.gmra.mrb[0].mxu0 %v2514
        %v2658 = vpop.f32.mrb[0].mxu0
        %v2659 = vadd.f32 0.0, %v2658
        %v2660 = vpop.f32.mrb[0].mxu0
        %v2661 = vadd.f32 0.0, %v2660
        %v2662 = vpop.f32.mrb[0].mxu0
        %v2663 = vadd.f32 0.0, %v2662
        %v2664 = vpop.f32.mrb[0].mxu0
        %v2665 = vadd.f32 0.0, %v2664
        %2666 = vmatprep.mubr.bf16.mxu0 0
        %2667 = vmatmul.mubr.bf16.gmra.mrb[0].mxu0 %v2517
        %v2668 = vpop.f32.mrb[0].mxu0
        %v2669 = vadd.f32 0.0, %v2668
        %v2670 = vpop.f32.mrb[0].mxu0
        %v2671 = vadd.f32 0.0, %v2670
        %v2672 = vpop.f32.mrb[0].mxu0
        %v2673 = vadd.f32 0.0, %v2672
        %v2674 = vpop.f32.mrb[0].mxu0
        %v2675 = vadd.f32 0.0, %v2674
        %2676 = vmatprep.mubr.bf16.mxu0 0
        %2677 = vmatmul.mubr.bf16.gmra.mrb[0].mxu0 %v2520
        %v2678 = vpop.f32.mrb[0].mxu0
        %v2679 = vadd.f32 0.0, %v2678
        %v2680 = vpop.f32.mrb[0].mxu0
        %v2681 = vadd.f32 0.0, %v2680
        %v2682 = vpop.f32.mrb[0].mxu0
        %v2683 = vadd.f32 0.0, %v2682
        %v2684 = vpop.f32.mrb[0].mxu0
        %v2685 = vadd.f32 0.0, %v2684
        %2686 = vmatprep.mubr.bf16.mxu0 0
        %2687 = vmatmul.mubr.bf16.gmra.mrb[0].mxu0 %v2523
        %v2688 = vpop.f32.mrb[0].mxu0
        %v2689 = vadd.f32 0.0, %v2688
        %v2690 = vpop.f32.mrb[0].mxu0
        %v2691 = vadd.f32 0.0, %v2690
        %v2692 = vpop.f32.mrb[0].mxu0
        %v2693 = vadd.f32 0.0, %v2692
        %v2694 = vpop.f32.mrb[0].mxu0
        %v2695 = vadd.f32 0.0, %v2694
        %2696 = vmatprep.mubr.bf16.mxu0 0
        %2697 = vmatmul.mubr.bf16.gmra.mrb[0].mxu0 %v2526
        %v2698 = vpop.f32.mrb[0].mxu0
        %v2699 = vadd.f32 0.0, %v2698
        %v2700 = vpop.f32.mrb[0].mxu0
        %v2701 = vadd.f32 0.0, %v2700
        %v2702 = vpop.f32.mrb[0].mxu0
        %v2703 = vadd.f32 0.0, %v2702
        %v2704 = vpop.f32.mrb[0].mxu0
        %v2705 = vadd.f32 0.0, %v2704
        %2706 = vmatprep.mubr.bf16.mxu0 0
        %2707 = vmatmul.mubr.bf16.gmra.mrb[0].mxu0 %v2529
        %v2708 = vpop.f32.mrb[0].mxu0
        %v2709 = vadd.f32 0.0, %v2708
        %v2710 = vpop.f32.mrb[0].mxu0
        %v2711 = vadd.f32 0.0, %v2710
        %v2712 = vpop.f32.mrb[0].mxu0
        %v2713 = vadd.f32 0.0, %v2712
        %v2714 = vpop.f32.mrb[0].mxu0
        %v2715 = vadd.f32 0.0, %v2714
        %2716 = vmatprep.mubr.bf16.mxu0 0
        %2717 = vmatmul.mubr.bf16.gmra.mrb[0].mxu0 %v2532
        %v2718 = vpop.f32.mrb[0].mxu0
        %v2719 = vadd.f32 0.0, %v2718
        %v2720 = vpop.f32.mrb[0].mxu0
        %v2721 = vadd.f32 0.0, %v2720
        %v2722 = vpop.f32.mrb[0].mxu0
        %v2723 = vadd.f32 0.0, %v2722
        %v2724 = vpop.f32.mrb[0].mxu0
        %v2725 = vadd.f32 0.0, %v2724
        %2726 = vdwg.mxu0
        %v2727 = vmax.f32 %v2569, %v2571
        %2728 = vmax.xlane.f32.xlu0 %v2727
        %v2729 = vpop.xlane.xlu0 %2728
        %v2730 = vmax.f32 %v2573, %v2575
        %2731 = vmax.xlane.f32.xlu0 %v2730
        %v2732 = vpop.xlane.xlu0 %2731
        %v2733 = vmax.f32 %v2579, %v2581
        %2734 = vmax.xlane.f32.xlu0 %v2733
        %v2735 = vpop.xlane.xlu0 %2734
        %v2736 = vmax.f32 %v2583, %v2585
        %2737 = vmax.xlane.f32.xlu0 %v2736
        %v2738 = vpop.xlane.xlu0 %2737
        %v2739 = vmax.f32 %v2589, %v2591
        %2740 = vmax.xlane.f32.xlu0 %v2739
        %v2741 = vpop.xlane.xlu0 %2740
        %v2742 = vmax.f32 %v2593, %v2595
        %2743 = vmax.xlane.f32.xlu0 %v2742
        %v2744 = vpop.xlane.xlu0 %2743
        %v2745 = vmax.f32 %v2599, %v2601
        %2746 = vmax.xlane.f32.xlu0 %v2745
        %v2747 = vpop.xlane.xlu0 %2746
        %v2748 = vmax.f32 %v2603, %v2605
        %2749 = vmax.xlane.f32.xlu0 %v2748
        %v2750 = vpop.xlane.xlu0 %2749
        %v2751 = vmax.f32 %v2609, %v2611
        %2752 = vmax.xlane.f32.xlu0 %v2751
        %v2753 = vpop.xlane.xlu0 %2752
        %v2754 = vmax.f32 %v2613, %v2615
        %2755 = vmax.xlane.f32.xlu0 %v2754
        %v2756 = vpop.xlane.xlu0 %2755
        %v2757 = vmax.f32 %v2619, %v2621
        %2758 = vmax.xlane.f32.xlu0 %v2757
        %v2759 = vpop.xlane.xlu0 %2758
        %v2760 = vmax.f32 %v2623, %v2625
        %2761 = vmax.xlane.f32.xlu0 %v2760
        %v2762 = vpop.xlane.xlu0 %2761
        %v2763 = vmax.f32 %v2629, %v2631
        %2764 = vmax.xlane.f32.xlu0 %v2763
        %v2765 = vpop.xlane.xlu0 %2764
        %v2766 = vmax.f32 %v2633, %v2635
        %2767 = vmax.xlane.f32.xlu0 %v2766
        %v2768 = vpop.xlane.xlu0 %2767
        %v2769 = vmax.f32 %v2639, %v2641
        %2770 = vmax.xlane.f32.xlu0 %v2769
        %v2771 = vpop.xlane.xlu0 %2770
        %v2772 = vmax.f32 %v2643, %v2645
        %2773 = vmax.xlane.f32.xlu0 %v2772
        %v2774 = vpop.xlane.xlu0 %2773
        %v2775 = vmax.f32 %v2649, %v2651
        %2776 = vmax.xlane.f32.xlu0 %v2775
        %v2777 = vpop.xlane.xlu0 %2776
        %v2778 = vmax.f32 %v2653, %v2655
        %2779 = vmax.xlane.f32.xlu0 %v2778
        %v2780 = vpop.xlane.xlu0 %2779
        %v2781 = vmax.f32 %v2659, %v2661
        %2782 = vmax.xlane.f32.xlu0 %v2781
        %v2783 = vpop.xlane.xlu0 %2782
        %v2784 = vmax.f32 %v2663, %v2665
        %2785 = vmax.xlane.f32.xlu0 %v2784
        %v2786 = vpop.xlane.xlu0 %2785
        %v2787 = vmax.f32 %v2669, %v2671
        %2788 = vmax.xlane.f32.xlu0 %v2787
        %v2789 = vpop.xlane.xlu0 %2788
        %v2790 = vmax.f32 %v2673, %v2675
        %2791 = vmax.xlane.f32.xlu0 %v2790
        %v2792 = vpop.xlane.xlu0 %2791
        %v2793 = vmax.f32 %v2679, %v2681
        %2794 = vmax.xlane.f32.xlu0 %v2793
        %v2795 = vpop.xlane.xlu0 %2794
        %v2796 = vmax.f32 %v2683, %v2685
        %2797 = vmax.xlane.f32.xlu0 %v2796
        %v2798 = vpop.xlane.xlu0 %2797
        %v2799 = vmax.f32 %v2689, %v2691
        %2800 = vmax.xlane.f32.xlu0 %v2799
        %v2801 = vpop.xlane.xlu0 %2800
        %v2802 = vmax.f32 %v2693, %v2695
        %2803 = vmax.xlane.f32.xlu0 %v2802
        %v2804 = vpop.xlane.xlu0 %2803
        %v2805 = vmax.f32 %v2699, %v2701
        %2806 = vmax.xlane.f32.xlu0 %v2805
        %v2807 = vpop.xlane.xlu0 %2806
        %v2808 = vmax.f32 %v2703, %v2705
        %2809 = vmax.xlane.f32.xlu0 %v2808
        %v2810 = vpop.xlane.xlu0 %2809
        %v2811 = vmax.f32 %v2709, %v2711
        %2812 = vmax.xlane.f32.xlu0 %v2811
        %v2813 = vpop.xlane.xlu0 %2812
        %v2814 = vmax.f32 %v2713, %v2715
        %2815 = vmax.xlane.f32.xlu0 %v2814
        %v2816 = vpop.xlane.xlu0 %2815
        %v2817 = vmax.f32 %v2719, %v2721
        %2818 = vmax.xlane.f32.xlu0 %v2817
        %v2819 = vpop.xlane.xlu0 %2818
        %v2820 = vmax.f32 %v2723, %v2725
        %2821 = vmax.xlane.f32.xlu0 %v2820
        %v2822 = vpop.xlane.xlu0 %2821
        %v2823 = vsub.f32 %v2569, %v2729
        %v2824 = vsub.f32 %v2571, %v2729
        %v2825 = vsub.f32 %v2573, %v2732
        %v2826 = vsub.f32 %v2575, %v2732
        %v2827 = vsub.f32 %v2579, %v2735
        %v2828 = vsub.f32 %v2581, %v2735
        %v2829 = vsub.f32 %v2583, %v2738
        %v2830 = vsub.f32 %v2585, %v2738
        %v2831 = vsub.f32 %v2589, %v2741
        %v2832 = vsub.f32 %v2591, %v2741
        %v2833 = vsub.f32 %v2593, %v2744
        %v2834 = vsub.f32 %v2595, %v2744
        %v2835 = vsub.f32 %v2599, %v2747
        %v2836 = vsub.f32 %v2601, %v2747
        %v2837 = vsub.f32 %v2603, %v2750
        %v2838 = vsub.f32 %v2605, %v2750
        %v2839 = vsub.f32 %v2609, %v2753
        %v2840 = vsub.f32 %v2611, %v2753
        %v2841 = vsub.f32 %v2613, %v2756
        %v2842 = vsub.f32 %v2615, %v2756
        %v2843 = vsub.f32 %v2619, %v2759
        %v2844 = vsub.f32 %v2621, %v2759
        %v2845 = vsub.f32 %v2623, %v2762
        %v2846 = vsub.f32 %v2625, %v2762
        %v2847 = vsub.f32 %v2629, %v2765
        %v2848 = vsub.f32 %v2631, %v2765
        %v2849 = vsub.f32 %v2633, %v2768
        %v2850 = vsub.f32 %v2635, %v2768
        %v2851 = vsub.f32 %v2639, %v2771
        %v2852 = vsub.f32 %v2641, %v2771
        %v2853 = vsub.f32 %v2643, %v2774
        %v2854 = vsub.f32 %v2645, %v2774
        %v2855 = vsub.f32 %v2649, %v2777
        %v2856 = vsub.f32 %v2651, %v2777
        %v2857 = vsub.f32 %v2653, %v2780
        %v2858 = vsub.f32 %v2655, %v2780
        %v2859 = vsub.f32 %v2659, %v2783
        %v2860 = vsub.f32 %v2661, %v2783
        %v2861 = vsub.f32 %v2663, %v2786
        %v2862 = vsub.f32 %v2665, %v2786
        %v2863 = vsub.f32 %v2669, %v2789
        %v2864 = vsub.f32 %v2671, %v2789
        %v2865 = vsub.f32 %v2673, %v2792
        %v2866 = vsub.f32 %v2675, %v2792
        %v2867 = vsub.f32 %v2679, %v2795
        %v2868 = vsub.f32 %v2681, %v2795
        %v2869 = vsub.f32 %v2683, %v2798
        %v2870 = vsub.f32 %v2685, %v2798
        %v2871 = vsub.f32 %v2689, %v2801
        %v2872 = vsub.f32 %v2691, %v2801
        %v2873 = vsub.f32 %v2693, %v2804
        %v2874 = vsub.f32 %v2695, %v2804
        %v2875 = vsub.f32 %v2699, %v2807
        %v2876 = vsub.f32 %v2701, %v2807
        %v2877 = vsub.f32 %v2703, %v2810
        %v2878 = vsub.f32 %v2705, %v2810
        %v2879 = vsub.f32 %v2709, %v2813
        %v2880 = vsub.f32 %v2711, %v2813
        %v2881 = vsub.f32 %v2713, %v2816
        %v2882 = vsub.f32 %v2715, %v2816
        %v2883 = vsub.f32 %v2719, %v2819
        %v2884 = vsub.f32 %v2721, %v2819
        %v2885 = vsub.f32 %v2723, %v2822
        %v2886 = vsub.f32 %v2725, %v2822
        %v2887 = vmul.f32 %v2823, 1.442695
        %v2888 = vpow.pop %v2887
        %v2889 = vmul.f32 %v2824, 1.442695
        %v2890 = vpow.pop %v2889
        %v2891 = vmul.f32 %v2825, 1.442695
        %v2892 = vpow.pop %v2891
        %v2893 = vmul.f32 %v2826, 1.442695
        %v2894 = vpow.pop %v2893
        %v2895 = vmul.f32 %v2827, 1.442695
        %v2896 = vpow.pop %v2895
        %v2897 = vmul.f32 %v2828, 1.442695
        %v2898 = vpow.pop %v2897
        %v2899 = vmul.f32 %v2829, 1.442695
        %v2900 = vpow.pop %v2899
        %v2901 = vmul.f32 %v2830, 1.442695
        %v2902 = vpow.pop %v2901
        %v2903 = vmul.f32 %v2831, 1.442695
        %v2904 = vpow.pop %v2903
        %v2905 = vmul.f32 %v2832, 1.442695
        %v2906 = vpow.pop %v2905
        %v2907 = vmul.f32 %v2833, 1.442695
        %v2908 = vpow.pop %v2907
        %v2909 = vmul.f32 %v2834, 1.442695
        %v2910 = vpow.pop %v2909
        %v2911 = vmul.f32 %v2835, 1.442695
        %v2912 = vpow.pop %v2911
        %v2913 = vmul.f32 %v2836, 1.442695
        %v2914 = vpow.pop %v2913
        %v2915 = vmul.f32 %v2837, 1.442695
        %v2916 = vpow.pop %v2915
        %v2917 = vmul.f32 %v2838, 1.442695
        %v2918 = vpow.pop %v2917
        %v2919 = vmul.f32 %v2839, 1.442695
        %v2920 = vpow.pop %v2919
        %v2921 = vmul.f32 %v2840, 1.442695
        %v2922 = vpow.pop %v2921
        %v2923 = vmul.f32 %v2841, 1.442695
        %v2924 = vpow.pop %v2923
        %v2925 = vmul.f32 %v2842, 1.442695
        %v2926 = vpow.pop %v2925
        %v2927 = vmul.f32 %v2843, 1.442695
        %v2928 = vpow.pop %v2927
        %v2929 = vmul.f32 %v2844, 1.442695
        %v2930 = vpow.pop %v2929
        %v2931 = vmul.f32 %v2845, 1.442695
        %v2932 = vpow.pop %v2931
        %v2933 = vmul.f32 %v2846, 1.442695
        %v2934 = vpow.pop %v2933
        %v2935 = vmul.f32 %v2847, 1.442695
        %v2936 = vpow.pop %v2935
        %v2937 = vmul.f32 %v2848, 1.442695
        %v2938 = vpow.pop %v2937
        %v2939 = vmul.f32 %v2849, 1.442695
        %v2940 = vpow.pop %v2939
        %v2941 = vmul.f32 %v2850, 1.442695
        %v2942 = vpow.pop %v2941
        %v2943 = vmul.f32 %v2851, 1.442695
        %v2944 = vpow.pop %v2943
        %v2945 = vmul.f32 %v2852, 1.442695
        %v2946 = vpow.pop %v2945
        %v2947 = vmul.f32 %v2853, 1.442695
        %v2948 = vpow.pop %v2947
        %v2949 = vmul.f32 %v2854, 1.442695
        %v2950 = vpow.pop %v2949
        %v2951 = vmul.f32 %v2855, 1.442695
        %v2952 = vpow.pop %v2951
        %v2953 = vmul.f32 %v2856, 1.442695
        %v2954 = vpow.pop %v2953
        %v2955 = vmul.f32 %v2857, 1.442695
        %v2956 = vpow.pop %v2955
        %v2957 = vmul.f32 %v2858, 1.442695
        %v2958 = vpow.pop %v2957
        %v2959 = vmul.f32 %v2859, 1.442695
        %v2960 = vpow.pop %v2959
        %v2961 = vmul.f32 %v2860, 1.442695
        %v2962 = vpow.pop %v2961
        %v2963 = vmul.f32 %v2861, 1.442695
        %v2964 = vpow.pop %v2963
        %v2965 = vmul.f32 %v2862, 1.442695
        %v2966 = vpow.pop %v2965
        %v2967 = vmul.f32 %v2863, 1.442695
        %v2968 = vpow.pop %v2967
        %v2969 = vmul.f32 %v2864, 1.442695
        %v2970 = vpow.pop %v2969
        %v2971 = vmul.f32 %v2865, 1.442695
        %v2972 = vpow.pop %v2971
        %v2973 = vmul.f32 %v2866, 1.442695
        %v2974 = vpow.pop %v2973
        %v2975 = vmul.f32 %v2867, 1.442695
        %v2976 = vpow.pop %v2975
        %v2977 = vmul.f32 %v2868, 1.442695
        %v2978 = vpow.pop %v2977
        %v2979 = vmul.f32 %v2869, 1.442695
        %v2980 = vpow.pop %v2979
        %v2981 = vmul.f32 %v2870, 1.442695
        %v2982 = vpow.pop %v2981
        %v2983 = vmul.f32 %v2871, 1.442695
        %v2984 = vpow.pop %v2983
        %v2985 = vmul.f32 %v2872, 1.442695
        %v2986 = vpow.pop %v2985
        %v2987 = vmul.f32 %v2873, 1.442695
        %v2988 = vpow.pop %v2987
        %v2989 = vmul.f32 %v2874, 1.442695
        %v2990 = vpow.pop %v2989
        %v2991 = vmul.f32 %v2875, 1.442695
        %v2992 = vpow.pop %v2991
        %v2993 = vmul.f32 %v2876, 1.442695
        %v2994 = vpow.pop %v2993
        %v2995 = vmul.f32 %v2877, 1.442695
        %v2996 = vpow.pop %v2995
        %v2997 = vmul.f32 %v2878, 1.442695
        %v2998 = vpow.pop %v2997
        %v2999 = vmul.f32 %v2879, 1.442695
        %v3000 = vpow.pop %v2999
        %v3001 = vmul.f32 %v2880, 1.442695
        %v3002 = vpow.pop %v3001
        %v3003 = vmul.f32 %v2881, 1.442695
        %v3004 = vpow.pop %v3003
        %v3005 = vmul.f32 %v2882, 1.442695
        %v3006 = vpow.pop %v3005
        %v3007 = vmul.f32 %v2883, 1.442695
        %v3008 = vpow.pop %v3007
        %v3009 = vmul.f32 %v2884, 1.442695
        %v3010 = vpow.pop %v3009
        %v3011 = vmul.f32 %v2885, 1.442695
        %v3012 = vpow.pop %v3011
        %v3013 = vmul.f32 %v2886, 1.442695
        %v3014 = vpow.pop %v3013
        %v3015 = vadd.f32 %v2888, %v2890
        %3016 = vadd.xlane.f32.xlu0 %v3015
        %v3017 = vpop.xlane.xlu0 %3016
        %v3018 = vadd.f32 %v2892, %v2894
        %3019 = vadd.xlane.f32.xlu0 %v3018
        %v3020 = vpop.xlane.xlu0 %3019
        %v3021 = vadd.f32 %v2896, %v2898
        %3022 = vadd.xlane.f32.xlu0 %v3021
        %v3023 = vpop.xlane.xlu0 %3022
        %v3024 = vadd.f32 %v2900, %v2902
        %3025 = vadd.xlane.f32.xlu0 %v3024
        %v3026 = vpop.xlane.xlu0 %3025
        %v3027 = vadd.f32 %v2904, %v2906
        %3028 = vadd.xlane.f32.xlu0 %v3027
        %v3029 = vpop.xlane.xlu0 %3028
        %v3030 = vadd.f32 %v2908, %v2910
        %3031 = vadd.xlane.f32.xlu0 %v3030
        %v3032 = vpop.xlane.xlu0 %3031
        %v3033 = vadd.f32 %v2912, %v2914
        %3034 = vadd.xlane.f32.xlu0 %v3033
        %v3035 = vpop.xlane.xlu0 %3034
        %v3036 = vadd.f32 %v2916, %v2918
        %3037 = vadd.xlane.f32.xlu0 %v3036
        %v3038 = vpop.xlane.xlu0 %3037
        %v3039 = vadd.f32 %v2920, %v2922
        %3040 = vadd.xlane.f32.xlu0 %v3039
        %v3041 = vpop.xlane.xlu0 %3040
        %v3042 = vadd.f32 %v2924, %v2926
        %3043 = vadd.xlane.f32.xlu0 %v3042
        %v3044 = vpop.xlane.xlu0 %3043
        %v3045 = vadd.f32 %v2928, %v2930
        %3046 = vadd.xlane.f32.xlu0 %v3045
        %v3047 = vpop.xlane.xlu0 %3046
        %v3048 = vadd.f32 %v2932, %v2934
        %3049 = vadd.xlane.f32.xlu0 %v3048
        %v3050 = vpop.xlane.xlu0 %3049
        %v3051 = vadd.f32 %v2936, %v2938
        %3052 = vadd.xlane.f32.xlu0 %v3051
        %v3053 = vpop.xlane.xlu0 %3052
        %v3054 = vadd.f32 %v2940, %v2942
        %3055 = vadd.xlane.f32.xlu0 %v3054
        %v3056 = vpop.xlane.xlu0 %3055
        %v3057 = vadd.f32 %v2944, %v2946
        %3058 = vadd.xlane.f32.xlu0 %v3057
        %v3059 = vpop.xlane.xlu0 %3058
        %v3060 = vadd.f32 %v2948, %v2950
        %3061 = vadd.xlane.f32.xlu0 %v3060
        %v3062 = vpop.xlane.xlu0 %3061
        %v3063 = vadd.f32 %v2952, %v2954
        %3064 = vadd.xlane.f32.xlu0 %v3063
        %v3065 = vpop.xlane.xlu0 %3064
        %v3066 = vadd.f32 %v2956, %v2958
        %3067 = vadd.xlane.f32.xlu0 %v3066
        %v3068 = vpop.xlane.xlu0 %3067
        %v3069 = vadd.f32 %v2960, %v2962
        %3070 = vadd.xlane.f32.xlu0 %v3069
        %v3071 = vpop.xlane.xlu0 %3070
        %v3072 = vadd.f32 %v2964, %v2966
        %3073 = vadd.xlane.f32.xlu0 %v3072
        %v3074 = vpop.xlane.xlu0 %3073
        %v3075 = vadd.f32 %v2968, %v2970
        %3076 = vadd.xlane.f32.xlu0 %v3075
        %v3077 = vpop.xlane.xlu0 %3076
        %v3078 = vadd.f32 %v2972, %v2974
        %3079 = vadd.xlane.f32.xlu0 %v3078
        %v3080 = vpop.xlane.xlu0 %3079
        %v3081 = vadd.f32 %v2976, %v2978
        %3082 = vadd.xlane.f32.xlu0 %v3081
        %v3083 = vpop.xlane.xlu0 %3082
        %v3084 = vadd.f32 %v2980, %v2982
        %3085 = vadd.xlane.f32.xlu0 %v3084
        %v3086 = vpop.xlane.xlu0 %3085
        %v3087 = vadd.f32 %v2984, %v2986
        %3088 = vadd.xlane.f32.xlu0 %v3087
        %v3089 = vpop.xlane.xlu0 %3088
        %v3090 = vadd.f32 %v2988, %v2990
        %3091 = vadd.xlane.f32.xlu0 %v3090
        %v3092 = vpop.xlane.xlu0 %3091
        %v3093 = vadd.f32 %v2992, %v2994
        %3094 = vadd.xlane.f32.xlu0 %v3093
        %v3095 = vpop.xlane.xlu0 %3094
        %v3096 = vadd.f32 %v2996, %v2998
        %3097 = vadd.xlane.f32.xlu0 %v3096
        %v3098 = vpop.xlane.xlu0 %3097
        %v3099 = vadd.f32 %v3000, %v3002
        %3100 = vadd.xlane.f32.xlu0 %v3099
        %v3101 = vpop.xlane.xlu0 %3100
        %v3102 = vadd.f32 %v3004, %v3006
        %3103 = vadd.xlane.f32.xlu0 %v3102
        %v3104 = vpop.xlane.xlu0 %3103
        %v3105 = vadd.f32 %v3008, %v3010
        %3106 = vadd.xlane.f32.xlu0 %v3105
        %v3107 = vpop.xlane.xlu0 %3106
        %v3108 = vadd.f32 %v3012, %v3014
        %3109 = vadd.xlane.f32.xlu0 %v3108
        %v3110 = vpop.xlane.xlu0 %3109
        %v3111 = vrcp.pop %v3017
        %v3112 = vrcp.pop %v3020
        %v3113 = vrcp.pop %v3023
        %v3114 = vrcp.pop %v3026
        %v3115 = vrcp.pop %v3029
        %v3116 = vrcp.pop %v3032
        %v3117 = vrcp.pop %v3035
        %v3118 = vrcp.pop %v3038
        %v3119 = vrcp.pop %v3041
        %v3120 = vrcp.pop %v3044
        %v3121 = vrcp.pop %v3047
        %v3122 = vrcp.pop %v3050
        %v3123 = vrcp.pop %v3053
        %v3124 = vrcp.pop %v3056
        %v3125 = vrcp.pop %v3059
        %v3126 = vrcp.pop %v3062
        %v3127 = vrcp.pop %v3065
        %v3128 = vrcp.pop %v3068
        %v3129 = vrcp.pop %v3071
        %v3130 = vrcp.pop %v3074
        %v3131 = vrcp.pop %v3077
        %v3132 = vrcp.pop %v3080
        %v3133 = vrcp.pop %v3083
        %v3134 = vrcp.pop %v3086
        %v3135 = vrcp.pop %v3089
        %v3136 = vrcp.pop %v3092
        %v3137 = vrcp.pop %v3095
        %v3138 = vrcp.pop %v3098
        %v3139 = vrcp.pop %v3101
        %v3140 = vrcp.pop %v3104
        %v3141 = vrcp.pop %v3107
        %v3142 = vrcp.pop %v3110
        %v3143 = vmul.f32 %v2888, %v3111
        %v3144 = vmul.f32 %v2890, %v3111
        %v3145 = vmul.f32 %v2892, %v3112
        %v3146 = vmul.f32 %v2894, %v3112
        %v3147 = vmul.f32 %v2896, %v3113
        %v3148 = vmul.f32 %v2898, %v3113
        %v3149 = vmul.f32 %v2900, %v3114
        %v3150 = vmul.f32 %v2902, %v3114
        %v3151 = vmul.f32 %v2904, %v3115
        %v3152 = vmul.f32 %v2906, %v3115
        %v3153 = vmul.f32 %v2908, %v3116
        %v3154 = vmul.f32 %v2910, %v3116
        %v3155 = vmul.f32 %v2912, %v3117
        %v3156 = vmul.f32 %v2914, %v3117
        %v3157 = vmul.f32 %v2916, %v3118
        %v3158 = vmul.f32 %v2918, %v3118
        %v3159 = vmul.f32 %v2920, %v3119
        %v3160 = vmul.f32 %v2922, %v3119
        %v3161 = vmul.f32 %v2924, %v3120
        %v3162 = vmul.f32 %v2926, %v3120
        %v3163 = vmul.f32 %v2928, %v3121
        %v3164 = vmul.f32 %v2930, %v3121
        %v3165 = vmul.f32 %v2932, %v3122
        %v3166 = vmul.f32 %v2934, %v3122
        %v3167 = vmul.f32 %v2936, %v3123
        %v3168 = vmul.f32 %v2938, %v3123
        %v3169 = vmul.f32 %v2940, %v3124
        %v3170 = vmul.f32 %v2942, %v3124
        %v3171 = vmul.f32 %v2944, %v3125
        %v3172 = vmul.f32 %v2946, %v3125
        %v3173 = vmul.f32 %v2948, %v3126
        %v3174 = vmul.f32 %v2950, %v3126
        %v3175 = vmul.f32 %v2952, %v3127
        %v3176 = vmul.f32 %v2954, %v3127
        %v3177 = vmul.f32 %v2956, %v3128
        %v3178 = vmul.f32 %v2958, %v3128
        %v3179 = vmul.f32 %v2960, %v3129
        %v3180 = vmul.f32 %v2962, %v3129
        %v3181 = vmul.f32 %v2964, %v3130
        %v3182 = vmul.f32 %v2966, %v3130
        %v3183 = vmul.f32 %v2968, %v3131
        %v3184 = vmul.f32 %v2970, %v3131
        %v3185 = vmul.f32 %v2972, %v3132
        %v3186 = vmul.f32 %v2974, %v3132
        %v3187 = vmul.f32 %v2976, %v3133
        %v3188 = vmul.f32 %v2978, %v3133
        %v3189 = vmul.f32 %v2980, %v3134
        %v3190 = vmul.f32 %v2982, %v3134
        %v3191 = vmul.f32 %v2984, %v3135
        %v3192 = vmul.f32 %v2986, %v3135
        %v3193 = vmul.f32 %v2988, %v3136
        %v3194 = vmul.f32 %v2990, %v3136
        %v3195 = vmul.f32 %v2992, %v3137
        %v3196 = vmul.f32 %v2994, %v3137
        %v3197 = vmul.f32 %v2996, %v3138
        %v3198 = vmul.f32 %v2998, %v3138
        %v3199 = vmul.f32 %v3000, %v3139
        %v3200 = vmul.f32 %v3002, %v3139
        %v3201 = vmul.f32 %v3004, %v3140
        %v3202 = vmul.f32 %v3006, %v3140
        %v3203 = vmul.f32 %v3008, %v3141
        %v3204 = vmul.f32 %v3010, %v3141
        %v3205 = vmul.f32 %v3012, %v3142
        %v3206 = vmul.f32 %v3014, %v3142
        %v3207 = vpack.c.bf16 %v711, %v707
        %v3208 = vpack.c.bf16 %v713, %v709
        %v3209 = vpack.c.bf16 %v721, %v717
        %v3210 = vpack.c.bf16 %v723, %v719
        %v3211 = vpack.c.bf16 %v3145, %v3143
        %v3212 = vpack.c.bf16 %v3146, %v3144
        %v3213 = vpack.c.bf16 %v3149, %v3147
        %v3214 = vpack.c.bf16 %v3150, %v3148
        %v3215 = vpack.c.bf16 %v3153, %v3151
        %v3216 = vpack.c.bf16 %v3154, %v3152
        %v3217 = vpack.c.bf16 %v3157, %v3155
        %v3218 = vpack.c.bf16 %v3158, %v3156
        %v3219 = vpack.c.bf16 %v3161, %v3159
        %v3220 = vpack.c.bf16 %v3162, %v3160
        %v3221 = vpack.c.bf16 %v3165, %v3163
        %v3222 = vpack.c.bf16 %v3166, %v3164
        %v3223 = vpack.c.bf16 %v3169, %v3167
        %v3224 = vpack.c.bf16 %v3170, %v3168
        %v3225 = vpack.c.bf16 %v3173, %v3171
        %v3226 = vpack.c.bf16 %v3174, %v3172
        %v3227 = vpack.c.bf16 %v3177, %v3175
        %v3228 = vpack.c.bf16 %v3178, %v3176
        %v3229 = vpack.c.bf16 %v3181, %v3179
        %v3230 = vpack.c.bf16 %v3182, %v3180
        %v3231 = vpack.c.bf16 %v3185, %v3183
        %v3232 = vpack.c.bf16 %v3186, %v3184
        %v3233 = vpack.c.bf16 %v3189, %v3187
        %v3234 = vpack.c.bf16 %v3190, %v3188
        %v3235 = vpack.c.bf16 %v3193, %v3191
        %v3236 = vpack.c.bf16 %v3194, %v3192
        %v3237 = vpack.c.bf16 %v3197, %v3195
        %v3238 = vpack.c.bf16 %v3198, %v3196
        %v3239 = vpack.c.bf16 %v3201, %v3199
        %v3240 = vpack.c.bf16 %v3202, %v3200
        %v3241 = vpack.c.bf16 %v3205, %v3203
        %v3242 = vpack.c.bf16 %v3206, %v3204
        %3243 = vmatprep.subr.bf16.mxu0 %v3212
        %3244 = vmatpush1.bf16.xpose.msra.mxu0 %v3211
        %3245 = vmatprep.subr.bf16.mxu0 %v3214
        %3246 = vmatpush1.bf16.xpose.msra.mxu0 %v3213
        %3247 = vmatprep.subr.bf16.mxu0 %v3216
        %3248 = vmatpush1.bf16.xpose.msra.mxu0 %v3215
        %3249 = vmatprep.subr.bf16.mxu0 %v3218
        %3250 = vmatpush1.bf16.xpose.msra.mxu0 %v3217
        %3251 = vmatprep.subr.bf16.mxu0 %v3220
        %3252 = vmatpush1.bf16.xpose.msra.mxu0 %v3219
        %3253 = vmatprep.subr.bf16.mxu0 %v3222
        %3254 = vmatpush1.bf16.xpose.msra.mxu0 %v3221
        %3255 = vmatprep.subr.bf16.mxu0 %v3224
        %3256 = vmatpush1.bf16.xpose.msra.mxu0 %v3223
        %3257 = vmatprep.subr.bf16.mxu0 %v3226
        %3258 = vmatpush1.bf16.xpose.msra.mxu0 %v3225
        %3259 = vmatprep.subr.bf16.mxu0 %v3228
        %3260 = vmatpush1.bf16.xpose.msra.mxu0 %v3227
        %3261 = vmatprep.subr.bf16.mxu0 %v3230
        %3262 = vmatpush1.bf16.xpose.msra.mxu0 %v3229
        %3263 = vmatprep.subr.bf16.mxu0 %v3232
        %3264 = vmatpush1.bf16.xpose.msra.mxu0 %v3231
        %3265 = vmatprep.subr.bf16.mxu0 %v3234
        %3266 = vmatpush1.bf16.xpose.msra.mxu0 %v3233
        %3267 = vmatprep.subr.bf16.mxu0 %v3236
        %3268 = vmatpush1.bf16.xpose.msra.mxu0 %v3235
        %3269 = vmatprep.subr.bf16.mxu0 %v3238
        %3270 = vmatpush1.bf16.xpose.msra.mxu0 %v3237
        %3271 = vmatprep.subr.bf16.mxu0 %v3240
        %3272 = vmatpush1.bf16.xpose.msra.mxu0 %v3239
        %3273 = vmatprep.subr.bf16.mxu0 %v3242
        %3274 = vmatpush1.bf16.xpose.msra.mxu0 %v3241
        %3275 = vmatprep.mubr.bf16.mxu0 %v3208
        %3276 = vmatmul.mubr.bf16.gmra.mrb[0].mxu0 %v3207
        %v3277 = vpop.f32.mrb[0].mxu0
        %v3278 = vadd.f32 0.0, %v3277
        %v3279 = vpop.f32.mrb[0].mxu0
        %v3280 = vadd.f32 0.0, %v3279
        %v3281 = vpop.f32.mrb[0].mxu0
        %v3282 = vadd.f32 0.0, %v3281
        %v3283 = vpop.f32.mrb[0].mxu0
        %v3284 = vadd.f32 0.0, %v3283
        %3285 = vmatprep.mubr.bf16.mxu0 %v3210
        %3286 = vmatmul.mubr.bf16.gmra.mrb[0].mxu0 %v3209
        %v3287 = vpop.f32.mrb[0].mxu0
        %v3288 = vadd.f32 0.0, %v3287
        %v3289 = vpop.f32.mrb[0].mxu0
        %v3290 = vadd.f32 0.0, %v3289
        %v3291 = vpop.f32.mrb[0].mxu0
        %v3292 = vadd.f32 0.0, %v3291
        %v3293 = vpop.f32.mrb[0].mxu0
        %v3294 = vadd.f32 0.0, %v3293
        %3295 = vdwg.mxu0
        %v3296 = vpack.c.bf16 %v571, %v567
        %v3297 = vpack.c.bf16 %v573, %v569
        %v3298 = vpack.c.bf16 %v581, %v577
        %v3299 = vpack.c.bf16 %v583, %v579
        %v3300 = vpack.c.bf16 %v651, %v647
        %v3301 = vpack.c.bf16 %v653, %v649
        %v3302 = vpack.c.bf16 %v661, %v657
        %v3303 = vpack.c.bf16 %v663, %v659
        %3304 = vxpose.xlu0.c.b16.start [1/8] %v3296, 128
        %3305 = vxpose.xlu0.c.b16.cont [2/8] %v3298, 128
        %3306 = vxpose.xlu0.c.b16.cont [3/8] 0, 128
        %3307 = vxpose.xlu0.c.b16.cont [4/8] 0, 128
        %3308 = vxpose.xlu0.c.b16.cont [5/8] 0, 128
        %3309 = vxpose.xlu0.c.b16.cont [6/8] 0, 128
        %3310 = vxpose.xlu0.c.b16.cont [7/8] 0, 128
        %3311 = vxpose.xlu0.c.b16.end [8/8] 0, 128
        %v3312 = vpop.trf.xlu0
        %v3313 = vpop.trf.xlu0
        %v3314 = vpop.trf.xlu0
        %v3315 = vpop.trf.xlu0
        %v3316 = vpop.trf.xlu0
        %v3317 = vpop.trf.xlu0
        %v3318 = vpop.trf.xlu0
        %v3319 = vpop.trf.xlu0
        %3320 = vxpose.xlu0.c.b16.start [1/8] %v3297, 128
        %3321 = vxpose.xlu0.c.b16.cont [2/8] %v3299, 128
        %3322 = vxpose.xlu0.c.b16.cont [3/8] 0, 128
        %3323 = vxpose.xlu0.c.b16.cont [4/8] 0, 128
        %3324 = vxpose.xlu0.c.b16.cont [5/8] 0, 128
        %3325 = vxpose.xlu0.c.b16.cont [6/8] 0, 128
        %3326 = vxpose.xlu0.c.b16.cont [7/8] 0, 128
        %3327 = vxpose.xlu0.c.b16.end [8/8] 0, 128
        %v3328 = vpop.trf.xlu0
        %v3329 = vpop.trf.xlu0
        %v3330 = vpop.trf.xlu0
        %v3331 = vpop.trf.xlu0
        %v3332 = vpop.trf.xlu0
        %v3333 = vpop.trf.xlu0
        %v3334 = vpop.trf.xlu0
        %v3335 = vpop.trf.xlu0
        %v3337 = vsel %vm785, %v3312, 0
        %v3340 = vsel %vm785, %v3313, 0
        %v3343 = vsel %vm785, %v3314, 0
        %v3346 = vsel %vm785, %v3315, 0
        %v3349 = vsel %vm785, %v3316, 0
        %v3352 = vsel %vm785, %v3317, 0
        %v3355 = vsel %vm785, %v3318, 0
        %v3358 = vsel %vm785, %v3319, 0
        %v3361 = vsel %vm785, %v3328, 0
        %v3364 = vsel %vm785, %v3329, 0
        %v3367 = vsel %vm785, %v3330, 0
        %v3370 = vsel %vm785, %v3331, 0
        %v3373 = vsel %vm785, %v3332, 0
        %v3376 = vsel %vm785, %v3333, 0
        %v3379 = vsel %vm785, %v3334, 0
        %v3382 = vsel %vm785, %v3335, 0
        %3384 = vmatprep.subr.bf16.mxu0 %v3301
        %3385 = vmatpush1.bf16.msra.mxu0 %v3300
        %3386 = vmatprep.subr.bf16.mxu0 %v3303
        %3387 = vmatpush1.bf16.msra.mxu0 %v3302
        %3388 = vmatprep.subr.bf16.mxu0 0
        %3389 = vmatpush1.bf16.msra.mxu0 0
        %3390 = vmatprep.subr.bf16.mxu0 0
        %3391 = vmatpush1.bf16.msra.mxu0 0
        %3392 = vmatprep.subr.bf16.mxu0 0
        %3393 = vmatpush1.bf16.msra.mxu0 0
        %3394 = vmatprep.subr.bf16.mxu0 0
        %3395 = vmatpush1.bf16.msra.mxu0 0
        %3396 = vmatprep.subr.bf16.mxu0 0
        %3397 = vmatpush1.bf16.msra.mxu0 0
        %3398 = vmatprep.subr.bf16.mxu0 0
        %3399 = vmatpush1.bf16.msra.mxu0 0
        %3400 = vmatprep.subr.bf16.mxu0 0
        %3401 = vmatpush1.bf16.msra.mxu0 0
        %3402 = vmatprep.subr.bf16.mxu0 0
        %3403 = vmatpush1.bf16.msra.mxu0 0
        %3404 = vmatprep.subr.bf16.mxu0 0
        %3405 = vmatpush1.bf16.msra.mxu0 0
        %3406 = vmatprep.subr.bf16.mxu0 0
        %3407 = vmatpush1.bf16.msra.mxu0 0
        %3408 = vmatprep.subr.bf16.mxu0 0
        %3409 = vmatpush1.bf16.msra.mxu0 0
        %3410 = vmatprep.subr.bf16.mxu0 0
        %3411 = vmatpush1.bf16.msra.mxu0 0
        %3412 = vmatprep.subr.bf16.mxu0 0
        %3413 = vmatpush1.bf16.msra.mxu0 0
        %3414 = vmatprep.subr.bf16.mxu0 0
        %3415 = vmatpush1.bf16.msra.mxu0 0
        %3416 = vmatprep.mubr.bf16.mxu0 0
        %3417 = vmatmul.mubr.bf16.gmra.mrb[0].mxu0 %v3337
        %v3418 = vpop.f32.mrb[0].mxu0
        %v3419 = vadd.f32 0.0, %v3418
        %v3420 = vpop.f32.mrb[0].mxu0
        %v3421 = vadd.f32 0.0, %v3420
        %v3422 = vpop.f32.mrb[0].mxu0
        %v3423 = vadd.f32 0.0, %v3422
        %v3424 = vpop.f32.mrb[0].mxu0
        %v3425 = vadd.f32 0.0, %v3424
        %3426 = vmatprep.mubr.bf16.mxu0 0
        %3427 = vmatmul.mubr.bf16.gmra.mrb[0].mxu0 %v3340
        %v3428 = vpop.f32.mrb[0].mxu0
        %v3429 = vadd.f32 0.0, %v3428
        %v3430 = vpop.f32.mrb[0].mxu0
        %v3431 = vadd.f32 0.0, %v3430
        %v3432 = vpop.f32.mrb[0].mxu0
        %v3433 = vadd.f32 0.0, %v3432
        %v3434 = vpop.f32.mrb[0].mxu0
        %v3435 = vadd.f32 0.0, %v3434
        %3436 = vmatprep.mubr.bf16.mxu0 0
        %3437 = vmatmul.mubr.bf16.gmra.mrb[0].mxu0 %v3343
        %v3438 = vpop.f32.mrb[0].mxu0
        %v3439 = vadd.f32 0.0, %v3438
        %v3440 = vpop.f32.mrb[0].mxu0
        %v3441 = vadd.f32 0.0, %v3440
        %v3442 = vpop.f32.mrb[0].mxu0
        %v3443 = vadd.f32 0.0, %v3442
        %v3444 = vpop.f32.mrb[0].mxu0
        %v3445 = vadd.f32 0.0, %v3444
        %3446 = vmatprep.mubr.bf16.mxu0 0
        %3447 = vmatmul.mubr.bf16.gmra.mrb[0].mxu0 %v3346
        %v3448 = vpop.f32.mrb[0].mxu0
        %v3449 = vadd.f32 0.0, %v3448
        %v3450 = vpop.f32.mrb[0].mxu0
        %v3451 = vadd.f32 0.0, %v3450
        %v3452 = vpop.f32.mrb[0].mxu0
        %v3453 = vadd.f32 0.0, %v3452
        %v3454 = vpop.f32.mrb[0].mxu0
        %v3455 = vadd.f32 0.0, %v3454
        %3456 = vmatprep.mubr.bf16.mxu0 0
        %3457 = vmatmul.mubr.bf16.gmra.mrb[0].mxu0 %v3349
        %v3458 = vpop.f32.mrb[0].mxu0
        %v3459 = vadd.f32 0.0, %v3458
        %v3460 = vpop.f32.mrb[0].mxu0
        %v3461 = vadd.f32 0.0, %v3460
        %v3462 = vpop.f32.mrb[0].mxu0
        %v3463 = vadd.f32 0.0, %v3462
        %v3464 = vpop.f32.mrb[0].mxu0
        %v3465 = vadd.f32 0.0, %v3464
        %3466 = vmatprep.mubr.bf16.mxu0 0
        %3467 = vmatmul.mubr.bf16.gmra.mrb[0].mxu0 %v3352
        %v3468 = vpop.f32.mrb[0].mxu0
        %v3469 = vadd.f32 0.0, %v3468
        %v3470 = vpop.f32.mrb[0].mxu0
        %v3471 = vadd.f32 0.0, %v3470
        %v3472 = vpop.f32.mrb[0].mxu0
        %v3473 = vadd.f32 0.0, %v3472
        %v3474 = vpop.f32.mrb[0].mxu0
        %v3475 = vadd.f32 0.0, %v3474
        %3476 = vmatprep.mubr.bf16.mxu0 0
        %3477 = vmatmul.mubr.bf16.gmra.mrb[0].mxu0 %v3355
        %v3478 = vpop.f32.mrb[0].mxu0
        %v3479 = vadd.f32 0.0, %v3478
        %v3480 = vpop.f32.mrb[0].mxu0
        %v3481 = vadd.f32 0.0, %v3480
        %v3482 = vpop.f32.mrb[0].mxu0
        %v3483 = vadd.f32 0.0, %v3482
        %v3484 = vpop.f32.mrb[0].mxu0
        %v3485 = vadd.f32 0.0, %v3484
        %3486 = vmatprep.mubr.bf16.mxu0 0
        %3487 = vmatmul.mubr.bf16.gmra.mrb[0].mxu0 %v3358
        %v3488 = vpop.f32.mrb[0].mxu0
        %v3489 = vadd.f32 0.0, %v3488
        %v3490 = vpop.f32.mrb[0].mxu0
        %v3491 = vadd.f32 0.0, %v3490
        %v3492 = vpop.f32.mrb[0].mxu0
        %v3493 = vadd.f32 0.0, %v3492
        %v3494 = vpop.f32.mrb[0].mxu0
        %v3495 = vadd.f32 0.0, %v3494
        %3496 = vmatprep.mubr.bf16.mxu0 0
        %3497 = vmatmul.mubr.bf16.gmra.mrb[0].mxu0 %v3361
        %v3498 = vpop.f32.mrb[0].mxu0
        %v3499 = vadd.f32 0.0, %v3498
        %v3500 = vpop.f32.mrb[0].mxu0
        %v3501 = vadd.f32 0.0, %v3500
        %v3502 = vpop.f32.mrb[0].mxu0
        %v3503 = vadd.f32 0.0, %v3502
        %v3504 = vpop.f32.mrb[0].mxu0
        %v3505 = vadd.f32 0.0, %v3504
        %3506 = vmatprep.mubr.bf16.mxu0 0
        %3507 = vmatmul.mubr.bf16.gmra.mrb[0].mxu0 %v3364
        %v3508 = vpop.f32.mrb[0].mxu0
        %v3509 = vadd.f32 0.0, %v3508
        %v3510 = vpop.f32.mrb[0].mxu0
        %v3511 = vadd.f32 0.0, %v3510
        %v3512 = vpop.f32.mrb[0].mxu0
        %v3513 = vadd.f32 0.0, %v3512
        %v3514 = vpop.f32.mrb[0].mxu0
        %v3515 = vadd.f32 0.0, %v3514
        %3516 = vmatprep.mubr.bf16.mxu0 0
        %3517 = vmatmul.mubr.bf16.gmra.mrb[0].mxu0 %v3367
        %v3518 = vpop.f32.mrb[0].mxu0
        %v3519 = vadd.f32 0.0, %v3518
        %v3520 = vpop.f32.mrb[0].mxu0
        %v3521 = vadd.f32 0.0, %v3520
        %v3522 = vpop.f32.mrb[0].mxu0
        %v3523 = vadd.f32 0.0, %v3522
        %v3524 = vpop.f32.mrb[0].mxu0
        %v3525 = vadd.f32 0.0, %v3524
        %3526 = vmatprep.mubr.bf16.mxu0 0
        %3527 = vmatmul.mubr.bf16.gmra.mrb[0].mxu0 %v3370
        %v3528 = vpop.f32.mrb[0].mxu0
        %v3529 = vadd.f32 0.0, %v3528
        %v3530 = vpop.f32.mrb[0].mxu0
        %v3531 = vadd.f32 0.0, %v3530
        %v3532 = vpop.f32.mrb[0].mxu0
        %v3533 = vadd.f32 0.0, %v3532
        %v3534 = vpop.f32.mrb[0].mxu0
        %v3535 = vadd.f32 0.0, %v3534
        %3536 = vmatprep.mubr.bf16.mxu0 0
        %3537 = vmatmul.mubr.bf16.gmra.mrb[0].mxu0 %v3373
        %v3538 = vpop.f32.mrb[0].mxu0
        %v3539 = vadd.f32 0.0, %v3538
        %v3540 = vpop.f32.mrb[0].mxu0
        %v3541 = vadd.f32 0.0, %v3540
        %v3542 = vpop.f32.mrb[0].mxu0
        %v3543 = vadd.f32 0.0, %v3542
        %v3544 = vpop.f32.mrb[0].mxu0
        %v3545 = vadd.f32 0.0, %v3544
        %3546 = vmatprep.mubr.bf16.mxu0 0
        %3547 = vmatmul.mubr.bf16.gmra.mrb[0].mxu0 %v3376
        %v3548 = vpop.f32.mrb[0].mxu0
        %v3549 = vadd.f32 0.0, %v3548
        %v3550 = vpop.f32.mrb[0].mxu0
        %v3551 = vadd.f32 0.0, %v3550
        %v3552 = vpop.f32.mrb[0].mxu0
        %v3553 = vadd.f32 0.0, %v3552
        %v3554 = vpop.f32.mrb[0].mxu0
        %v3555 = vadd.f32 0.0, %v3554
        %3556 = vmatprep.mubr.bf16.mxu0 0
        %3557 = vmatmul.mubr.bf16.gmra.mrb[0].mxu0 %v3379
        %v3558 = vpop.f32.mrb[0].mxu0
        %v3559 = vadd.f32 0.0, %v3558
        %v3560 = vpop.f32.mrb[0].mxu0
        %v3561 = vadd.f32 0.0, %v3560
        %v3562 = vpop.f32.mrb[0].mxu0
        %v3563 = vadd.f32 0.0, %v3562
        %v3564 = vpop.f32.mrb[0].mxu0
        %v3565 = vadd.f32 0.0, %v3564
        %3566 = vmatprep.mubr.bf16.mxu0 0
        %3567 = vmatmul.mubr.bf16.gmra.mrb[0].mxu0 %v3382
        %v3568 = vpop.f32.mrb[0].mxu0
        %v3569 = vadd.f32 0.0, %v3568
        %v3570 = vpop.f32.mrb[0].mxu0
        %v3571 = vadd.f32 0.0, %v3570
        %v3572 = vpop.f32.mrb[0].mxu0
        %v3573 = vadd.f32 0.0, %v3572
        %v3574 = vpop.f32.mrb[0].mxu0
        %v3575 = vadd.f32 0.0, %v3574
        %3576 = vdwg.mxu0
        %v3577 = vmax.f32 %v3419, %v3421
        %3578 = vmax.xlane.f32.xlu0 %v3577
        %v3579 = vpop.xlane.xlu0 %3578
        %v3580 = vmax.f32 %v3423, %v3425
        %3581 = vmax.xlane.f32.xlu0 %v3580
        %v3582 = vpop.xlane.xlu0 %3581
        %v3583 = vmax.f32 %v3429, %v3431
        %3584 = vmax.xlane.f32.xlu0 %v3583
        %v3585 = vpop.xlane.xlu0 %3584
        %v3586 = vmax.f32 %v3433, %v3435
        %3587 = vmax.xlane.f32.xlu0 %v3586
        %v3588 = vpop.xlane.xlu0 %3587
        %v3589 = vmax.f32 %v3439, %v3441
        %3590 = vmax.xlane.f32.xlu0 %v3589
        %v3591 = vpop.xlane.xlu0 %3590
        %v3592 = vmax.f32 %v3443, %v3445
        %3593 = vmax.xlane.f32.xlu0 %v3592
        %v3594 = vpop.xlane.xlu0 %3593
        %v3595 = vmax.f32 %v3449, %v3451
        %3596 = vmax.xlane.f32.xlu0 %v3595
        %v3597 = vpop.xlane.xlu0 %3596
        %v3598 = vmax.f32 %v3453, %v3455
        %3599 = vmax.xlane.f32.xlu0 %v3598
        %v3600 = vpop.xlane.xlu0 %3599
        %v3601 = vmax.f32 %v3459, %v3461
        %3602 = vmax.xlane.f32.xlu0 %v3601
        %v3603 = vpop.xlane.xlu0 %3602
        %v3604 = vmax.f32 %v3463, %v3465
        %3605 = vmax.xlane.f32.xlu0 %v3604
        %v3606 = vpop.xlane.xlu0 %3605
        %v3607 = vmax.f32 %v3469, %v3471
        %3608 = vmax.xlane.f32.xlu0 %v3607
        %v3609 = vpop.xlane.xlu0 %3608
        %v3610 = vmax.f32 %v3473, %v3475
        %3611 = vmax.xlane.f32.xlu0 %v3610
        %v3612 = vpop.xlane.xlu0 %3611
        %v3613 = vmax.f32 %v3479, %v3481
        %3614 = vmax.xlane.f32.xlu0 %v3613
        %v3615 = vpop.xlane.xlu0 %3614
        %v3616 = vmax.f32 %v3483, %v3485
        %3617 = vmax.xlane.f32.xlu0 %v3616
        %v3618 = vpop.xlane.xlu0 %3617
        %v3619 = vmax.f32 %v3489, %v3491
        %3620 = vmax.xlane.f32.xlu0 %v3619
        %v3621 = vpop.xlane.xlu0 %3620
        %v3622 = vmax.f32 %v3493, %v3495
        %3623 = vmax.xlane.f32.xlu0 %v3622
        %v3624 = vpop.xlane.xlu0 %3623
        %v3625 = vmax.f32 %v3499, %v3501
        %3626 = vmax.xlane.f32.xlu0 %v3625
        %v3627 = vpop.xlane.xlu0 %3626
        %v3628 = vmax.f32 %v3503, %v3505
        %3629 = vmax.xlane.f32.xlu0 %v3628
        %v3630 = vpop.xlane.xlu0 %3629
        %v3631 = vmax.f32 %v3509, %v3511
        %3632 = vmax.xlane.f32.xlu0 %v3631
        %v3633 = vpop.xlane.xlu0 %3632
        %v3634 = vmax.f32 %v3513, %v3515
        %3635 = vmax.xlane.f32.xlu0 %v3634
        %v3636 = vpop.xlane.xlu0 %3635
        %v3637 = vmax.f32 %v3519, %v3521
        %3638 = vmax.xlane.f32.xlu0 %v3637
        %v3639 = vpop.xlane.xlu0 %3638
        %v3640 = vmax.f32 %v3523, %v3525
        %3641 = vmax.xlane.f32.xlu0 %v3640
        %v3642 = vpop.xlane.xlu0 %3641
        %v3643 = vmax.f32 %v3529, %v3531
        %3644 = vmax.xlane.f32.xlu0 %v3643
        %v3645 = vpop.xlane.xlu0 %3644
        %v3646 = vmax.f32 %v3533, %v3535
        %3647 = vmax.xlane.f32.xlu0 %v3646
        %v3648 = vpop.xlane.xlu0 %3647
        %v3649 = vmax.f32 %v3539, %v3541
        %3650 = vmax.xlane.f32.xlu0 %v3649
        %v3651 = vpop.xlane.xlu0 %3650
        %v3652 = vmax.f32 %v3543, %v3545
        %3653 = vmax.xlane.f32.xlu0 %v3652
        %v3654 = vpop.xlane.xlu0 %3653
        %v3655 = vmax.f32 %v3549, %v3551
        %3656 = vmax.xlane.f32.xlu0 %v3655
        %v3657 = vpop.xlane.xlu0 %3656
        %v3658 = vmax.f32 %v3553, %v3555
        %3659 = vmax.xlane.f32.xlu0 %v3658
        %v3660 = vpop.xlane.xlu0 %3659
        %v3661 = vmax.f32 %v3559, %v3561
        %3662 = vmax.xlane.f32.xlu0 %v3661
        %v3663 = vpop.xlane.xlu0 %3662
        %v3664 = vmax.f32 %v3563, %v3565
        %3665 = vmax.xlane.f32.xlu0 %v3664
        %v3666 = vpop.xlane.xlu0 %3665
        %v3667 = vmax.f32 %v3569, %v3571
        %3668 = vmax.xlane.f32.xlu0 %v3667
        %v3669 = vpop.xlane.xlu0 %3668
        %v3670 = vmax.f32 %v3573, %v3575
        %3671 = vmax.xlane.f32.xlu0 %v3670
        %v3672 = vpop.xlane.xlu0 %3671
        %v3673 = vsub.f32 %v3419, %v3579
        %v3674 = vsub.f32 %v3421, %v3579
        %v3675 = vsub.f32 %v3423, %v3582
        %v3676 = vsub.f32 %v3425, %v3582
        %v3677 = vsub.f32 %v3429, %v3585
        %v3678 = vsub.f32 %v3431, %v3585
        %v3679 = vsub.f32 %v3433, %v3588
        %v3680 = vsub.f32 %v3435, %v3588
        %v3681 = vsub.f32 %v3439, %v3591
        %v3682 = vsub.f32 %v3441, %v3591
        %v3683 = vsub.f32 %v3443, %v3594
        %v3684 = vsub.f32 %v3445, %v3594
        %v3685 = vsub.f32 %v3449, %v3597
        %v3686 = vsub.f32 %v3451, %v3597
        %v3687 = vsub.f32 %v3453, %v3600
        %v3688 = vsub.f32 %v3455, %v3600
        %v3689 = vsub.f32 %v3459, %v3603
        %v3690 = vsub.f32 %v3461, %v3603
        %v3691 = vsub.f32 %v3463, %v3606
        %v3692 = vsub.f32 %v3465, %v3606
        %v3693 = vsub.f32 %v3469, %v3609
        %v3694 = vsub.f32 %v3471, %v3609
        %v3695 = vsub.f32 %v3473, %v3612
        %v3696 = vsub.f32 %v3475, %v3612
        %v3697 = vsub.f32 %v3479, %v3615
        %v3698 = vsub.f32 %v3481, %v3615
        %v3699 = vsub.f32 %v3483, %v3618
        %v3700 = vsub.f32 %v3485, %v3618
        %v3701 = vsub.f32 %v3489, %v3621
        %v3702 = vsub.f32 %v3491, %v3621
        %v3703 = vsub.f32 %v3493, %v3624
        %v3704 = vsub.f32 %v3495, %v3624
        %v3705 = vsub.f32 %v3499, %v3627
        %v3706 = vsub.f32 %v3501, %v3627
        %v3707 = vsub.f32 %v3503, %v3630
        %v3708 = vsub.f32 %v3505, %v3630
        %v3709 = vsub.f32 %v3509, %v3633
        %v3710 = vsub.f32 %v3511, %v3633
        %v3711 = vsub.f32 %v3513, %v3636
        %v3712 = vsub.f32 %v3515, %v3636
        %v3713 = vsub.f32 %v3519, %v3639
        %v3714 = vsub.f32 %v3521, %v3639
        %v3715 = vsub.f32 %v3523, %v3642
        %v3716 = vsub.f32 %v3525, %v3642
        %v3717 = vsub.f32 %v3529, %v3645
        %v3718 = vsub.f32 %v3531, %v3645
        %v3719 = vsub.f32 %v3533, %v3648
        %v3720 = vsub.f32 %v3535, %v3648
        %v3721 = vsub.f32 %v3539, %v3651
        %v3722 = vsub.f32 %v3541, %v3651
        %v3723 = vsub.f32 %v3543, %v3654
        %v3724 = vsub.f32 %v3545, %v3654
        %v3725 = vsub.f32 %v3549, %v3657
        %v3726 = vsub.f32 %v3551, %v3657
        %v3727 = vsub.f32 %v3553, %v3660
        %v3728 = vsub.f32 %v3555, %v3660
        %v3729 = vsub.f32 %v3559, %v3663
        %v3730 = vsub.f32 %v3561, %v3663
        %v3731 = vsub.f32 %v3563, %v3666
        %v3732 = vsub.f32 %v3565, %v3666
        %v3733 = vsub.f32 %v3569, %v3669
        %v3734 = vsub.f32 %v3571, %v3669
        %v3735 = vsub.f32 %v3573, %v3672
        %v3736 = vsub.f32 %v3575, %v3672
        %v3737 = vmul.f32 %v3673, 1.442695
        %v3738 = vpow.pop %v3737
        %v3739 = vmul.f32 %v3674, 1.442695
        %v3740 = vpow.pop %v3739
        %v3741 = vmul.f32 %v3675, 1.442695
        %v3742 = vpow.pop %v3741
        %v3743 = vmul.f32 %v3676, 1.442695
        %v3744 = vpow.pop %v3743
        %v3745 = vmul.f32 %v3677, 1.442695
        %v3746 = vpow.pop %v3745
        %v3747 = vmul.f32 %v3678, 1.442695
        %v3748 = vpow.pop %v3747
        %v3749 = vmul.f32 %v3679, 1.442695
        %v3750 = vpow.pop %v3749
        %v3751 = vmul.f32 %v3680, 1.442695
        %v3752 = vpow.pop %v3751
        %v3753 = vmul.f32 %v3681, 1.442695
        %v3754 = vpow.pop %v3753
        %v3755 = vmul.f32 %v3682, 1.442695
        %v3756 = vpow.pop %v3755
        %v3757 = vmul.f32 %v3683, 1.442695
        %v3758 = vpow.pop %v3757
        %v3759 = vmul.f32 %v3684, 1.442695
        %v3760 = vpow.pop %v3759
        %v3761 = vmul.f32 %v3685, 1.442695
        %v3762 = vpow.pop %v3761
        %v3763 = vmul.f32 %v3686, 1.442695
        %v3764 = vpow.pop %v3763
        %v3765 = vmul.f32 %v3687, 1.442695
        %v3766 = vpow.pop %v3765
        %v3767 = vmul.f32 %v3688, 1.442695
        %v3768 = vpow.pop %v3767
        %v3769 = vmul.f32 %v3689, 1.442695
        %v3770 = vpow.pop %v3769
        %v3771 = vmul.f32 %v3690, 1.442695
        %v3772 = vpow.pop %v3771
        %v3773 = vmul.f32 %v3691, 1.442695
        %v3774 = vpow.pop %v3773
        %v3775 = vmul.f32 %v3692, 1.442695
        %v3776 = vpow.pop %v3775
        %v3777 = vmul.f32 %v3693, 1.442695
        %v3778 = vpow.pop %v3777
        %v3779 = vmul.f32 %v3694, 1.442695
        %v3780 = vpow.pop %v3779
        %v3781 = vmul.f32 %v3695, 1.442695
        %v3782 = vpow.pop %v3781
        %v3783 = vmul.f32 %v3696, 1.442695
        %v3784 = vpow.pop %v3783
        %v3785 = vmul.f32 %v3697, 1.442695
        %v3786 = vpow.pop %v3785
        %v3787 = vmul.f32 %v3698, 1.442695
        %v3788 = vpow.pop %v3787
        %v3789 = vmul.f32 %v3699, 1.442695
        %v3790 = vpow.pop %v3789
        %v3791 = vmul.f32 %v3700, 1.442695
        %v3792 = vpow.pop %v3791
        %v3793 = vmul.f32 %v3701, 1.442695
        %v3794 = vpow.pop %v3793
        %v3795 = vmul.f32 %v3702, 1.442695
        %v3796 = vpow.pop %v3795
        %v3797 = vmul.f32 %v3703, 1.442695
        %v3798 = vpow.pop %v3797
        %v3799 = vmul.f32 %v3704, 1.442695
        %v3800 = vpow.pop %v3799
        %v3801 = vmul.f32 %v3705, 1.442695
        %v3802 = vpow.pop %v3801
        %v3803 = vmul.f32 %v3706, 1.442695
        %v3804 = vpow.pop %v3803
        %v3805 = vmul.f32 %v3707, 1.442695
        %v3806 = vpow.pop %v3805
        %v3807 = vmul.f32 %v3708, 1.442695
        %v3808 = vpow.pop %v3807
        %v3809 = vmul.f32 %v3709, 1.442695
        %v3810 = vpow.pop %v3809
        %v3811 = vmul.f32 %v3710, 1.442695
        %v3812 = vpow.pop %v3811
        %v3813 = vmul.f32 %v3711, 1.442695
        %v3814 = vpow.pop %v3813
        %v3815 = vmul.f32 %v3712, 1.442695
        %v3816 = vpow.pop %v3815
        %v3817 = vmul.f32 %v3713, 1.442695
        %v3818 = vpow.pop %v3817
        %v3819 = vmul.f32 %v3714, 1.442695
        %v3820 = vpow.pop %v3819
        %v3821 = vmul.f32 %v3715, 1.442695
        %v3822 = vpow.pop %v3821
        %v3823 = vmul.f32 %v3716, 1.442695
        %v3824 = vpow.pop %v3823
        %v3825 = vmul.f32 %v3717, 1.442695
        %v3826 = vpow.pop %v3825
        %v3827 = vmul.f32 %v3718, 1.442695
        %v3828 = vpow.pop %v3827
        %v3829 = vmul.f32 %v3719, 1.442695
        %v3830 = vpow.pop %v3829
        %v3831 = vmul.f32 %v3720, 1.442695
        %v3832 = vpow.pop %v3831
        %v3833 = vmul.f32 %v3721, 1.442695
        %v3834 = vpow.pop %v3833
        %v3835 = vmul.f32 %v3722, 1.442695
        %v3836 = vpow.pop %v3835
        %v3837 = vmul.f32 %v3723, 1.442695
        %v3838 = vpow.pop %v3837
        %v3839 = vmul.f32 %v3724, 1.442695
        %v3840 = vpow.pop %v3839
        %v3841 = vmul.f32 %v3725, 1.442695
        %v3842 = vpow.pop %v3841
        %v3843 = vmul.f32 %v3726, 1.442695
        %v3844 = vpow.pop %v3843
        %v3845 = vmul.f32 %v3727, 1.442695
        %v3846 = vpow.pop %v3845
        %v3847 = vmul.f32 %v3728, 1.442695
        %v3848 = vpow.pop %v3847
        %v3849 = vmul.f32 %v3729, 1.442695
        %v3850 = vpow.pop %v3849
        %v3851 = vmul.f32 %v3730, 1.442695
        %v3852 = vpow.pop %v3851
        %v3853 = vmul.f32 %v3731, 1.442695
        %v3854 = vpow.pop %v3853
        %v3855 = vmul.f32 %v3732, 1.442695
        %v3856 = vpow.pop %v3855
        %v3857 = vmul.f32 %v3733, 1.442695
        %v3858 = vpow.pop %v3857
        %v3859 = vmul.f32 %v3734, 1.442695
        %v3860 = vpow.pop %v3859
        %v3861 = vmul.f32 %v3735, 1.442695
        %v3862 = vpow.pop %v3861
        %v3863 = vmul.f32 %v3736, 1.442695
        %v3864 = vpow.pop %v3863
        %v3865 = vadd.f32 %v3738, %v3740
        %3866 = vadd.xlane.f32.xlu0 %v3865
        %v3867 = vpop.xlane.xlu0 %3866
        %v3868 = vadd.f32 %v3742, %v3744
        %3869 = vadd.xlane.f32.xlu0 %v3868
        %v3870 = vpop.xlane.xlu0 %3869
        %v3871 = vadd.f32 %v3746, %v3748
        %3872 = vadd.xlane.f32.xlu0 %v3871
        %v3873 = vpop.xlane.xlu0 %3872
        %v3874 = vadd.f32 %v3750, %v3752
        %3875 = vadd.xlane.f32.xlu0 %v3874
        %v3876 = vpop.xlane.xlu0 %3875
        %v3877 = vadd.f32 %v3754, %v3756
        %3878 = vadd.xlane.f32.xlu0 %v3877
        %v3879 = vpop.xlane.xlu0 %3878
        %v3880 = vadd.f32 %v3758, %v3760
        %3881 = vadd.xlane.f32.xlu0 %v3880
        %v3882 = vpop.xlane.xlu0 %3881
        %v3883 = vadd.f32 %v3762, %v3764
        %3884 = vadd.xlane.f32.xlu0 %v3883
        %v3885 = vpop.xlane.xlu0 %3884
        %v3886 = vadd.f32 %v3766, %v3768
        %3887 = vadd.xlane.f32.xlu0 %v3886
        %v3888 = vpop.xlane.xlu0 %3887
        %v3889 = vadd.f32 %v3770, %v3772
        %3890 = vadd.xlane.f32.xlu0 %v3889
        %v3891 = vpop.xlane.xlu0 %3890
        %v3892 = vadd.f32 %v3774, %v3776
        %3893 = vadd.xlane.f32.xlu0 %v3892
        %v3894 = vpop.xlane.xlu0 %3893
        %v3895 = vadd.f32 %v3778, %v3780
        %3896 = vadd.xlane.f32.xlu0 %v3895
        %v3897 = vpop.xlane.xlu0 %3896
        %v3898 = vadd.f32 %v3782, %v3784
        %3899 = vadd.xlane.f32.xlu0 %v3898
        %v3900 = vpop.xlane.xlu0 %3899
        %v3901 = vadd.f32 %v3786, %v3788
        %3902 = vadd.xlane.f32.xlu0 %v3901
        %v3903 = vpop.xlane.xlu0 %3902
        %v3904 = vadd.f32 %v3790, %v3792
        %3905 = vadd.xlane.f32.xlu0 %v3904
        %v3906 = vpop.xlane.xlu0 %3905
        %v3907 = vadd.f32 %v3794, %v3796
        %3908 = vadd.xlane.f32.xlu0 %v3907
        %v3909 = vpop.xlane.xlu0 %3908
        %v3910 = vadd.f32 %v3798, %v3800
        %3911 = vadd.xlane.f32.xlu0 %v3910
        %v3912 = vpop.xlane.xlu0 %3911
        %v3913 = vadd.f32 %v3802, %v3804
        %3914 = vadd.xlane.f32.xlu0 %v3913
        %v3915 = vpop.xlane.xlu0 %3914
        %v3916 = vadd.f32 %v3806, %v3808
        %3917 = vadd.xlane.f32.xlu0 %v3916
        %v3918 = vpop.xlane.xlu0 %3917
        %v3919 = vadd.f32 %v3810, %v3812
        %3920 = vadd.xlane.f32.xlu0 %v3919
        %v3921 = vpop.xlane.xlu0 %3920
        %v3922 = vadd.f32 %v3814, %v3816
        %3923 = vadd.xlane.f32.xlu0 %v3922
        %v3924 = vpop.xlane.xlu0 %3923
        %v3925 = vadd.f32 %v3818, %v3820
        %3926 = vadd.xlane.f32.xlu0 %v3925
        %v3927 = vpop.xlane.xlu0 %3926
        %v3928 = vadd.f32 %v3822, %v3824
        %3929 = vadd.xlane.f32.xlu0 %v3928
        %v3930 = vpop.xlane.xlu0 %3929
        %v3931 = vadd.f32 %v3826, %v3828
        %3932 = vadd.xlane.f32.xlu0 %v3931
        %v3933 = vpop.xlane.xlu0 %3932
        %v3934 = vadd.f32 %v3830, %v3832
        %3935 = vadd.xlane.f32.xlu0 %v3934
        %v3936 = vpop.xlane.xlu0 %3935
        %v3937 = vadd.f32 %v3834, %v3836
        %3938 = vadd.xlane.f32.xlu0 %v3937
        %v3939 = vpop.xlane.xlu0 %3938
        %v3940 = vadd.f32 %v3838, %v3840
        %3941 = vadd.xlane.f32.xlu0 %v3940
        %v3942 = vpop.xlane.xlu0 %3941
        %v3943 = vadd.f32 %v3842, %v3844
        %3944 = vadd.xlane.f32.xlu0 %v3943
        %v3945 = vpop.xlane.xlu0 %3944
        %v3946 = vadd.f32 %v3846, %v3848
        %3947 = vadd.xlane.f32.xlu0 %v3946
        %v3948 = vpop.xlane.xlu0 %3947
        %v3949 = vadd.f32 %v3850, %v3852
        %3950 = vadd.xlane.f32.xlu0 %v3949
        %v3951 = vpop.xlane.xlu0 %3950
        %v3952 = vadd.f32 %v3854, %v3856
        %3953 = vadd.xlane.f32.xlu0 %v3952
        %v3954 = vpop.xlane.xlu0 %3953
        %v3955 = vadd.f32 %v3858, %v3860
        %3956 = vadd.xlane.f32.xlu0 %v3955
        %v3957 = vpop.xlane.xlu0 %3956
        %v3958 = vadd.f32 %v3862, %v3864
        %3959 = vadd.xlane.f32.xlu0 %v3958
        %v3960 = vpop.xlane.xlu0 %3959
        %v3961 = vrcp.pop %v3867
        %v3962 = vrcp.pop %v3870
        %v3963 = vrcp.pop %v3873
        %v3964 = vrcp.pop %v3876
        %v3965 = vrcp.pop %v3879
        %v3966 = vrcp.pop %v3882
        %v3967 = vrcp.pop %v3885
        %v3968 = vrcp.pop %v3888
        %v3969 = vrcp.pop %v3891
        %v3970 = vrcp.pop %v3894
        %v3971 = vrcp.pop %v3897
        %v3972 = vrcp.pop %v3900
        %v3973 = vrcp.pop %v3903
        %v3974 = vrcp.pop %v3906
        %v3975 = vrcp.pop %v3909
        %v3976 = vrcp.pop %v3912
        %v3977 = vrcp.pop %v3915
        %v3978 = vrcp.pop %v3918
        %v3979 = vrcp.pop %v3921
        %v3980 = vrcp.pop %v3924
        %v3981 = vrcp.pop %v3927
        %v3982 = vrcp.pop %v3930
        %v3983 = vrcp.pop %v3933
        %v3984 = vrcp.pop %v3936
        %v3985 = vrcp.pop %v3939
        %v3986 = vrcp.pop %v3942
        %v3987 = vrcp.pop %v3945
        %v3988 = vrcp.pop %v3948
        %v3989 = vrcp.pop %v3951
        %v3990 = vrcp.pop %v3954
        %v3991 = vrcp.pop %v3957
        %v3992 = vrcp.pop %v3960
        %v3993 = vmul.f32 %v3738, %v3961
        %v3994 = vmul.f32 %v3740, %v3961
        %v3995 = vmul.f32 %v3742, %v3962
        %v3996 = vmul.f32 %v3744, %v3962
        %v3997 = vmul.f32 %v3746, %v3963
        %v3998 = vmul.f32 %v3748, %v3963
        %v3999 = vmul.f32 %v3750, %v3964
        %v4000 = vmul.f32 %v3752, %v3964
        %v4001 = vmul.f32 %v3754, %v3965
        %v4002 = vmul.f32 %v3756, %v3965
        %v4003 = vmul.f32 %v3758, %v3966
        %v4004 = vmul.f32 %v3760, %v3966
        %v4005 = vmul.f32 %v3762, %v3967
        %v4006 = vmul.f32 %v3764, %v3967
        %v4007 = vmul.f32 %v3766, %v3968
        %v4008 = vmul.f32 %v3768, %v3968
        %v4009 = vmul.f32 %v3770, %v3969
        %v4010 = vmul.f32 %v3772, %v3969
        %v4011 = vmul.f32 %v3774, %v3970
        %v4012 = vmul.f32 %v3776, %v3970
        %v4013 = vmul.f32 %v3778, %v3971
        %v4014 = vmul.f32 %v3780, %v3971
        %v4015 = vmul.f32 %v3782, %v3972
        %v4016 = vmul.f32 %v3784, %v3972
        %v4017 = vmul.f32 %v3786, %v3973
        %v4018 = vmul.f32 %v3788, %v3973
        %v4019 = vmul.f32 %v3790, %v3974
        %v4020 = vmul.f32 %v3792, %v3974
        %v4021 = vmul.f32 %v3794, %v3975
        %v4022 = vmul.f32 %v3796, %v3975
        %v4023 = vmul.f32 %v3798, %v3976
        %v4024 = vmul.f32 %v3800, %v3976
        %v4025 = vmul.f32 %v3802, %v3977
        %v4026 = vmul.f32 %v3804, %v3977
        %v4027 = vmul.f32 %v3806, %v3978
        %v4028 = vmul.f32 %v3808, %v3978
        %v4029 = vmul.f32 %v3810, %v3979
        %v4030 = vmul.f32 %v3812, %v3979
        %v4031 = vmul.f32 %v3814, %v3980
        %v4032 = vmul.f32 %v3816, %v3980
        %v4033 = vmul.f32 %v3818, %v3981
        %v4034 = vmul.f32 %v3820, %v3981
        %v4035 = vmul.f32 %v3822, %v3982
        %v4036 = vmul.f32 %v3824, %v3982
        %v4037 = vmul.f32 %v3826, %v3983
        %v4038 = vmul.f32 %v3828, %v3983
        %v4039 = vmul.f32 %v3830, %v3984
        %v4040 = vmul.f32 %v3832, %v3984
        %v4041 = vmul.f32 %v3834, %v3985
        %v4042 = vmul.f32 %v3836, %v3985
        %v4043 = vmul.f32 %v3838, %v3986
        %v4044 = vmul.f32 %v3840, %v3986
        %v4045 = vmul.f32 %v3842, %v3987
        %v4046 = vmul.f32 %v3844, %v3987
        %v4047 = vmul.f32 %v3846, %v3988
        %v4048 = vmul.f32 %v3848, %v3988
        %v4049 = vmul.f32 %v3850, %v3989
        %v4050 = vmul.f32 %v3852, %v3989
        %v4051 = vmul.f32 %v3854, %v3990
        %v4052 = vmul.f32 %v3856, %v3990
        %v4053 = vmul.f32 %v3858, %v3991
        %v4054 = vmul.f32 %v3860, %v3991
        %v4055 = vmul.f32 %v3862, %v3992
        %v4056 = vmul.f32 %v3864, %v3992
        %v4057 = vpack.c.bf16 %v731, %v727
        %v4058 = vpack.c.bf16 %v733, %v729
        %v4059 = vpack.c.bf16 %v741, %v737
        %v4060 = vpack.c.bf16 %v743, %v739
        %v4061 = vpack.c.bf16 %v3995, %v3993
        %v4062 = vpack.c.bf16 %v3996, %v3994
        %v4063 = vpack.c.bf16 %v3999, %v3997
        %v4064 = vpack.c.bf16 %v4000, %v3998
        %v4065 = vpack.c.bf16 %v4003, %v4001
        %v4066 = vpack.c.bf16 %v4004, %v4002
        %v4067 = vpack.c.bf16 %v4007, %v4005
        %v4068 = vpack.c.bf16 %v4008, %v4006
        %v4069 = vpack.c.bf16 %v4011, %v4009
        %v4070 = vpack.c.bf16 %v4012, %v4010
        %v4071 = vpack.c.bf16 %v4015, %v4013
        %v4072 = vpack.c.bf16 %v4016, %v4014
        %v4073 = vpack.c.bf16 %v4019, %v4017
        %v4074 = vpack.c.bf16 %v4020, %v4018
        %v4075 = vpack.c.bf16 %v4023, %v4021
        %v4076 = vpack.c.bf16 %v4024, %v4022
        %v4077 = vpack.c.bf16 %v4027, %v4025
        %v4078 = vpack.c.bf16 %v4028, %v4026
        %v4079 = vpack.c.bf16 %v4031, %v4029
        %v4080 = vpack.c.bf16 %v4032, %v4030
        %v4081 = vpack.c.bf16 %v4035, %v4033
        %v4082 = vpack.c.bf16 %v4036, %v4034
        %v4083 = vpack.c.bf16 %v4039, %v4037
        %v4084 = vpack.c.bf16 %v4040, %v4038
        %v4085 = vpack.c.bf16 %v4043, %v4041
        %v4086 = vpack.c.bf16 %v4044, %v4042
        %v4087 = vpack.c.bf16 %v4047, %v4045
        %v4088 = vpack.c.bf16 %v4048, %v4046
        %v4089 = vpack.c.bf16 %v4051, %v4049
        %v4090 = vpack.c.bf16 %v4052, %v4050
        %v4091 = vpack.c.bf16 %v4055, %v4053
        %v4092 = vpack.c.bf16 %v4056, %v4054
        %4093 = vmatprep.subr.bf16.mxu0 %v4062
        %4094 = vmatpush1.bf16.xpose.msra.mxu0 %v4061
        %4095 = vmatprep.subr.bf16.mxu0 %v4064
        %4096 = vmatpush1.bf16.xpose.msra.mxu0 %v4063
        %4097 = vmatprep.subr.bf16.mxu0 %v4066
        %4098 = vmatpush1.bf16.xpose.msra.mxu0 %v4065
        %4099 = vmatprep.subr.bf16.mxu0 %v4068
        %4100 = vmatpush1.bf16.xpose.msra.mxu0 %v4067
        %4101 = vmatprep.subr.bf16.mxu0 %v4070
        %4102 = vmatpush1.bf16.xpose.msra.mxu0 %v4069
        %4103 = vmatprep.subr.bf16.mxu0 %v4072
        %4104 = vmatpush1.bf16.xpose.msra.mxu0 %v4071
        %4105 = vmatprep.subr.bf16.mxu0 %v4074
        %4106 = vmatpush1.bf16.xpose.msra.mxu0 %v4073
        %4107 = vmatprep.subr.bf16.mxu0 %v4076
        %4108 = vmatpush1.bf16.xpose.msra.mxu0 %v4075
        %4109 = vmatprep.subr.bf16.mxu0 %v4078
        %4110 = vmatpush1.bf16.xpose.msra.mxu0 %v4077
        %4111 = vmatprep.subr.bf16.mxu0 %v4080
        %4112 = vmatpush1.bf16.xpose.msra.mxu0 %v4079
        %4113 = vmatprep.subr.bf16.mxu0 %v4082
        %4114 = vmatpush1.bf16.xpose.msra.mxu0 %v4081
        %4115 = vmatprep.subr.bf16.mxu0 %v4084
        %4116 = vmatpush1.bf16.xpose.msra.mxu0 %v4083
        %4117 = vmatprep.subr.bf16.mxu0 %v4086
        %4118 = vmatpush1.bf16.xpose.msra.mxu0 %v4085
        %4119 = vmatprep.subr.bf16.mxu0 %v4088
        %4120 = vmatpush1.bf16.xpose.msra.mxu0 %v4087
        %4121 = vmatprep.subr.bf16.mxu0 %v4090
        %4122 = vmatpush1.bf16.xpose.msra.mxu0 %v4089
        %4123 = vmatprep.subr.bf16.mxu0 %v4092
        %4124 = vmatpush1.bf16.xpose.msra.mxu0 %v4091
        %4125 = vmatprep.mubr.bf16.mxu0 %v4058
        %4126 = vmatmul.mubr.bf16.gmra.mrb[0].mxu0 %v4057
        %v4127 = vpop.f32.mrb[0].mxu0
        %v4128 = vadd.f32 0.0, %v4127
        %v4129 = vpop.f32.mrb[0].mxu0
        %v4130 = vadd.f32 0.0, %v4129
        %v4131 = vpop.f32.mrb[0].mxu0
        %v4132 = vadd.f32 0.0, %v4131
        %v4133 = vpop.f32.mrb[0].mxu0
        %v4134 = vadd.f32 0.0, %v4133
        %4135 = vmatprep.mubr.bf16.mxu0 %v4060
        %4136 = vmatmul.mubr.bf16.gmra.mrb[0].mxu0 %v4059
        %v4137 = vpop.f32.mrb[0].mxu0
        %v4138 = vadd.f32 0.0, %v4137
        %v4139 = vpop.f32.mrb[0].mxu0
        %v4140 = vadd.f32 0.0, %v4139
        %v4141 = vpop.f32.mrb[0].mxu0
        %v4142 = vadd.f32 0.0, %v4141
        %v4143 = vpop.f32.mrb[0].mxu0
        %v4144 = vadd.f32 0.0, %v4143
        %4145 = vdwg.mxu0
        %v4146 = vld [vmem:[%s2] sm:$0xf]
        %v4147 = vld [vmem:[%s2 + $0x4] sm:$0xf]
        %v4148 = vld [vmem:[%s2 + $0x8] sm:$0xf]
        %v4149 = vld [vmem:[%s2 + $0xc] sm:$0xf]
        %v4150 = vld [vmem:[%s2 + $0x10] sm:$0xf]
        %v4151 = vld [vmem:[%s2 + $0x14] sm:$0xf]
        %v4152 = vld [vmem:[%s2 + $0x18] sm:$0xf]
        %v4153 = vld [vmem:[%s2 + $0x1c] sm:$0xf]
        %v4154 = vld [vmem:[%s2 + $0x20] sm:$0xf]
        %v4155 = vld [vmem:[%s2 + $0x24] sm:$0xf]
        %v4156 = vld [vmem:[%s2 + $0x28] sm:$0xf]
        %v4157 = vld [vmem:[%s2 + $0x2c] sm:$0xf]
        %v4158 = vld [vmem:[%s2 + $0x30] sm:$0xf]
        %v4159 = vld [vmem:[%s2 + $0x34] sm:$0xf]
        %v4160 = vld [vmem:[%s2 + $0x38] sm:$0xf]
        %v4161 = vld [vmem:[%s2 + $0x3c] sm:$0xf]
        %v4162 = vpack.c.bf16 %v1582, %v1578
        %v4163 = vpack.c.bf16 %v1584, %v1580
        %v4164 = vpack.c.bf16 %v1592, %v1588
        %v4165 = vpack.c.bf16 %v1594, %v1590
        %v4166 = vpack.c.bf16 %v2432, %v2428
        %v4167 = vpack.c.bf16 %v2434, %v2430
        %v4168 = vpack.c.bf16 %v2442, %v2438
        %v4169 = vpack.c.bf16 %v2444, %v2440
        %v4170 = vpack.c.bf16 %v3282, %v3278
        %v4171 = vpack.c.bf16 %v3284, %v3280
        %v4172 = vpack.c.bf16 %v3292, %v3288
        %v4173 = vpack.c.bf16 %v3294, %v3290
        %v4174 = vpack.c.bf16 %v4132, %v4128
        %v4175 = vpack.c.bf16 %v4134, %v4130
        %v4176 = vpack.c.bf16 %v4142, %v4138
        %v4177 = vpack.c.bf16 %v4144, %v4140
        %v4178 = vld [vmem:[%s3] sm:$0xff]
        %v4179 = vld [vmem:[%s3 + $0x8] sm:$0xff]
        %v4180 = vld [vmem:[%s3 + $0x10] sm:$0xff]
        %v4181 = vld [vmem:[%s3 + $0x18] sm:$0xff]
        %v4182 = vld [vmem:[%s3 + $0x20] sm:$0xff]
        %v4183 = vld [vmem:[%s3 + $0x28] sm:$0xff]
        %v4184 = vld [vmem:[%s3 + $0x30] sm:$0xff]
        %v4185 = vld [vmem:[%s3 + $0x38] sm:$0xff]
        %v4186 = vld [vmem:[%s3 + $0x40] sm:$0xff]
        %v4187 = vld [vmem:[%s3 + $0x48] sm:$0xff]
        %v4188 = vld [vmem:[%s3 + $0x50] sm:$0xff]
        %v4189 = vld [vmem:[%s3 + $0x58] sm:$0xff]
        %v4190 = vld [vmem:[%s3 + $0x60] sm:$0xff]
        %v4191 = vld [vmem:[%s3 + $0x68] sm:$0xff]
        %v4192 = vld [vmem:[%s3 + $0x70] sm:$0xff]
        %v4193 = vld [vmem:[%s3 + $0x78] sm:$0xff]
        %4195 = vset.pattern.permute.xlu0 0
        %4196 = vperm.xlu0 %4195, %v4178
        %v4197 = vpop.permute.xlu0 %4196
        %4200 = vset.pattern.permute.xlu0 0
        %4201 = vperm.xlu0 %4200, %v4179
        %v4202 = vpop.permute.xlu0 %4201
        %4205 = vset.pattern.permute.xlu0 0
        %4206 = vperm.xlu0 %4205, %v4180
        %v4207 = vpop.permute.xlu0 %4206
        %4210 = vset.pattern.permute.xlu0 0
        %4211 = vperm.xlu0 %4210, %v4181
        %v4212 = vpop.permute.xlu0 %4211
        %4215 = vset.pattern.permute.xlu0 0
        %4216 = vperm.xlu0 %4215, %v4182
        %v4217 = vpop.permute.xlu0 %4216
        %4220 = vset.pattern.permute.xlu0 0
        %4221 = vperm.xlu0 %4220, %v4183
        %v4222 = vpop.permute.xlu0 %4221
        %4225 = vset.pattern.permute.xlu0 0
        %4226 = vperm.xlu0 %4225, %v4184
        %v4227 = vpop.permute.xlu0 %4226
        %4230 = vset.pattern.permute.xlu0 0
        %4231 = vperm.xlu0 %4230, %v4185
        %v4232 = vpop.permute.xlu0 %4231
        %4235 = vset.pattern.permute.xlu0 0
        %4236 = vperm.xlu0 %4235, %v4186
        %v4237 = vpop.permute.xlu0 %4236
        %4240 = vset.pattern.permute.xlu0 0
        %4241 = vperm.xlu0 %4240, %v4187
        %v4242 = vpop.permute.xlu0 %4241
        %4245 = vset.pattern.permute.xlu0 0
        %4246 = vperm.xlu0 %4245, %v4188
        %v4247 = vpop.permute.xlu0 %4246
        %4250 = vset.pattern.permute.xlu0 0
        %4251 = vperm.xlu0 %4250, %v4189
        %v4252 = vpop.permute.xlu0 %4251
        %4255 = vset.pattern.permute.xlu0 0
        %4256 = vperm.xlu0 %4255, %v4190
        %v4257 = vpop.permute.xlu0 %4256
        %4260 = vset.pattern.permute.xlu0 0
        %4261 = vperm.xlu0 %4260, %v4191
        %v4262 = vpop.permute.xlu0 %4261
        %4265 = vset.pattern.permute.xlu0 0
        %4266 = vperm.xlu0 %4265, %v4192
        %v4267 = vpop.permute.xlu0 %4266
        %4270 = vset.pattern.permute.xlu0 0
        %4271 = vperm.xlu0 %4270, %v4193
        %v4272 = vpop.permute.xlu0 %4271
        %v4290 = vunpack.c.l.b16 %v4146
        %v4291 = vunpack.c.l.b16 %v4147
        %v4292 = vunpack.c.l.b16 %v4148
        %v4293 = vunpack.c.l.b16 %v4149
        %v4294 = vunpack.c.l.b16 %v4150
        %v4295 = vunpack.c.l.b16 %v4151
        %v4296 = vunpack.c.l.b16 %v4152
        %v4297 = vunpack.c.l.b16 %v4153
        %v4298 = vunpack.c.l.b16 %v4154
        %v4299 = vunpack.c.l.b16 %v4155
        %v4300 = vunpack.c.l.b16 %v4156
        %v4301 = vunpack.c.l.b16 %v4157
        %v4302 = vunpack.c.l.b16 %v4158
        %v4303 = vunpack.c.l.b16 %v4159
        %v4304 = vunpack.c.l.b16 %v4160
        %v4305 = vunpack.c.l.b16 %v4161
        %v4306 = vpack.c.b16 %v4291, %v4290
        %v4307 = vpack.c.b16 %v4293, %v4292
        %v4308 = vpack.c.b16 %v4295, %v4294
        %v4309 = vpack.c.b16 %v4297, %v4296
        %v4310 = vpack.c.b16 %v4299, %v4298
        %v4311 = vpack.c.b16 %v4301, %v4300
        %v4312 = vpack.c.b16 %v4303, %v4302
        %v4313 = vpack.c.b16 %v4305, %v4304
        %4322 = vmatprep.subr.bf16.mxu0 %v4163
        %4323 = vmatpush1.bf16.msra.mxu0 %v4162
        %4324 = vmatprep.subr.bf16.mxu0 %v4165
        %4325 = vmatpush1.bf16.msra.mxu0 %v4164
        %4326 = vmatprep.subr.bf16.mxu0 %v4167
        %4327 = vmatpush1.bf16.msra.mxu0 %v4166
        %4328 = vmatprep.subr.bf16.mxu0 %v4169
        %4329 = vmatpush1.bf16.msra.mxu0 %v4168
        %4330 = vmatprep.subr.bf16.mxu0 %v4171
        %4331 = vmatpush1.bf16.msra.mxu0 %v4170
        %4332 = vmatprep.subr.bf16.mxu0 %v4173
        %4333 = vmatpush1.bf16.msra.mxu0 %v4172
        %4334 = vmatprep.subr.bf16.mxu0 %v4175
        %4335 = vmatpush1.bf16.msra.mxu0 %v4174
        %4336 = vmatprep.subr.bf16.mxu0 %v4177
        %4337 = vmatpush1.bf16.msra.mxu0 %v4176
        %4338 = vmatprep.subr.bf16.mxu0 0
        %4339 = vmatpush1.bf16.msra.mxu0 0
        %4340 = vmatprep.subr.bf16.mxu0 0
        %4341 = vmatpush1.bf16.msra.mxu0 0
        %4342 = vmatprep.subr.bf16.mxu0 0
        %4343 = vmatpush1.bf16.msra.mxu0 0
        %4344 = vmatprep.subr.bf16.mxu0 0
        %4345 = vmatpush1.bf16.msra.mxu0 0
        %4346 = vmatprep.subr.bf16.mxu0 0
        %4347 = vmatpush1.bf16.msra.mxu0 0
        %4348 = vmatprep.subr.bf16.mxu0 0
        %4349 = vmatpush1.bf16.msra.mxu0 0
        %4350 = vmatprep.subr.bf16.mxu0 0
        %4351 = vmatpush1.bf16.msra.mxu0 0
        %4352 = vmatprep.subr.bf16.mxu0 0
        %4353 = vmatpush1.bf16.msra.mxu0 0
        %4354 = vmatprep.mubr.bf16.mxu0 0
        %4355 = vmatmul.mubr.bf16.gmra.mrb[0].mxu0 %v4306
        %v4356 = vpop.f32.mrb[0].mxu0
        %v4357 = vadd.f32 %v4197, %v4356
        %v4358 = vpop.f32.mrb[0].mxu0
        %v4359 = vadd.f32 %v4197, %v4358
        %v4360 = vpop.f32.mrb[0].mxu0
        %v4361 = vadd.f32 %v4202, %v4360
        %v4362 = vpop.f32.mrb[0].mxu0
        %v4363 = vadd.f32 %v4202, %v4362
        %4364 = vmatprep.mubr.bf16.mxu0 0
        %4365 = vmatmul.mubr.bf16.gmra.mrb[0].mxu0 %v4307
        %v4366 = vpop.f32.mrb[0].mxu0
        %v4367 = vadd.f32 %v4207, %v4366
        %v4368 = vpop.f32.mrb[0].mxu0
        %v4369 = vadd.f32 %v4207, %v4368
        %v4370 = vpop.f32.mrb[0].mxu0
        %v4371 = vadd.f32 %v4212, %v4370
        %v4372 = vpop.f32.mrb[0].mxu0
        %v4373 = vadd.f32 %v4212, %v4372
        %4374 = vmatprep.mubr.bf16.mxu0 0
        %4375 = vmatmul.mubr.bf16.gmra.mrb[0].mxu0 %v4308
        %v4376 = vpop.f32.mrb[0].mxu0
        %v4377 = vadd.f32 %v4217, %v4376
        %v4378 = vpop.f32.mrb[0].mxu0
        %v4379 = vadd.f32 %v4217, %v4378
        %v4380 = vpop.f32.mrb[0].mxu0
        %v4381 = vadd.f32 %v4222, %v4380
        %v4382 = vpop.f32.mrb[0].mxu0
        %v4383 = vadd.f32 %v4222, %v4382
        %4384 = vmatprep.mubr.bf16.mxu0 0
        %4385 = vmatmul.mubr.bf16.gmra.mrb[0].mxu0 %v4309
        %v4386 = vpop.f32.mrb[0].mxu0
        %v4387 = vadd.f32 %v4227, %v4386
        %v4388 = vpop.f32.mrb[0].mxu0
        %v4389 = vadd.f32 %v4227, %v4388
        %v4390 = vpop.f32.mrb[0].mxu0
        %v4391 = vadd.f32 %v4232, %v4390
        %v4392 = vpop.f32.mrb[0].mxu0
        %v4393 = vadd.f32 %v4232, %v4392
        %4394 = vmatprep.mubr.bf16.mxu0 0
        %4395 = vmatmul.mubr.bf16.gmra.mrb[0].mxu0 %v4310
        %v4396 = vpop.f32.mrb[0].mxu0
        %v4397 = vadd.f32 %v4237, %v4396
        %v4398 = vpop.f32.mrb[0].mxu0
        %v4399 = vadd.f32 %v4237, %v4398
        %v4400 = vpop.f32.mrb[0].mxu0
        %v4401 = vadd.f32 %v4242, %v4400
        %v4402 = vpop.f32.mrb[0].mxu0
        %v4403 = vadd.f32 %v4242, %v4402
        %4404 = vmatprep.mubr.bf16.mxu0 0
        %4405 = vmatmul.mubr.bf16.gmra.mrb[0].mxu0 %v4311
        %v4406 = vpop.f32.mrb[0].mxu0
        %v4407 = vadd.f32 %v4247, %v4406
        %v4408 = vpop.f32.mrb[0].mxu0
        %v4409 = vadd.f32 %v4247, %v4408
        %v4410 = vpop.f32.mrb[0].mxu0
        %v4411 = vadd.f32 %v4252, %v4410
        %v4412 = vpop.f32.mrb[0].mxu0
        %v4413 = vadd.f32 %v4252, %v4412
        %4414 = vmatprep.mubr.bf16.mxu0 0
        %4415 = vmatmul.mubr.bf16.gmra.mrb[0].mxu0 %v4312
        %v4416 = vpop.f32.mrb[0].mxu0
        %v4417 = vadd.f32 %v4257, %v4416
        %v4418 = vpop.f32.mrb[0].mxu0
        %v4419 = vadd.f32 %v4257, %v4418
        %v4420 = vpop.f32.mrb[0].mxu0
        %v4421 = vadd.f32 %v4262, %v4420
        %v4422 = vpop.f32.mrb[0].mxu0
        %v4423 = vadd.f32 %v4262, %v4422
        %4424 = vmatprep.mubr.bf16.mxu0 0
        %4425 = vmatmul.mubr.bf16.gmra.mrb[0].mxu0 %v4313
        %v4426 = vpop.f32.mrb[0].mxu0
        %v4427 = vadd.f32 %v4267, %v4426
        %v4428 = vpop.f32.mrb[0].mxu0
        %v4429 = vadd.f32 %v4267, %v4428
        %v4430 = vpop.f32.mrb[0].mxu0
        %v4431 = vadd.f32 %v4272, %v4430
        %v4432 = vpop.f32.mrb[0].mxu0
        %v4433 = vadd.f32 %v4272, %v4432
        %4434 = vdwg.mxu0
        %4435 = vst [vmem:[%s230] sm:$0xff] %v4357
        %4436 = vst [vmem:[%s230 + $0x8] sm:$0xff] %v4359
        %4437 = vst [vmem:[%s230 + $0x10] sm:$0xff] %v4361
        %4438 = vst [vmem:[%s230 + $0x18] sm:$0xff] %v4363
        %4439 = vst [vmem:[%s230 + $0x20] sm:$0xff] %v4367
        %4440 = vst [vmem:[%s230 + $0x28] sm:$0xff] %v4369
        %4441 = vst [vmem:[%s230 + $0x30] sm:$0xff] %v4371
        %4442 = vst [vmem:[%s230 + $0x38] sm:$0xff] %v4373
        %4443 = vst [vmem:[%s230 + $0x40] sm:$0xff] %v4377
        %4444 = vst [vmem:[%s230 + $0x48] sm:$0xff] %v4379
        %4445 = vst [vmem:[%s230 + $0x50] sm:$0xff] %v4381
        %4446 = vst [vmem:[%s230 + $0x58] sm:$0xff] %v4383
        %4447 = vst [vmem:[%s230 + $0x60] sm:$0xff] %v4387
        %4448 = vst [vmem:[%s230 + $0x68] sm:$0xff] %v4389
        %4449 = vst [vmem:[%s230 + $0x70] sm:$0xff] %v4391
        %4450 = vst [vmem:[%s230 + $0x78] sm:$0xff] %v4393
        %4451 = vst [vmem:[%s230 + $0x80] sm:$0xff] %v4397
        %4452 = vst [vmem:[%s230 + $0x88] sm:$0xff] %v4399
        %4453 = vst [vmem:[%s230 + $0x90] sm:$0xff] %v4401
        %4454 = vst [vmem:[%s230 + $0x98] sm:$0xff] %v4403
        %4455 = vst [vmem:[%s230 + $0xa0] sm:$0xff] %v4407
        %4456 = vst [vmem:[%s230 + $0xa8] sm:$0xff] %v4409
        %4457 = vst [vmem:[%s230 + $0xb0] sm:$0xff] %v4411
        %4458 = vst [vmem:[%s230 + $0xb8] sm:$0xff] %v4413
        %4459 = vst [vmem:[%s230 + $0xc0] sm:$0xff] %v4417
        %4460 = vst [vmem:[%s230 + $0xc8] sm:$0xff] %v4419
        %4461 = vst [vmem:[%s230 + $0xd0] sm:$0xff] %v4421
        %4462 = vst [vmem:[%s230 + $0xd8] sm:$0xff] %v4423
        %4463 = vst [vmem:[%s230 + $0xe0] sm:$0xff] %v4427
        %4464 = vst [vmem:[%s230 + $0xe8] sm:$0xff] %v4429
        %4465 = vst [vmem:[%s230 + $0xf0] sm:$0xff] %v4431
        %4466 = vst [vmem:[%s230 + $0xf8] sm:$0xff] %v4433
        %s4467 = sand.u32 %s119, 1
        %s4468 = scalar_lea.sflag [#allocation4], %s4467
        %s4469 = sand.u32 %s119, 1
        %s4470 = smul.addr %s4469, 256
        %s4471 = scalar_lea.vmem [#allocation7], %s4470
        // Predicated region
        $region45: #{tpu_custom_call.1} parent=35 // pred_check
          %p4472 = pneg %p129
        $region46: #{tpu_custom_call.1} parent=35 // pred_check_branch
          %4474 = sbr.rel (%p4472) target = $region48
        $region47: #{tpu_custom_call.1} parent=35 // pred_region
          %s4476 = ssub.s32 4096, 4096
          %4477 = vsyncadd %s4468, %s4476
          %s4478 = smul.addr %s22, 32
          %s4479 = smul.addr %s4478, 128
          %s4480 = scalar_lea.hbm %s4, %s4479
          %s4481 = sshll.u32 %s4471, 4
          %s4482 = int_to_ptr.vmem [resolvable:$true] %s4481
          %4487 = dma.vmem_to_hbm [thread:$0]  %s4482, 4096, %s4480, %s4468, 256, 256, 16
        $region48: #{tpu_custom_call.1} parent=35 // pred_fallthru
          _
      $region36: #{tpu_custom_call.1} parent=5 // pred_fallthru
        _
      %p4488 = scmp.le.s32.totalorder 2, %s17
      // Predicated region
      $region49: #{tpu_custom_call.1} parent=5 // pred_check
        %p4489 = pneg %p4488
      $region50: #{tpu_custom_call.1} parent=5 // pred_check_branch
        %4491 = sbr.rel (%p4489) target = $region52
      $region51: #{tpu_custom_call.1} parent=5 // pred_region
        %s4492 = ssub.s32 %s17, 2
        // Predicated region
        $region53: #{tpu_custom_call.1} parent=51 // pred_check
          %p4493 = pneg %p135
        $region54: #{tpu_custom_call.1} parent=51 // pred_check_branch
          %4495 = sbr.rel (%p4493) target = $region56
        $region55: #{tpu_custom_call.1} parent=51 // pred_region
          %s4496 = sand.u32 %s120, 1
          %s4497 = scalar_lea.sflag [#allocation4], %s4496
          %s4498 = sand.u32 %s120, 1
          %s4499 = smul.addr %s4498, 256
          %s4500 = scalar_lea.vmem [#allocation7], %s4499
          %4501 = dma.done %s4497, 4096
        $region56: #{tpu_custom_call.1} parent=51 // pred_fallthru
          _
      $region52: #{tpu_custom_call.1} parent=5 // pred_fallthru
        _
    $region6: #{tpu_custom_call.1} parent=1 // loop_footer
      %s21 = sadd.s32 1, %s17
    $region7: #{tpu_custom_call.1} parent=1 // loop_footer_branch
      %16 = sbr.rel target = $region3
    $region8: #{tpu_custom_call.1} parent=1 // loop_exit
      _
    %4502 = vsyncpa [#allocation3], 1
    %s4503 = scalar_lea.sflag [#allocation3], 1
    %4504 = vsyncpa %s4503, 1
    %4505 = vsyncpa [#allocation6], 1
    %4506 = vsyncpa [#allocation4], 1
    %s4507 = scalar_lea.sflag [#allocation4], 1
    %4508 = vsyncpa %s4507, 1

</llo_original>
